<compile_context>
chip_gen: v7x
topology: tpu7x:2x2x1
jax: 0.10.0
libtpu: 0.0.40
codegen_flags: <defaults>
</compile_context>

<pallas_src>
import math
from functools import partial

import jax
import jax.numpy as jnp
from jax.experimental import pallas as pl
from jax.experimental.pallas import tpu as pltpu

_VMEM_LIMIT = 48 * 1024 * 1024   # headroom under v7x's 64 MiB VMEM per TensorCore


def _round_up(x, m):
    return ((x + m - 1) // m) * m


# ----------------------------------------------------------------------------
# Pallas kernel 1: tiled fused matmul + per-column affine (folded BN) + ReLU
# ----------------------------------------------------------------------------
def _fused_matmul_kernel(a_ref, b_ref, scale_ref, bias_ref, o_ref, *, relu):
    # bf16 operands -> MXU, f32 accumulate, f32 epilogue on the VPU, cast on store.
    acc = jnp.dot(a_ref[...], b_ref[...], preferred_element_type=jnp.float32)
    acc = acc * scale_ref[...] + bias_ref[...]
    if relu:
        acc = jnp.maximum(acc, 0.0)
    o_ref[...] = acc.astype(o_ref.dtype)


def fused_matmul(a, b, scale, bias, relu, out_dtype=jnp.float32, tm=512):
    """out[m, n] = relu((sum_k a[m,k] b[k,n]) * scale[n] + bias[n]).

    a: (M, K), b: (K, N).  K (<= 288 here) and N (<= 128 here) each stay one
    full-dim block -> no zero-padded HBM copies; M is tiled so the pipeline
    double-buffers DMA against the MXU and both grid axes run megacore-parallel.
    """
    M, K = a.shape
    K2, N = b.shape
    assert K == K2
    a = a.astype(jnp.bfloat16)
    b = b.astype(jnp.bfloat16)
    scale = scale.reshape(1, N).astype(jnp.float32)
    bias = bias.reshape(1, N).astype(jnp.float32)

    # Rows: pad by at most 7 so the sublane (M) block dim is a multiple of 8.
    Mp = _round_up(M, 8)
    if Mp != M:
        a = jnp.pad(a, ((0, Mp - M), (0, 0)))
    TM = min(tm, Mp)

    # Columns: keep the true channel count (lane-dense stores; no 8/21 -> 128
    # padding).  Only tile/pad N if it ever exceeds a single block.
    if N <= 512:
        TN, Np = N, N
    else:
        Np, TN = _round_up(N, 128), 128
        if Np != N:
            b = jnp.pad(b, ((0, 0), (0, Np - N)))
            scale = jnp.pad(scale, ((0, 0), (0, Np - N)))
            bias = jnp.pad(bias, ((0, 0), (0, Np - N)))

    grid = (pl.cdiv(Mp, TM), pl.cdiv(Np, TN))
    out = pl.pallas_call(
        partial(_fused_matmul_kernel, relu=relu),
        grid=grid,
        in_specs=[
            pl.BlockSpec((TM, K), lambda i, j: (i, 0)),
            pl.BlockSpec((K, TN), lambda i, j: (0, j)),
            pl.BlockSpec((1, TN), lambda i, j: (0, j)),
            pl.BlockSpec((1, TN), lambda i, j: (0, j)),
        ],
        out_specs=pl.BlockSpec((TM, TN), lambda i, j: (i, j)),
        out_shape=jax.ShapeDtypeStruct((Mp, Np), out_dtype),
        compiler_params=pltpu.CompilerParams(
            dimension_semantics=("parallel", "parallel"),
            vmem_limit_bytes=_VMEM_LIMIT),
    )(a, b, scale, bias)
    if Mp != M or Np != N:
        out = out[:M, :N]
    return out


# ----------------------------------------------------------------------------
# Conv2d (+ folded BN + ReLU) via bf16 im2col + tiled Pallas matmul (NHWC)
# ----------------------------------------------------------------------------
def conv2d(x, w, scale, bias, *, stride=1, padding=0, dilation=1, relu=True,
           out_dtype=jnp.bfloat16):
    """x: (N, H, W, C) NHWC; w: (Cout, Cin, kh, kw) (PyTorch layout)."""
    N, H, W, C = x.shape
    Cout, Cin, kh, kw = w.shape
    assert C == Cin
    xb = x.astype(jnp.bfloat16)      # halves im2col/DMA bytes; MXU is bf16-native
    if padding:
        xb = jnp.pad(xb, ((0, 0), (padding, padding), (padding, padding), (0, 0)))
    Hp, Wp = H + 2 * padding, W + 2 * padding
    Hout = (Hp - dilation * (kh - 1) - 1) // stride + 1
    Wout = (Wp - dilation * (kw - 1) - 1) // stride + 1

    if kh == 1 and kw == 1 and stride == 1:
        a = xb.reshape(N * Hout * Wout, C)
    else:
        # TODO(synk): fuse im2col into the matmul kernel (kh*kw shifted slices of
        # a VMEM-resident NHWC tile) to remove this XLA-side kh*kw activation
        # blow-up entirely; kept in XLA (bf16, channel-last concat, no 5-D
        # transpose) for lowering robustness.
        taps = []
        for ki in range(kh):
            for kj in range(kw):
                hs, ws = ki * dilation, kj * dilation
                taps.append(xb[:, hs:hs + (Hout - 1) * stride + 1:stride,
                               ws:ws + (Wout - 1) * stride + 1:stride, :])
        a = jnp.concatenate(taps, axis=-1).reshape(N * Hout * Wout, kh * kw * C)
    # B rows ordered (ki, kj, c) to match the tap concat above.
    b = jnp.transpose(w, (2, 3, 1, 0)).reshape(kh * kw * Cin, Cout)
    out = fused_matmul(a, b, scale, bias, relu, out_dtype=out_dtype)
    return out.reshape(N, Hout, Wout, Cout)


# ----------------------------------------------------------------------------
# Pallas kernel 2: bilinear resize (align_corners=True) as one kron matmul
# ----------------------------------------------------------------------------
def _resize_kernel(x_ref, k_ref, o_ref):
    # out = X @ K  with X = (rows, H*W) image rows and K = kron(Rh, Cw)^T.
    # f32 matmul keeps the resize at reference precision (logits are f32).
    o_ref[...] = jnp.dot(x_ref[...].astype(jnp.float32), k_ref[...],
                         preferred_element_type=jnp.float32).astype(o_ref.dtype)


def _interp_matrix(n_in, n_out):
    """Interpolation matrix for align_corners=True bilinear (matches F.interpolate)."""
    if n_out == 1:
        return jnp.zeros((1, n_in), jnp.float32).at[0, 0].set(1.0)
    if n_in == 1:
        return jnp.ones((n_out, 1), jnp.float32)
    scale = (n_in - 1) / (n_out - 1)
    src = jnp.arange(n_out, dtype=jnp.float32) * scale
    lo = jnp.clip(jnp.floor(src).astype(jnp.int32), 0, n_in - 2)
    frac = src - lo.astype(jnp.float32)
    m = jnp.zeros((n_out, n_in), jnp.float32)
    m = m.at[jnp.arange(n_out), lo].set(1.0 - frac)
    m = m.at[jnp.arange(n_out), lo + 1].add(frac)
    return m


def bilinear_resize(x, Hout, Wout):
    """x: (N, C, H, W) -> (N, C, Hout, Wout), bilinear, align_corners=True.

    Implemented as a single lane-dense Pallas matmul:
        Y[(n,c), (i,j)] = sum_{h,w} X[(n,c), (h,w)] * Rh[i,h] * Cw[j,w]
    i.e.  Y = X @ kron(Rh, Cw)^T  with rows = N*C and cols = Hout*Wout.
    """
    N, C, H, W = x.shape
    if (H, W) == (Hout, Wout):
        return x
    if H == 1 and W == 1:
        # align_corners=True bilinear from a 1x1 map is an exact broadcast.
        return jnp.broadcast_to(x, (N, C, Hout, Wout))
    rh = _interp_matrix(H, Hout)                       # (Hout, H)
    cw = _interp_matrix(W, Wout)                       # (Wout, W)
    k = jnp.einsum('ih,jw->hwij', rh, cw).reshape(H * W, Hout * Wout)

    M = N * C
    Mp = _round_up(M, 8)
    a = x.reshape(M, H * W)
    if Mp != M:
        a = jnp.pad(a, ((0, Mp - M), (0, 0)))
    TM = min(256, Mp)

    out = pl.pallas_call(
        _resize_kernel,
        grid=(pl.cdiv(Mp, TM),),
        in_specs=[
            pl.BlockSpec((TM, H * W), lambda i: (i, 0)),
            pl.BlockSpec((H * W, Hout * Wout), lambda i: (0, 0)),
        ],
        out_specs=pl.BlockSpec((TM, Hout * Wout), lambda i: (i, 0)),
        out_shape=jax.ShapeDtypeStruct((Mp, Hout * Wout), x.dtype),
        compiler_params=pltpu.CompilerParams(
            dimension_semantics=("parallel",),
            vmem_limit_bytes=_VMEM_LIMIT),
    )(a, k)
    if Mp != M:
        out = out[:M]
    return out.reshape(N, C, Hout, Wout)


# ----------------------------------------------------------------------------
# Deterministic parameter construction (conv + eval-mode-folded BatchNorm)
# ----------------------------------------------------------------------------
def _make_conv_bn(key, cin, cout, k):
    kw_, kg, kb = jax.random.split(key, 3)
    w = jax.random.normal(kw_, (cout, cin, k, k), jnp.float32) / math.sqrt(cin * k * k)
    gamma = 1.0 + 0.1 * jax.random.normal(kg, (cout,), jnp.float32)
    beta = 0.1 * jax.random.normal(kb, (cout,), jnp.float32)
    running_mean = jnp.zeros((cout,), jnp.float32)
    running_var = jnp.ones((cout,), jnp.float32)
    eps = 1e-5
    scale = gamma / jnp.sqrt(running_var + eps)        # folded BN (eval mode)
    bias = beta - running_mean * scale
    return dict(w=w, scale=scale, bias=bias)


def build_params(num_classes=21, seed=0):
    keys = iter(jax.random.split(jax.random.PRNGKey(seed), 32))
    p = {}
    # backbone (ResNet-style, output_stride=16; low-level feature at stride 4)
    p["bb1"] = _make_conv_bn(next(keys), 3, 8, 3)     # /2
    p["bb2"] = _make_conv_bn(next(keys), 8, 16, 3)    # /4  -> low_level_feat
    p["bb3"] = _make_conv_bn(next(keys), 16, 32, 3)   # /8
    p["bb4"] = _make_conv_bn(next(keys), 32, 32, 3)   # /16 -> x
    # ASPP (dilations 1, 6, 12, 18 + image pooling)
    p["aspp1"] = _make_conv_bn(next(keys), 32, 16, 1)
    p["aspp2"] = _make_conv_bn(next(keys), 32, 16, 3)
    p["aspp3"] = _make_conv_bn(next(keys), 32, 16, 3)
    p["aspp4"] = _make_conv_bn(next(keys), 32, 16, 3)
    p["aspp_pool"] = _make_conv_bn(next(keys), 32, 16, 1)
    p["aspp_proj"] = _make_conv_bn(next(keys), 80, 16, 1)
    # decoder
    p["dec_low"] = _make_conv_bn(next(keys), 16, 8, 1)
    p["dec1"] = _make_conv_bn(next(keys), 24, 16, 3)
    p["dec2"] = _make_conv_bn(next(keys), 16, 16, 3)
    kcls_w, kcls_b = jax.random.split(next(keys))
    p["cls"] = dict(
        w=jax.random.normal(kcls_w, (num_classes, 16, 1, 1), jnp.float32) / math.sqrt(16),
        scale=jnp.ones((num_classes,), jnp.float32),
        bias=0.01 * jax.random.normal(kcls_b, (num_classes,), jnp.float32),
    )
    return p


def _cbr(x, p, **kw):
    return conv2d(x, p["w"], p["scale"], p["bias"], **kw)


# ----------------------------------------------------------------------------
# DeepLab forward
# ----------------------------------------------------------------------------
def deeplab_forward(params, x):
    """x: (N, 3, H, W) NCHW (PyTorch layout) -> (N, num_classes, H, W)."""
    N, C, H, W = x.shape
    xh = jnp.transpose(x, (0, 2, 3, 1))                       # NHWC internally

    # --- backbone (output_stride=16, low-level feature at stride 4) ---
    h = _cbr(xh, params["bb1"], stride=2, padding=1)          # (N, H/2,  W/2,  8)
    low = _cbr(h, params["bb2"], stride=2, padding=1)         # (N, H/4,  W/4, 16)
    h = _cbr(low, params["bb3"], stride=2, padding=1)         # (N, H/8,  W/8, 32)
    feat = _cbr(h, params["bb4"], stride=2, padding=1)        # (N, H/16, W/16, 32)

    # --- ASPP (1x1, 3x3 d6/d12/d18, global-pool branch) ---
    fh, fw = feat.shape[1], feat.shape[2]
    b1 = _cbr(feat, params["aspp1"])
    b2 = _cbr(feat, params["aspp2"], padding=6, dilation=6)
    b3 = _cbr(feat, params["aspp3"], padding=12, dilation=12)
    b4 = _cbr(feat, params["aspp4"], padding=18, dilation=18)
    pooled = jnp.mean(feat.astype(jnp.float32), axis=(1, 2), keepdims=True)
    b5 = _cbr(pooled, params["aspp_pool"])                    # (N, 1, 1, 16)
    b5 = jnp.broadcast_to(b5, (N, fh, fw, b5.shape[-1]))      # 1x1 bilinear == broadcast
    aspp = jnp.concatenate([b1, b2, b3, b4, b5], axis=-1)     # (N, fh, fw, 80)
    aspp = _cbr(aspp, params["aspp_proj"])                    # (N, fh, fw, 16)
    # TODO(synk): ASPP Dropout(0.5) is identity in eval mode; omitted.

    # --- decoder (DeepLabV3+) ---
    lowp = _cbr(low, params["dec_low"])                       # (N, H/4, W/4, 8)
    up = bilinear_resize(jnp.transpose(aspp, (0, 3, 1, 2)),   # resize in channel-major
                         lowp.shape[1], lowp.shape[2])        # (N, 16, H/4, W/4)
    up = jnp.transpose(up, (0, 2, 3, 1))                      # back to NHWC
    d = jnp.concatenate([up, lowp], axis=-1)                  # (N, H/4, W/4, 24)
    d = _cbr(d, params["dec1"], padding=1)
    d = _cbr(d, params["dec2"], padding=1)
    logits = conv2d(d, params["cls"]["w"], params["cls"]["scale"],
                    params["cls"]["bias"], relu=False, out_dtype=jnp.float32)

    # --- final upsample to input size (align_corners=True), NCHW output ---
    logits = jnp.transpose(logits, (0, 3, 1, 2))              # (N, 21, H/4, W/4)
    return bilinear_resize(logits, H, W)                      # (N, 21, H, W)


# ----------------------------------------------------------------------------
if __name__ == "__main__":
    key = jax.random.PRNGKey(0)
    x = jax.random.normal(key, (2, 3, 32, 32), jnp.float32)   # NCHW like PyTorch
    params = build_params(num_classes=21, seed=0)

    out = jax.jit(deeplab_forward)(params, x)
    out = jax.block_until_ready(out)

    assert out.shape == (2, 21, 32, 32), out.shape
    assert out.dtype == jnp.float32
    assert bool(jnp.all(jnp.isfinite(out)))
    print("KERNEL_OK")
</pallas_src>

<mosaic_0001>
module attributes {stable_mosaic.version = 11 : i64} {
  func.func private @main(%arg0: i32) attributes {dimension_semantics = [#tpu.dimension_semantics<core_parallel>], iteration_bounds = array<i64: 2>, tpu.core_type = #tpu.core_type<sc_scalar_subcore>, window_params = []} {
    return
  }
}

module attributes {stable_mosaic.version = 11 : i64} {
  func.func private @main(%arg0: i32) attributes {dimension_semantics = [#tpu.dimension_semantics<core_parallel>], iteration_bounds = array<i64: 2>, tpu.core_type = #tpu.core_type<sc_scalar_subcore>, window_params = []} {
    return
  }
}

module attributes {stable_mosaic.version = 11 : i64} {
  func.func @_fused_matmul_kernel(%arg0: i32, %arg1: i32, %arg2: memref<512x27xbf16, #tpu.memory_space<vmem>>, %arg3: memref<27x8xbf16, #tpu.memory_space<vmem>>, %arg4: memref<1x8xf32, #tpu.memory_space<vmem>>, %arg5: memref<1x8xf32, #tpu.memory_space<vmem>>, %arg6: memref<512x8xbf16, #tpu.memory_space<vmem>>) attributes {dimension_semantics = [#tpu.dimension_semantics<parallel>, #tpu.dimension_semantics<parallel>], iteration_bounds = array<i64: 1, 1>, scalar_prefetch = 0 : i64, scratch_operands = 0 : i64, tpu.core_type = #tpu.core_type<tc>, window_params = [{transform_indices = @transform_0, window_bounds = array<i64: 512, 27>}, {transform_indices = @transform_1, window_bounds = array<i64: 27, 8>}, {transform_indices = @transform_2, window_bounds = array<i64: 1, 8>}, {transform_indices = @transform_3, window_bounds = array<i64: 1, 8>}, {transform_indices = @transform_4, window_bounds = array<i64: 512, 8>}]} {
    %c0 = arith.constant 0 : index
    %c0_0 = arith.constant 0 : index
    %0 = vector.load %arg2[%c0, %c0_0] : memref<512x27xbf16, #tpu.memory_space<vmem>>, vector<512x27xbf16>
    %c0_1 = arith.constant 0 : index
    %c0_2 = arith.constant 0 : index
    %1 = vector.load %arg3[%c0_1, %c0_2] : memref<27x8xbf16, #tpu.memory_space<vmem>>, vector<27x8xbf16>
    %cst = arith.constant dense<0.000000e+00> : vector<512x8xf32>
    %2 = tpu.matmul %0, %1, %cst {dimension_numbers = #tpu.dot_dimension_numbers<[1], [0], [0], [1], [0, 0, 1, 1], [], []>} : vector<512x27xbf16>, vector<27x8xbf16>, vector<512x8xf32> -> vector<512x8xf32>
    %c0_3 = arith.constant 0 : index
    %c0_4 = arith.constant 0 : index
    %3 = vector.load %arg4[%c0_3, %c0_4] : memref<1x8xf32, #tpu.memory_space<vmem>>, vector<1x8xf32>
    %4 = vector.broadcast %3 : vector<1x8xf32> to vector<512x8xf32>
    %5 = arith.mulf %2, %4 : vector<512x8xf32>
    %c0_5 = arith.constant 0 : index
    %c0_6 = arith.constant 0 : index
    %6 = vector.load %arg5[%c0_5, %c0_6] : memref<1x8xf32, #tpu.memory_space<vmem>>, vector<1x8xf32>
    %7 = vector.broadcast %6 : vector<1x8xf32> to vector<512x8xf32>
    %8 = arith.addf %5, %7 : vector<512x8xf32>
    %cst_7 = arith.constant 0.000000e+00 : f32
    %9 = vector.broadcast %cst_7 : f32 to vector<512x8xf32>
    %10 = arith.maximumf %8, %9 : vector<512x8xf32>
    %11 = arith.truncf %10 : vector<512x8xf32> to vector<512x8xbf16>
    %c0_8 = arith.constant 0 : index
    %c0_9 = arith.constant 0 : index
    %12 = vector.load %arg6[%c0_8, %c0_9] : memref<512x8xbf16, #tpu.memory_space<vmem>>, vector<512x8xbf16>
    tpu.vector_store %arg6[%c0_8, %c0_9], %11 {strides = array<i32>} : memref<512x8xbf16, #tpu.memory_space<vmem>>, vector<512x8xbf16>,
    return
  }
  func.func @transform_0(%arg0: i32, %arg1: i32) -> (i32, i32) {
    %c0_i32 = arith.constant 0 : i32
    %c0_i32_0 = arith.constant 0 : i32
    return %arg0, %c0_i32 : i32, i32
  }
  func.func @transform_1(%arg0: i32, %arg1: i32) -> (i32, i32) {
    %c0_i32 = arith.constant 0 : i32
    %c0_i32_0 = arith.constant 0 : i32
    return %c0_i32, %arg1 : i32, i32
  }
  func.func @transform_2(%arg0: i32, %arg1: i32) -> (i32, i32) {
    %c0_i32 = arith.constant 0 : i32
    %c0_i32_0 = arith.constant 0 : i32
    return %c0_i32, %arg1 : i32, i32
  }
  func.func @transform_3(%arg0: i32, %arg1: i32) -> (i32, i32) {
    %c0_i32 = arith.constant 0 : i32
    %c0_i32_0 = arith.constant 0 : i32
    return %c0_i32, %arg1 : i32, i32
  }
  func.func @transform_4(%arg0: i32, %arg1: i32) -> (i32, i32) {
    %c0_i32 = arith.constant 0 : i32
    return %arg0, %arg1 : i32, i32
  }
}

module attributes {stable_mosaic.version = 11 : i64} {
  func.func @_fused_matmul_kernel(%arg0: i32, %arg1: i32, %arg2: memref<128x72xbf16, #tpu.memory_space<vmem>>, %arg3: memref<72x16xbf16, #tpu.memory_space<vmem>>, %arg4: memref<1x16xf32, #tpu.memory_space<vmem>>, %arg5: memref<1x16xf32, #tpu.memory_space<vmem>>, %arg6: memref<128x16xbf16, #tpu.memory_space<vmem>>) attributes {dimension_semantics = [#tpu.dimension_semantics<parallel>, #tpu.dimension_semantics<parallel>], iteration_bounds = array<i64: 1, 1>, scalar_prefetch = 0 : i64, scratch_operands = 0 : i64, tpu.core_type = #tpu.core_type<tc>, window_params = [{transform_indices = @transform_0, window_bounds = array<i64: 128, 72>}, {transform_indices = @transform_1, window_bounds = array<i64: 72, 16>}, {transform_indices = @transform_2, window_bounds = array<i64: 1, 16>}, {transform_indices = @transform_3, window_bounds = array<i64: 1, 16>}, {transform_indices = @transform_4, window_bounds = array<i64: 128, 16>}]} {
    %c0 = arith.constant 0 : index
    %c0_0 = arith.constant 0 : index
    %0 = vector.load %arg2[%c0, %c0_0] : memref<128x72xbf16, #tpu.memory_space<vmem>>, vector<128x72xbf16>
    %c0_1 = arith.constant 0 : index
    %c0_2 = arith.constant 0 : index
    %1 = vector.load %arg3[%c0_1, %c0_2] : memref<72x16xbf16, #tpu.memory_space<vmem>>, vector<72x16xbf16>
    %cst = arith.constant dense<0.000000e+00> : vector<128x16xf32>
    %2 = tpu.matmul %0, %1, %cst {dimension_numbers = #tpu.dot_dimension_numbers<[1], [0], [0], [1], [0, 0, 1, 1], [], []>} : vector<128x72xbf16>, vector<72x16xbf16>, vector<128x16xf32> -> vector<128x16xf32>
    %c0_3 = arith.constant 0 : index
    %c0_4 = arith.constant 0 : index
    %3 = vector.load %arg4[%c0_3, %c0_4] : memref<1x16xf32, #tpu.memory_space<vmem>>, vector<1x16xf32>
    %4 = vector.broadcast %3 : vector<1x16xf32> to vector<128x16xf32>
    %5 = arith.mulf %2, %4 : vector<128x16xf32>
    %c0_5 = arith.constant 0 : index
    %c0_6 = arith.constant 0 : index
    %6 = vector.load %arg5[%c0_5, %c0_6] : memref<1x16xf32, #tpu.memory_space<vmem>>, vector<1x16xf32>
    %7 = vector.broadcast %6 : vector<1x16xf32> to vector<128x16xf32>
    %8 = arith.addf %5, %7 : vector<128x16xf32>
    %cst_7 = arith.constant 0.000000e+00 : f32
    %9 = vector.broadcast %cst_7 : f32 to vector<128x16xf32>
    %10 = arith.maximumf %8, %9 : vector<128x16xf32>
    %11 = arith.truncf %10 : vector<128x16xf32> to vector<128x16xbf16>
    %c0_8 = arith.constant 0 : index
    %c0_9 = arith.constant 0 : index
    %12 = vector.load %arg6[%c0_8, %c0_9] : memref<128x16xbf16, #tpu.memory_space<vmem>>, vector<128x16xbf16>
    tpu.vector_store %arg6[%c0_8, %c0_9], %11 {strides = array<i32>} : memref<128x16xbf16, #tpu.memory_space<vmem>>, vector<128x16xbf16>,
    return
  }
  func.func @transform_0(%arg0: i32, %arg1: i32) -> (i32, i32) {
    %c0_i32 = arith.constant 0 : i32
    %c0_i32_0 = arith.constant 0 : i32
    return %arg0, %c0_i32 : i32, i32
  }
  func.func @transform_1(%arg0: i32, %arg1: i32) -> (i32, i32) {
    %c0_i32 = arith.constant 0 : i32
    %c0_i32_0 = arith.constant 0 : i32
    return %c0_i32, %arg1 : i32, i32
  }
  func.func @transform_2(%arg0: i32, %arg1: i32) -> (i32, i32) {
    %c0_i32 = arith.constant 0 : i32
    %c0_i32_0 = arith.constant 0 : i32
    return %c0_i32, %arg1 : i32, i32
  }
  func.func @transform_3(%arg0: i32, %arg1: i32) -> (i32, i32) {
    %c0_i32 = arith.constant 0 : i32
    %c0_i32_0 = arith.constant 0 : i32
    return %c0_i32, %arg1 : i32, i32
  }
  func.func @transform_4(%arg0: i32, %arg1: i32) -> (i32, i32) {
    %c0_i32 = arith.constant 0 : i32
    return %arg0, %arg1 : i32, i32
  }
}

module attributes {stable_mosaic.version = 11 : i64} {
  func.func @_fused_matmul_kernel(%arg0: i32, %arg1: i32, %arg2: memref<32x144xbf16, #tpu.memory_space<vmem>>, %arg3: memref<144x32xbf16, #tpu.memory_space<vmem>>, %arg4: memref<1x32xf32, #tpu.memory_space<vmem>>, %arg5: memref<1x32xf32, #tpu.memory_space<vmem>>, %arg6: memref<32x32xbf16, #tpu.memory_space<vmem>>) attributes {dimension_semantics = [#tpu.dimension_semantics<parallel>, #tpu.dimension_semantics<parallel>], iteration_bounds = array<i64: 1, 1>, scalar_prefetch = 0 : i64, scratch_operands = 0 : i64, tpu.core_type = #tpu.core_type<tc>, window_params = [{transform_indices = @transform_0, window_bounds = array<i64: 32, 144>}, {transform_indices = @transform_1, window_bounds = array<i64: 144, 32>}, {transform_indices = @transform_2, window_bounds = array<i64: 1, 32>}, {transform_indices = @transform_3, window_bounds = array<i64: 1, 32>}, {transform_indices = @transform_4, window_bounds = array<i64: 32, 32>}]} {
    %c0 = arith.constant 0 : index
    %c0_0 = arith.constant 0 : index
    %0 = vector.load %arg2[%c0, %c0_0] : memref<32x144xbf16, #tpu.memory_space<vmem>>, vector<32x144xbf16>
    %c0_1 = arith.constant 0 : index
    %c0_2 = arith.constant 0 : index
    %1 = vector.load %arg3[%c0_1, %c0_2] : memref<144x32xbf16, #tpu.memory_space<vmem>>, vector<144x32xbf16>
    %cst = arith.constant dense<0.000000e+00> : vector<32x32xf32>
    %2 = tpu.matmul %0, %1, %cst {dimension_numbers = #tpu.dot_dimension_numbers<[1], [0], [0], [1], [0, 0, 1, 1], [], []>} : vector<32x144xbf16>, vector<144x32xbf16>, vector<32x32xf32> -> vector<32x32xf32>
    %c0_3 = arith.constant 0 : index
    %c0_4 = arith.constant 0 : index
    %3 = vector.load %arg4[%c0_3, %c0_4] : memref<1x32xf32, #tpu.memory_space<vmem>>, vector<1x32xf32>
    %4 = vector.broadcast %3 : vector<1x32xf32> to vector<32x32xf32>
    %5 = arith.mulf %2, %4 : vector<32x32xf32>
    %c0_5 = arith.constant 0 : index
    %c0_6 = arith.constant 0 : index
    %6 = vector.load %arg5[%c0_5, %c0_6] : memref<1x32xf32, #tpu.memory_space<vmem>>, vector<1x32xf32>
    %7 = vector.broadcast %6 : vector<1x32xf32> to vector<32x32xf32>
    %8 = arith.addf %5, %7 : vector<32x32xf32>
    %cst_7 = arith.constant 0.000000e+00 : f32
    %9 = vector.broadcast %cst_7 : f32 to vector<32x32xf32>
    %10 = arith.maximumf %8, %9 : vector<32x32xf32>
    %11 = arith.truncf %10 : vector<32x32xf32> to vector<32x32xbf16>
    %c0_8 = arith.constant 0 : index
    %c0_9 = arith.constant 0 : index
    %12 = vector.load %arg6[%c0_8, %c0_9] : memref<32x32xbf16, #tpu.memory_space<vmem>>, vector<32x32xbf16>
    tpu.vector_store %arg6[%c0_8, %c0_9], %11 {strides = array<i32>} : memref<32x32xbf16, #tpu.memory_space<vmem>>, vector<32x32xbf16>,
    return
  }
  func.func @transform_0(%arg0: i32, %arg1: i32) -> (i32, i32) {
    %c0_i32 = arith.constant 0 : i32
    %c0_i32_0 = arith.constant 0 : i32
    return %arg0, %c0_i32 : i32, i32
  }
  func.func @transform_1(%arg0: i32, %arg1: i32) -> (i32, i32) {
    %c0_i32 = arith.constant 0 : i32
    %c0_i32_0 = arith.constant 0 : i32
    return %c0_i32, %arg1 : i32, i32
  }
  func.func @transform_2(%arg0: i32, %arg1: i32) -> (i32, i32) {
    %c0_i32 = arith.constant 0 : i32
    %c0_i32_0 = arith.constant 0 : i32
    return %c0_i32, %arg1 : i32, i32
  }
  func.func @transform_3(%arg0: i32, %arg1: i32) -> (i32, i32) {
    %c0_i32 = arith.constant 0 : i32
    %c0_i32_0 = arith.constant 0 : i32
    return %c0_i32, %arg1 : i32, i32
  }
  func.func @transform_4(%arg0: i32, %arg1: i32) -> (i32, i32) {
    %c0_i32 = arith.constant 0 : i32
    return %arg0, %arg1 : i32, i32
  }
}

module attributes {stable_mosaic.version = 11 : i64} {
  func.func @_fused_matmul_kernel(%arg0: i32, %arg1: i32, %arg2: memref<128x16xbf16, #tpu.memory_space<vmem>>, %arg3: memref<16x8xbf16, #tpu.memory_space<vmem>>, %arg4: memref<1x8xf32, #tpu.memory_space<vmem>>, %arg5: memref<1x8xf32, #tpu.memory_space<vmem>>, %arg6: memref<128x8xbf16, #tpu.memory_space<vmem>>) attributes {dimension_semantics = [#tpu.dimension_semantics<parallel>, #tpu.dimension_semantics<parallel>], iteration_bounds = array<i64: 1, 1>, scalar_prefetch = 0 : i64, scratch_operands = 0 : i64, tpu.core_type = #tpu.core_type<tc>, window_params = [{transform_indices = @transform_0, window_bounds = array<i64: 128, 16>}, {transform_indices = @transform_1, window_bounds = array<i64: 16, 8>}, {transform_indices = @transform_2, window_bounds = array<i64: 1, 8>}, {transform_indices = @transform_3, window_bounds = array<i64: 1, 8>}, {transform_indices = @transform_4, window_bounds = array<i64: 128, 8>}]} {
    %c0 = arith.constant 0 : index
    %c0_0 = arith.constant 0 : index
    %0 = vector.load %arg2[%c0, %c0_0] : memref<128x16xbf16, #tpu.memory_space<vmem>>, vector<128x16xbf16>
    %c0_1 = arith.constant 0 : index
    %c0_2 = arith.constant 0 : index
    %1 = vector.load %arg3[%c0_1, %c0_2] : memref<16x8xbf16, #tpu.memory_space<vmem>>, vector<16x8xbf16>
    %cst = arith.constant dense<0.000000e+00> : vector<128x8xf32>
    %2 = tpu.matmul %0, %1, %cst {dimension_numbers = #tpu.dot_dimension_numbers<[1], [0], [0], [1], [0, 0, 1, 1], [], []>} : vector<128x16xbf16>, vector<16x8xbf16>, vector<128x8xf32> -> vector<128x8xf32>
    %c0_3 = arith.constant 0 : index
    %c0_4 = arith.constant 0 : index
    %3 = vector.load %arg4[%c0_3, %c0_4] : memref<1x8xf32, #tpu.memory_space<vmem>>, vector<1x8xf32>
    %4 = vector.broadcast %3 : vector<1x8xf32> to vector<128x8xf32>
    %5 = arith.mulf %2, %4 : vector<128x8xf32>
    %c0_5 = arith.constant 0 : index
    %c0_6 = arith.constant 0 : index
    %6 = vector.load %arg5[%c0_5, %c0_6] : memref<1x8xf32, #tpu.memory_space<vmem>>, vector<1x8xf32>
    %7 = vector.broadcast %6 : vector<1x8xf32> to vector<128x8xf32>
    %8 = arith.addf %5, %7 : vector<128x8xf32>
    %cst_7 = arith.constant 0.000000e+00 : f32
    %9 = vector.broadcast %cst_7 : f32 to vector<128x8xf32>
    %10 = arith.maximumf %8, %9 : vector<128x8xf32>
    %11 = arith.truncf %10 : vector<128x8xf32> to vector<128x8xbf16>
    %c0_8 = arith.constant 0 : index
    %c0_9 = arith.constant 0 : index
    %12 = vector.load %arg6[%c0_8, %c0_9] : memref<128x8xbf16, #tpu.memory_space<vmem>>, vector<128x8xbf16>
    tpu.vector_store %arg6[%c0_8, %c0_9], %11 {strides = array<i32>} : memref<128x8xbf16, #tpu.memory_space<vmem>>, vector<128x8xbf16>,
    return
  }
  func.func @transform_0(%arg0: i32, %arg1: i32) -> (i32, i32) {
    %c0_i32 = arith.constant 0 : i32
    %c0_i32_0 = arith.constant 0 : i32
    return %arg0, %c0_i32 : i32, i32
  }
  func.func @transform_1(%arg0: i32, %arg1: i32) -> (i32, i32) {
    %c0_i32 = arith.constant 0 : i32
    %c0_i32_0 = arith.constant 0 : i32
    return %c0_i32, %arg1 : i32, i32
  }
  func.func @transform_2(%arg0: i32, %arg1: i32) -> (i32, i32) {
    %c0_i32 = arith.constant 0 : i32
    %c0_i32_0 = arith.constant 0 : i32
    return %c0_i32, %arg1 : i32, i32
  }
  func.func @transform_3(%arg0: i32, %arg1: i32) -> (i32, i32) {
    %c0_i32 = arith.constant 0 : i32
    %c0_i32_0 = arith.constant 0 : i32
    return %c0_i32, %arg1 : i32, i32
  }
  func.func @transform_4(%arg0: i32, %arg1: i32) -> (i32, i32) {
    %c0_i32 = arith.constant 0 : i32
    return %arg0, %arg1 : i32, i32
  }
}

module attributes {stable_mosaic.version = 11 : i64} {
  func.func @_fused_matmul_kernel(%arg0: i32, %arg1: i32, %arg2: memref<8x288xbf16, #tpu.memory_space<vmem>>, %arg3: memref<288x32xbf16, #tpu.memory_space<vmem>>, %arg4: memref<1x32xf32, #tpu.memory_space<vmem>>, %arg5: memref<1x32xf32, #tpu.memory_space<vmem>>, %arg6: memref<8x32xbf16, #tpu.memory_space<vmem>>) attributes {dimension_semantics = [#tpu.dimension_semantics<parallel>, #tpu.dimension_semantics<parallel>], iteration_bounds = array<i64: 1, 1>, scalar_prefetch = 0 : i64, scratch_operands = 0 : i64, tpu.core_type = #tpu.core_type<tc>, window_params = [{transform_indices = @transform_0, window_bounds = array<i64: 8, 288>}, {transform_indices = @transform_1, window_bounds = array<i64: 288, 32>}, {transform_indices = @transform_2, window_bounds = array<i64: 1, 32>}, {transform_indices = @transform_3, window_bounds = array<i64: 1, 32>}, {transform_indices = @transform_4, window_bounds = array<i64: 8, 32>}]} {
    %c0 = arith.constant 0 : index
    %c0_0 = arith.constant 0 : index
    %0 = vector.load %arg2[%c0, %c0_0] : memref<8x288xbf16, #tpu.memory_space<vmem>>, vector<8x288xbf16>
    %c0_1 = arith.constant 0 : index
    %c0_2 = arith.constant 0 : index
    %1 = vector.load %arg3[%c0_1, %c0_2] : memref<288x32xbf16, #tpu.memory_space<vmem>>, vector<288x32xbf16>
    %cst = arith.constant dense<0.000000e+00> : vector<8x32xf32>
    %2 = tpu.matmul %0, %1, %cst {dimension_numbers = #tpu.dot_dimension_numbers<[1], [0], [0], [1], [0, 0, 1, 1], [], []>} : vector<8x288xbf16>, vector<288x32xbf16>, vector<8x32xf32> -> vector<8x32xf32>
    %c0_3 = arith.constant 0 : index
    %c0_4 = arith.constant 0 : index
    %3 = vector.load %arg4[%c0_3, %c0_4] : memref<1x32xf32, #tpu.memory_space<vmem>>, vector<1x32xf32>
    %4 = vector.broadcast %3 : vector<1x32xf32> to vector<8x32xf32>
    %5 = arith.mulf %2, %4 : vector<8x32xf32>
    %c0_5 = arith.constant 0 : index
    %c0_6 = arith.constant 0 : index
    %6 = vector.load %arg5[%c0_5, %c0_6] : memref<1x32xf32, #tpu.memory_space<vmem>>, vector<1x32xf32>
    %7 = vector.broadcast %6 : vector<1x32xf32> to vector<8x32xf32>
    %8 = arith.addf %5, %7 : vector<8x32xf32>
    %cst_7 = arith.constant 0.000000e+00 : f32
    %9 = vector.broadcast %cst_7 : f32 to vector<8x32xf32>
    %10 = arith.maximumf %8, %9 : vector<8x32xf32>
    %11 = arith.truncf %10 : vector<8x32xf32> to vector<8x32xbf16>
    %c0_8 = arith.constant 0 : index
    %c0_9 = arith.constant 0 : index
    %12 = vector.load %arg6[%c0_8, %c0_9] : memref<8x32xbf16, #tpu.memory_space<vmem>>, vector<8x32xbf16>
    tpu.vector_store %arg6[%c0_8, %c0_9], %11 {strides = array<i32>} : memref<8x32xbf16, #tpu.memory_space<vmem>>, vector<8x32xbf16>,
    return
  }
  func.func @transform_0(%arg0: i32, %arg1: i32) -> (i32, i32) {
    %c0_i32 = arith.constant 0 : i32
    %c0_i32_0 = arith.constant 0 : i32
    return %arg0, %c0_i32 : i32, i32
  }
  func.func @transform_1(%arg0: i32, %arg1: i32) -> (i32, i32) {
    %c0_i32 = arith.constant 0 : i32
    %c0_i32_0 = arith.constant 0 : i32
    return %c0_i32, %arg1 : i32, i32
  }
  func.func @transform_2(%arg0: i32, %arg1: i32) -> (i32, i32) {
    %c0_i32 = arith.constant 0 : i32
    %c0_i32_0 = arith.constant 0 : i32
    return %c0_i32, %arg1 : i32, i32
  }
  func.func @transform_3(%arg0: i32, %arg1: i32) -> (i32, i32) {
    %c0_i32 = arith.constant 0 : i32
    %c0_i32_0 = arith.constant 0 : i32
    return %c0_i32, %arg1 : i32, i32
  }
  func.func @transform_4(%arg0: i32, %arg1: i32) -> (i32, i32) {
    %c0_i32 = arith.constant 0 : i32
    return %arg0, %arg1 : i32, i32
  }
}

module attributes {stable_mosaic.version = 11 : i64} {
  func.func @_fused_matmul_kernel(%arg0: i32, %arg1: i32, %arg2: memref<8x32xbf16, #tpu.memory_space<vmem>>, %arg3: memref<32x16xbf16, #tpu.memory_space<vmem>>, %arg4: memref<1x16xf32, #tpu.memory_space<vmem>>, %arg5: memref<1x16xf32, #tpu.memory_space<vmem>>, %arg6: memref<8x16xbf16, #tpu.memory_space<vmem>>) attributes {dimension_semantics = [#tpu.dimension_semantics<parallel>, #tpu.dimension_semantics<parallel>], iteration_bounds = array<i64: 1, 1>, scalar_prefetch = 0 : i64, scratch_operands = 0 : i64, tpu.core_type = #tpu.core_type<tc>, window_params = [{transform_indices = @transform_0, window_bounds = array<i64: 8, 32>}, {transform_indices = @transform_1, window_bounds = array<i64: 32, 16>}, {transform_indices = @transform_2, window_bounds = array<i64: 1, 16>}, {transform_indices = @transform_3, window_bounds = array<i64: 1, 16>}, {transform_indices = @transform_4, window_bounds = array<i64: 8, 16>}]} {
    %c0 = arith.constant 0 : index
    %c0_0 = arith.constant 0 : index
    %0 = vector.load %arg2[%c0, %c0_0] : memref<8x32xbf16, #tpu.memory_space<vmem>>, vector<8x32xbf16>
    %c0_1 = arith.constant 0 : index
    %c0_2 = arith.constant 0 : index
    %1 = vector.load %arg3[%c0_1, %c0_2] : memref<32x16xbf16, #tpu.memory_space<vmem>>, vector<32x16xbf16>
    %cst = arith.constant dense<0.000000e+00> : vector<8x16xf32>
    %2 = tpu.matmul %0, %1, %cst {dimension_numbers = #tpu.dot_dimension_numbers<[1], [0], [0], [1], [0, 0, 1, 1], [], []>} : vector<8x32xbf16>, vector<32x16xbf16>, vector<8x16xf32> -> vector<8x16xf32>
    %c0_3 = arith.constant 0 : index
    %c0_4 = arith.constant 0 : index
    %3 = vector.load %arg4[%c0_3, %c0_4] : memref<1x16xf32, #tpu.memory_space<vmem>>, vector<1x16xf32>
    %4 = vector.broadcast %3 : vector<1x16xf32> to vector<8x16xf32>
    %5 = arith.mulf %2, %4 : vector<8x16xf32>
    %c0_5 = arith.constant 0 : index
    %c0_6 = arith.constant 0 : index
    %6 = vector.load %arg5[%c0_5, %c0_6] : memref<1x16xf32, #tpu.memory_space<vmem>>, vector<1x16xf32>
    %7 = vector.broadcast %6 : vector<1x16xf32> to vector<8x16xf32>
    %8 = arith.addf %5, %7 : vector<8x16xf32>
    %cst_7 = arith.constant 0.000000e+00 : f32
    %9 = vector.broadcast %cst_7 : f32 to vector<8x16xf32>
    %10 = arith.maximumf %8, %9 : vector<8x16xf32>
    %11 = arith.truncf %10 : vector<8x16xf32> to vector<8x16xbf16>
    %c0_8 = arith.constant 0 : index
    %c0_9 = arith.constant 0 : index
    %12 = vector.load %arg6[%c0_8, %c0_9] : memref<8x16xbf16, #tpu.memory_space<vmem>>, vector<8x16xbf16>
    tpu.vector_store %arg6[%c0_8, %c0_9], %11 {strides = array<i32>} : memref<8x16xbf16, #tpu.memory_space<vmem>>, vector<8x16xbf16>,
    return
  }
  func.func @transform_0(%arg0: i32, %arg1: i32) -> (i32, i32) {
    %c0_i32 = arith.constant 0 : i32
    %c0_i32_0 = arith.constant 0 : i32
    return %arg0, %c0_i32 : i32, i32
  }
  func.func @transform_1(%arg0: i32, %arg1: i32) -> (i32, i32) {
    %c0_i32 = arith.constant 0 : i32
    %c0_i32_0 = arith.constant 0 : i32
    return %c0_i32, %arg1 : i32, i32
  }
  func.func @transform_2(%arg0: i32, %arg1: i32) -> (i32, i32) {
    %c0_i32 = arith.constant 0 : i32
    %c0_i32_0 = arith.constant 0 : i32
    return %c0_i32, %arg1 : i32, i32
  }
  func.func @transform_3(%arg0: i32, %arg1: i32) -> (i32, i32) {
    %c0_i32 = arith.constant 0 : i32
    %c0_i32_0 = arith.constant 0 : i32
    return %c0_i32, %arg1 : i32, i32
  }
  func.func @transform_4(%arg0: i32, %arg1: i32) -> (i32, i32) {
    %c0_i32 = arith.constant 0 : i32
    return %arg0, %arg1 : i32, i32
  }
}

module attributes {stable_mosaic.version = 11 : i64} {
  func.func @_fused_matmul_kernel(%arg0: i32, %arg1: i32, %arg2: memref<8x288xbf16, #tpu.memory_space<vmem>>, %arg3: memref<288x16xbf16, #tpu.memory_space<vmem>>, %arg4: memref<1x16xf32, #tpu.memory_space<vmem>>, %arg5: memref<1x16xf32, #tpu.memory_space<vmem>>, %arg6: memref<8x16xbf16, #tpu.memory_space<vmem>>) attributes {dimension_semantics = [#tpu.dimension_semantics<parallel>, #tpu.dimension_semantics<parallel>], iteration_bounds = array<i64: 1, 1>, scalar_prefetch = 0 : i64, scratch_operands = 0 : i64, tpu.core_type = #tpu.core_type<tc>, window_params = [{transform_indices = @transform_0, window_bounds = array<i64: 8, 288>}, {transform_indices = @transform_1, window_bounds = array<i64: 288, 16>}, {transform_indices = @transform_2, window_bounds = array<i64: 1, 16>}, {transform_indices = @transform_3, window_bounds = array<i64: 1, 16>}, {transform_indices = @transform_4, window_bounds = array<i64: 8, 16>}]} {
    %c0 = arith.constant 0 : index
    %c0_0 = arith.constant 0 : index
    %0 = vector.load %arg2[%c0, %c0_0] : memref<8x288xbf16, #tpu.memory_space<vmem>>, vector<8x288xbf16>
    %c0_1 = arith.constant 0 : index
    %c0_2 = arith.constant 0 : index
    %1 = vector.load %arg3[%c0_1, %c0_2] : memref<288x16xbf16, #tpu.memory_space<vmem>>, vector<288x16xbf16>
    %cst = arith.constant dense<0.000000e+00> : vector<8x16xf32>
    %2 = tpu.matmul %0, %1, %cst {dimension_numbers = #tpu.dot_dimension_numbers<[1], [0], [0], [1], [0, 0, 1, 1], [], []>} : vector<8x288xbf16>, vector<288x16xbf16>, vector<8x16xf32> -> vector<8x16xf32>
    %c0_3 = arith.constant 0 : index
    %c0_4 = arith.constant 0 : index
    %3 = vector.load %arg4[%c0_3, %c0_4] : memref<1x16xf32, #tpu.memory_space<vmem>>, vector<1x16xf32>
    %4 = vector.broadcast %3 : vector<1x16xf32> to vector<8x16xf32>
    %5 = arith.mulf %2, %4 : vector<8x16xf32>
    %c0_5 = arith.constant 0 : index
    %c0_6 = arith.constant 0 : index
    %6 = vector.load %arg5[%c0_5, %c0_6] : memref<1x16xf32, #tpu.memory_space<vmem>>, vector<1x16xf32>
    %7 = vector.broadcast %6 : vector<1x16xf32> to vector<8x16xf32>
    %8 = arith.addf %5, %7 : vector<8x16xf32>
    %cst_7 = arith.constant 0.000000e+00 : f32
    %9 = vector.broadcast %cst_7 : f32 to vector<8x16xf32>
    %10 = arith.maximumf %8, %9 : vector<8x16xf32>
    %11 = arith.truncf %10 : vector<8x16xf32> to vector<8x16xbf16>
    %c0_8 = arith.constant 0 : index
    %c0_9 = arith.constant 0 : index
    %12 = vector.load %arg6[%c0_8, %c0_9] : memref<8x16xbf16, #tpu.memory_space<vmem>>, vector<8x16xbf16>
    tpu.vector_store %arg6[%c0_8, %c0_9], %11 {strides = array<i32>} : memref<8x16xbf16, #tpu.memory_space<vmem>>, vector<8x16xbf16>,
    return
  }
  func.func @transform_0(%arg0: i32, %arg1: i32) -> (i32, i32) {
    %c0_i32 = arith.constant 0 : i32
    %c0_i32_0 = arith.constant 0 : i32
    return %arg0, %c0_i32 : i32, i32
  }
  func.func @transform_1(%arg0: i32, %arg1: i32) -> (i32, i32) {
    %c0_i32 = arith.constant 0 : i32
    %c0_i32_0 = arith.constant 0 : i32
    return %c0_i32, %arg1 : i32, i32
  }
  func.func @transform_2(%arg0: i32, %arg1: i32) -> (i32, i32) {
    %c0_i32 = arith.constant 0 : i32
    %c0_i32_0 = arith.constant 0 : i32
    return %c0_i32, %arg1 : i32, i32
  }
  func.func @transform_3(%arg0: i32, %arg1: i32) -> (i32, i32) {
    %c0_i32 = arith.constant 0 : i32
    %c0_i32_0 = arith.constant 0 : i32
    return %c0_i32, %arg1 : i32, i32
  }
  func.func @transform_4(%arg0: i32, %arg1: i32) -> (i32, i32) {
    %c0_i32 = arith.constant 0 : i32
    return %arg0, %arg1 : i32, i32
  }
}

module attributes {stable_mosaic.version = 11 : i64} {
  func.func @_fused_matmul_kernel(%arg0: i32, %arg1: i32, %arg2: memref<8x80xbf16, #tpu.memory_space<vmem>>, %arg3: memref<80x16xbf16, #tpu.memory_space<vmem>>, %arg4: memref<1x16xf32, #tpu.memory_space<vmem>>, %arg5: memref<1x16xf32, #tpu.memory_space<vmem>>, %arg6: memref<8x16xbf16, #tpu.memory_space<vmem>>) attributes {dimension_semantics = [#tpu.dimension_semantics<parallel>, #tpu.dimension_semantics<parallel>], iteration_bounds = array<i64: 1, 1>, scalar_prefetch = 0 : i64, scratch_operands = 0 : i64, tpu.core_type = #tpu.core_type<tc>, window_params = [{transform_indices = @transform_0, window_bounds = array<i64: 8, 80>}, {transform_indices = @transform_1, window_bounds = array<i64: 80, 16>}, {transform_indices = @transform_2, window_bounds = array<i64: 1, 16>}, {transform_indices = @transform_3, window_bounds = array<i64: 1, 16>}, {transform_indices = @transform_4, window_bounds = array<i64: 8, 16>}]} {
    %c0 = arith.constant 0 : index
    %c0_0 = arith.constant 0 : index
    %0 = vector.load %arg2[%c0, %c0_0] : memref<8x80xbf16, #tpu.memory_space<vmem>>, vector<8x80xbf16>
    %c0_1 = arith.constant 0 : index
    %c0_2 = arith.constant 0 : index
    %1 = vector.load %arg3[%c0_1, %c0_2] : memref<80x16xbf16, #tpu.memory_space<vmem>>, vector<80x16xbf16>
    %cst = arith.constant dense<0.000000e+00> : vector<8x16xf32>
    %2 = tpu.matmul %0, %1, %cst {dimension_numbers = #tpu.dot_dimension_numbers<[1], [0], [0], [1], [0, 0, 1, 1], [], []>} : vector<8x80xbf16>, vector<80x16xbf16>, vector<8x16xf32> -> vector<8x16xf32>
    %c0_3 = arith.constant 0 : index
    %c0_4 = arith.constant 0 : index
    %3 = vector.load %arg4[%c0_3, %c0_4] : memref<1x16xf32, #tpu.memory_space<vmem>>, vector<1x16xf32>
    %4 = vector.broadcast %3 : vector<1x16xf32> to vector<8x16xf32>
    %5 = arith.mulf %2, %4 : vector<8x16xf32>
    %c0_5 = arith.constant 0 : index
    %c0_6 = arith.constant 0 : index
    %6 = vector.load %arg5[%c0_5, %c0_6] : memref<1x16xf32, #tpu.memory_space<vmem>>, vector<1x16xf32>
    %7 = vector.broadcast %6 : vector<1x16xf32> to vector<8x16xf32>
    %8 = arith.addf %5, %7 : vector<8x16xf32>
    %cst_7 = arith.constant 0.000000e+00 : f32
    %9 = vector.broadcast %cst_7 : f32 to vector<8x16xf32>
    %10 = arith.maximumf %8, %9 : vector<8x16xf32>
    %11 = arith.truncf %10 : vector<8x16xf32> to vector<8x16xbf16>
    %c0_8 = arith.constant 0 : index
    %c0_9 = arith.constant 0 : index
    %12 = vector.load %arg6[%c0_8, %c0_9] : memref<8x16xbf16, #tpu.memory_space<vmem>>, vector<8x16xbf16>
    tpu.vector_store %arg6[%c0_8, %c0_9], %11 {strides = array<i32>} : memref<8x16xbf16, #tpu.memory_space<vmem>>, vector<8x16xbf16>,
    return
  }
  func.func @transform_0(%arg0: i32, %arg1: i32) -> (i32, i32) {
    %c0_i32 = arith.constant 0 : i32
    %c0_i32_0 = arith.constant 0 : i32
    return %arg0, %c0_i32 : i32, i32
  }
  func.func @transform_1(%arg0: i32, %arg1: i32) -> (i32, i32) {
    %c0_i32 = arith.constant 0 : i32
    %c0_i32_0 = arith.constant 0 : i32
    return %c0_i32, %arg1 : i32, i32
  }
  func.func @transform_2(%arg0: i32, %arg1: i32) -> (i32, i32) {
    %c0_i32 = arith.constant 0 : i32
    %c0_i32_0 = arith.constant 0 : i32
    return %c0_i32, %arg1 : i32, i32
  }
  func.func @transform_3(%arg0: i32, %arg1: i32) -> (i32, i32) {
    %c0_i32 = arith.constant 0 : i32
    %c0_i32_0 = arith.constant 0 : i32
    return %c0_i32, %arg1 : i32, i32
  }
  func.func @transform_4(%arg0: i32, %arg1: i32) -> (i32, i32) {
    %c0_i32 = arith.constant 0 : i32
    return %arg0, %arg1 : i32, i32
  }
}

module attributes {stable_mosaic.version = 11 : i64} {
  func.func @_resize_kernel(%arg0: i32, %arg1: memref<32x4xbf16, #tpu.memory_space<vmem>>, %arg2: memref<4x64xf32, #tpu.memory_space<vmem>>, %arg3: memref<32x64xbf16, #tpu.memory_space<vmem>>) attributes {dimension_semantics = [#tpu.dimension_semantics<parallel>], iteration_bounds = array<i64: 1>, scalar_prefetch = 0 : i64, scratch_operands = 0 : i64, tpu.core_type = #tpu.core_type<tc>, window_params = [{transform_indices = @transform_0, window_bounds = array<i64: 32, 4>}, {pipeline_mode = #tpu.pipeline_mode<synchronous>, transform_indices = @transform_1, window_bounds = array<i64: 4, 64>}, {transform_indices = @transform_2, window_bounds = array<i64: 32, 64>}]} {
    %c0 = arith.constant 0 : index
    %c0_0 = arith.constant 0 : index
    %0 = vector.load %arg1[%c0, %c0_0] : memref<32x4xbf16, #tpu.memory_space<vmem>>, vector<32x4xbf16>
    %1 = arith.extf %0 : vector<32x4xbf16> to vector<32x4xf32>
    %c0_1 = arith.constant 0 : index
    %c0_2 = arith.constant 0 : index
    %2 = vector.load %arg2[%c0_1, %c0_2] : memref<4x64xf32, #tpu.memory_space<vmem>>, vector<4x64xf32>
    %cst = arith.constant dense<0.000000e+00> : vector<32x64xf32>
    %3 = tpu.matmul %1, %2, %cst {dimension_numbers = #tpu.dot_dimension_numbers<[1], [0], [0], [1], [0, 0, 1, 1], [], []>} : vector<32x4xf32>, vector<4x64xf32>, vector<32x64xf32> -> vector<32x64xf32>
    %4 = arith.truncf %3 : vector<32x64xf32> to vector<32x64xbf16>
    %c0_3 = arith.constant 0 : index
    %c0_4 = arith.constant 0 : index
    %5 = vector.load %arg3[%c0_3, %c0_4] : memref<32x64xbf16, #tpu.memory_space<vmem>>, vector<32x64xbf16>
    tpu.vector_store %arg3[%c0_3, %c0_4], %4 {strides = array<i32>} : memref<32x64xbf16, #tpu.memory_space<vmem>>, vector<32x64xbf16>,
    return
  }
  func.func @transform_0(%arg0: i32) -> (i32, i32) {
    %c0_i32 = arith.constant 0 : i32
    %c0_i32_0 = arith.constant 0 : i32
    return %arg0, %c0_i32 : i32, i32
  }
  func.func @transform_1(%arg0: i32) -> (i32, i32) {
    %c0_i32 = arith.constant 0 : i32
    %c0_i32_0 = arith.constant 0 : i32
    %c0_i32_1 = arith.constant 0 : i32
    return %c0_i32, %c0_i32_0 : i32, i32
  }
  func.func @transform_2(%arg0: i32) -> (i32, i32) {
    %c0_i32 = arith.constant 0 : i32
    %c0_i32_0 = arith.constant 0 : i32
    return %arg0, %c0_i32 : i32, i32
  }
}

module attributes {stable_mosaic.version = 11 : i64} {
  func.func @_fused_matmul_kernel(%arg0: i32, %arg1: i32, %arg2: memref<128x216xbf16, #tpu.memory_space<vmem>>, %arg3: memref<216x16xbf16, #tpu.memory_space<vmem>>, %arg4: memref<1x16xf32, #tpu.memory_space<vmem>>, %arg5: memref<1x16xf32, #tpu.memory_space<vmem>>, %arg6: memref<128x16xbf16, #tpu.memory_space<vmem>>) attributes {dimension_semantics = [#tpu.dimension_semantics<parallel>, #tpu.dimension_semantics<parallel>], iteration_bounds = array<i64: 1, 1>, scalar_prefetch = 0 : i64, scratch_operands = 0 : i64, tpu.core_type = #tpu.core_type<tc>, window_params = [{transform_indices = @transform_0, window_bounds = array<i64: 128, 216>}, {transform_indices = @transform_1, window_bounds = array<i64: 216, 16>}, {transform_indices = @transform_2, window_bounds = array<i64: 1, 16>}, {transform_indices = @transform_3, window_bounds = array<i64: 1, 16>}, {transform_indices = @transform_4, window_bounds = array<i64: 128, 16>}]} {
    %c0 = arith.constant 0 : index
    %c0_0 = arith.constant 0 : index
    %0 = vector.load %arg2[%c0, %c0_0] : memref<128x216xbf16, #tpu.memory_space<vmem>>, vector<128x216xbf16>
    %c0_1 = arith.constant 0 : index
    %c0_2 = arith.constant 0 : index
    %1 = vector.load %arg3[%c0_1, %c0_2] : memref<216x16xbf16, #tpu.memory_space<vmem>>, vector<216x16xbf16>
    %cst = arith.constant dense<0.000000e+00> : vector<128x16xf32>
    %2 = tpu.matmul %0, %1, %cst {dimension_numbers = #tpu.dot_dimension_numbers<[1], [0], [0], [1], [0, 0, 1, 1], [], []>} : vector<128x216xbf16>, vector<216x16xbf16>, vector<128x16xf32> -> vector<128x16xf32>
    %c0_3 = arith.constant 0 : index
    %c0_4 = arith.constant 0 : index
    %3 = vector.load %arg4[%c0_3, %c0_4] : memref<1x16xf32, #tpu.memory_space<vmem>>, vector<1x16xf32>
    %4 = vector.broadcast %3 : vector<1x16xf32> to vector<128x16xf32>
    %5 = arith.mulf %2, %4 : vector<128x16xf32>
    %c0_5 = arith.constant 0 : index
    %c0_6 = arith.constant 0 : index
    %6 = vector.load %arg5[%c0_5, %c0_6] : memref<1x16xf32, #tpu.memory_space<vmem>>, vector<1x16xf32>
    %7 = vector.broadcast %6 : vector<1x16xf32> to vector<128x16xf32>
    %8 = arith.addf %5, %7 : vector<128x16xf32>
    %cst_7 = arith.constant 0.000000e+00 : f32
    %9 = vector.broadcast %cst_7 : f32 to vector<128x16xf32>
    %10 = arith.maximumf %8, %9 : vector<128x16xf32>
    %11 = arith.truncf %10 : vector<128x16xf32> to vector<128x16xbf16>
    %c0_8 = arith.constant 0 : index
    %c0_9 = arith.constant 0 : index
    %12 = vector.load %arg6[%c0_8, %c0_9] : memref<128x16xbf16, #tpu.memory_space<vmem>>, vector<128x16xbf16>
    tpu.vector_store %arg6[%c0_8, %c0_9], %11 {strides = array<i32>} : memref<128x16xbf16, #tpu.memory_space<vmem>>, vector<128x16xbf16>,
    return
  }
  func.func @transform_0(%arg0: i32, %arg1: i32) -> (i32, i32) {
    %c0_i32 = arith.constant 0 : i32
    %c0_i32_0 = arith.constant 0 : i32
    return %arg0, %c0_i32 : i32, i32
  }
  func.func @transform_1(%arg0: i32, %arg1: i32) -> (i32, i32) {
    %c0_i32 = arith.constant 0 : i32
    %c0_i32_0 = arith.constant 0 : i32
    return %c0_i32, %arg1 : i32, i32
  }
  func.func @transform_2(%arg0: i32, %arg1: i32) -> (i32, i32) {
    %c0_i32 = arith.constant 0 : i32
    %c0_i32_0 = arith.constant 0 : i32
    return %c0_i32, %arg1 : i32, i32
  }
  func.func @transform_3(%arg0: i32, %arg1: i32) -> (i32, i32) {
    %c0_i32 = arith.constant 0 : i32
    %c0_i32_0 = arith.constant 0 : i32
    return %c0_i32, %arg1 : i32, i32
  }
  func.func @transform_4(%arg0: i32, %arg1: i32) -> (i32, i32) {
    %c0_i32 = arith.constant 0 : i32
    return %arg0, %arg1 : i32, i32
  }
}

module attributes {stable_mosaic.version = 11 : i64} {
  func.func @_fused_matmul_kernel(%arg0: i32, %arg1: i32, %arg2: memref<128x144xbf16, #tpu.memory_space<vmem>>, %arg3: memref<144x16xbf16, #tpu.memory_space<vmem>>, %arg4: memref<1x16xf32, #tpu.memory_space<vmem>>, %arg5: memref<1x16xf32, #tpu.memory_space<vmem>>, %arg6: memref<128x16xbf16, #tpu.memory_space<vmem>>) attributes {dimension_semantics = [#tpu.dimension_semantics<parallel>, #tpu.dimension_semantics<parallel>], iteration_bounds = array<i64: 1, 1>, scalar_prefetch = 0 : i64, scratch_operands = 0 : i64, tpu.core_type = #tpu.core_type<tc>, window_params = [{transform_indices = @transform_0, window_bounds = array<i64: 128, 144>}, {transform_indices = @transform_1, window_bounds = array<i64: 144, 16>}, {transform_indices = @transform_2, window_bounds = array<i64: 1, 16>}, {transform_indices = @transform_3, window_bounds = array<i64: 1, 16>}, {transform_indices = @transform_4, window_bounds = array<i64: 128, 16>}]} {
    %c0 = arith.constant 0 : index
    %c0_0 = arith.constant 0 : index
    %0 = vector.load %arg2[%c0, %c0_0] : memref<128x144xbf16, #tpu.memory_space<vmem>>, vector<128x144xbf16>
    %c0_1 = arith.constant 0 : index
    %c0_2 = arith.constant 0 : index
    %1 = vector.load %arg3[%c0_1, %c0_2] : memref<144x16xbf16, #tpu.memory_space<vmem>>, vector<144x16xbf16>
    %cst = arith.constant dense<0.000000e+00> : vector<128x16xf32>
    %2 = tpu.matmul %0, %1, %cst {dimension_numbers = #tpu.dot_dimension_numbers<[1], [0], [0], [1], [0, 0, 1, 1], [], []>} : vector<128x144xbf16>, vector<144x16xbf16>, vector<128x16xf32> -> vector<128x16xf32>
    %c0_3 = arith.constant 0 : index
    %c0_4 = arith.constant 0 : index
    %3 = vector.load %arg4[%c0_3, %c0_4] : memref<1x16xf32, #tpu.memory_space<vmem>>, vector<1x16xf32>
    %4 = vector.broadcast %3 : vector<1x16xf32> to vector<128x16xf32>
    %5 = arith.mulf %2, %4 : vector<128x16xf32>
    %c0_5 = arith.constant 0 : index
    %c0_6 = arith.constant 0 : index
    %6 = vector.load %arg5[%c0_5, %c0_6] : memref<1x16xf32, #tpu.memory_space<vmem>>, vector<1x16xf32>
    %7 = vector.broadcast %6 : vector<1x16xf32> to vector<128x16xf32>
    %8 = arith.addf %5, %7 : vector<128x16xf32>
    %cst_7 = arith.constant 0.000000e+00 : f32
    %9 = vector.broadcast %cst_7 : f32 to vector<128x16xf32>
    %10 = arith.maximumf %8, %9 : vector<128x16xf32>
    %11 = arith.truncf %10 : vector<128x16xf32> to vector<128x16xbf16>
    %c0_8 = arith.constant 0 : index
    %c0_9 = arith.constant 0 : index
    %12 = vector.load %arg6[%c0_8, %c0_9] : memref<128x16xbf16, #tpu.memory_space<vmem>>, vector<128x16xbf16>
    tpu.vector_store %arg6[%c0_8, %c0_9], %11 {strides = array<i32>} : memref<128x16xbf16, #tpu.memory_space<vmem>>, vector<128x16xbf16>,
    return
  }
  func.func @transform_0(%arg0: i32, %arg1: i32) -> (i32, i32) {
    %c0_i32 = arith.constant 0 : i32
    %c0_i32_0 = arith.constant 0 : i32
    return %arg0, %c0_i32 : i32, i32
  }
  func.func @transform_1(%arg0: i32, %arg1: i32) -> (i32, i32) {
    %c0_i32 = arith.constant 0 : i32
    %c0_i32_0 = arith.constant 0 : i32
    return %c0_i32, %arg1 : i32, i32
  }
  func.func @transform_2(%arg0: i32, %arg1: i32) -> (i32, i32) {
    %c0_i32 = arith.constant 0 : i32
    %c0_i32_0 = arith.constant 0 : i32
    return %c0_i32, %arg1 : i32, i32
  }
  func.func @transform_3(%arg0: i32, %arg1: i32) -> (i32, i32) {
    %c0_i32 = arith.constant 0 : i32
    %c0_i32_0 = arith.constant 0 : i32
    return %c0_i32, %arg1 : i32, i32
  }
  func.func @transform_4(%arg0: i32, %arg1: i32) -> (i32, i32) {
    %c0_i32 = arith.constant 0 : i32
    return %arg0, %arg1 : i32, i32
  }
}

module attributes {stable_mosaic.version = 11 : i64} {
  func.func @_fused_matmul_kernel(%arg0: i32, %arg1: i32, %arg2: memref<128x16xbf16, #tpu.memory_space<vmem>>, %arg3: memref<16x21xbf16, #tpu.memory_space<vmem>>, %arg4: memref<1x21xf32, #tpu.memory_space<vmem>>, %arg5: memref<1x21xf32, #tpu.memory_space<vmem>>, %arg6: memref<128x21xf32, #tpu.memory_space<vmem>>) attributes {dimension_semantics = [#tpu.dimension_semantics<parallel>, #tpu.dimension_semantics<parallel>], iteration_bounds = array<i64: 1, 1>, scalar_prefetch = 0 : i64, scratch_operands = 0 : i64, tpu.core_type = #tpu.core_type<tc>, window_params = [{transform_indices = @transform_0, window_bounds = array<i64: 128, 16>}, {transform_indices = @transform_1, window_bounds = array<i64: 16, 21>}, {transform_indices = @transform_2, window_bounds = array<i64: 1, 21>}, {transform_indices = @transform_3, window_bounds = array<i64: 1, 21>}, {transform_indices = @transform_4, window_bounds = array<i64: 128, 21>}]} {
    %c0 = arith.constant 0 : index
    %c0_0 = arith.constant 0 : index
    %0 = vector.load %arg2[%c0, %c0_0] : memref<128x16xbf16, #tpu.memory_space<vmem>>, vector<128x16xbf16>
    %c0_1 = arith.constant 0 : index
    %c0_2 = arith.constant 0 : index
    %1 = vector.load %arg3[%c0_1, %c0_2] : memref<16x21xbf16, #tpu.memory_space<vmem>>, vector<16x21xbf16>
    %cst = arith.constant dense<0.000000e+00> : vector<128x21xf32>
    %2 = tpu.matmul %0, %1, %cst {dimension_numbers = #tpu.dot_dimension_numbers<[1], [0], [0], [1], [0, 0, 1, 1], [], []>} : vector<128x16xbf16>, vector<16x21xbf16>, vector<128x21xf32> -> vector<128x21xf32>
    %c0_3 = arith.constant 0 : index
    %c0_4 = arith.constant 0 : index
    %3 = vector.load %arg4[%c0_3, %c0_4] : memref<1x21xf32, #tpu.memory_space<vmem>>, vector<1x21xf32>
    %4 = vector.broadcast %3 : vector<1x21xf32> to vector<128x21xf32>
    %5 = arith.mulf %2, %4 : vector<128x21xf32>
    %c0_5 = arith.constant 0 : index
    %c0_6 = arith.constant 0 : index
    %6 = vector.load %arg5[%c0_5, %c0_6] : memref<1x21xf32, #tpu.memory_space<vmem>>, vector<1x21xf32>
    %7 = vector.broadcast %6 : vector<1x21xf32> to vector<128x21xf32>
    %8 = arith.addf %5, %7 : vector<128x21xf32>
    %c0_7 = arith.constant 0 : index
    %c0_8 = arith.constant 0 : index
    %9 = vector.load %arg6[%c0_7, %c0_8] : memref<128x21xf32, #tpu.memory_space<vmem>>, vector<128x21xf32>
    tpu.vector_store %arg6[%c0_7, %c0_8], %8 {strides = array<i32>} : memref<128x21xf32, #tpu.memory_space<vmem>>, vector<128x21xf32>,
    return
  }
  func.func @transform_0(%arg0: i32, %arg1: i32) -> (i32, i32) {
    %c0_i32 = arith.constant 0 : i32
    %c0_i32_0 = arith.constant 0 : i32
    return %arg0, %c0_i32 : i32, i32
  }
  func.func @transform_1(%arg0: i32, %arg1: i32) -> (i32, i32) {
    %c0_i32 = arith.constant 0 : i32
    %c0_i32_0 = arith.constant 0 : i32
    return %c0_i32, %arg1 : i32, i32
  }
  func.func @transform_2(%arg0: i32, %arg1: i32) -> (i32, i32) {
    %c0_i32 = arith.constant 0 : i32
    %c0_i32_0 = arith.constant 0 : i32
    return %c0_i32, %arg1 : i32, i32
  }
  func.func @transform_3(%arg0: i32, %arg1: i32) -> (i32, i32) {
    %c0_i32 = arith.constant 0 : i32
    %c0_i32_0 = arith.constant 0 : i32
    return %c0_i32, %arg1 : i32, i32
  }
  func.func @transform_4(%arg0: i32, %arg1: i32) -> (i32, i32) {
    %c0_i32 = arith.constant 0 : i32
    return %arg0, %arg1 : i32, i32
  }
}

module attributes {stable_mosaic.version = 11 : i64} {
  func.func @_resize_kernel(%arg0: i32, %arg1: memref<48x64xf32, #tpu.memory_space<vmem>>, %arg2: memref<64x1024xf32, #tpu.memory_space<vmem>>, %arg3: memref<48x1024xf32, #tpu.memory_space<vmem>>) attributes {dimension_semantics = [#tpu.dimension_semantics<parallel>], iteration_bounds = array<i64: 1>, scalar_prefetch = 0 : i64, scratch_operands = 0 : i64, tpu.core_type = #tpu.core_type<tc>, window_params = [{transform_indices = @transform_0, window_bounds = array<i64: 48, 64>}, {pipeline_mode = #tpu.pipeline_mode<synchronous>, transform_indices = @transform_1, window_bounds = array<i64: 64, 1024>}, {transform_indices = @transform_2, window_bounds = array<i64: 48, 1024>}]} {
    %c0 = arith.constant 0 : index
    %c0_0 = arith.constant 0 : index
    %0 = vector.load %arg1[%c0, %c0_0] : memref<48x64xf32, #tpu.memory_space<vmem>>, vector<48x64xf32>
    %c0_1 = arith.constant 0 : index
    %c0_2 = arith.constant 0 : index
    %1 = vector.load %arg2[%c0_1, %c0_2] : memref<64x1024xf32, #tpu.memory_space<vmem>>, vector<64x1024xf32>
    %cst = arith.constant dense<0.000000e+00> : vector<48x1024xf32>
    %2 = tpu.matmul %0, %1, %cst {dimension_numbers = #tpu.dot_dimension_numbers<[1], [0], [0], [1], [0, 0, 1, 1], [], []>} : vector<48x64xf32>, vector<64x1024xf32>, vector<48x1024xf32> -> vector<48x1024xf32>
    %c0_3 = arith.constant 0 : index
    %c0_4 = arith.constant 0 : index
    %3 = vector.load %arg3[%c0_3, %c0_4] : memref<48x1024xf32, #tpu.memory_space<vmem>>, vector<48x1024xf32>
    tpu.vector_store %arg3[%c0_3, %c0_4], %2 {strides = array<i32>} : memref<48x1024xf32, #tpu.memory_space<vmem>>, vector<48x1024xf32>,
    return
  }
  func.func @transform_0(%arg0: i32) -> (i32, i32) {
    %c0_i32 = arith.constant 0 : i32
    %c0_i32_0 = arith.constant 0 : i32
    return %arg0, %c0_i32 : i32, i32
  }
  func.func @transform_1(%arg0: i32) -> (i32, i32) {
    %c0_i32 = arith.constant 0 : i32
    %c0_i32_0 = arith.constant 0 : i32
    %c0_i32_1 = arith.constant 0 : i32
    return %c0_i32, %c0_i32_0 : i32, i32
  }
  func.func @transform_2(%arg0: i32) -> (i32, i32) {
    %c0_i32 = arith.constant 0 : i32
    %c0_i32_0 = arith.constant 0 : i32
    return %arg0, %c0_i32 : i32, i32
  }
}

</mosaic_0001>

<llo_original>
// kernel: deeplab_forward.17
$region0: #{deeplab_forward.17}
  #allocation0 [shape = 'u32[]', space=smem, size = 0x4, offset = 0x4, fixed_abs, tag = 'smem constant byte address 0x4 - core index']
  #allocation1 [shape = 'u32[144,128]{1,0:T(1,128)}', space=vmem, size = 0x12000, scoped, tag = 'internal scratch']
  %s0 = inlined_call_operand.vmem [shape: bf16[128,72], index: 0, kind: input, shape index: {}]
  %s1 = inlined_call_operand.vmem [shape: bf16[72,16], index: 1, kind: input, shape index: {}]
  %s2 = inlined_call_operand.vmem [shape: f32[1,16], index: 2, kind: input, shape index: {}]
  %s3 = inlined_call_operand.vmem [shape: f32[1,16], index: 3, kind: input, shape index: {}]
  %s4 = inlined_call_operand.vmem [shape: bf16[128,16], index: 4, kind: output, shape index: {}]
  %s5 = sld [smem:[#allocation0]]
  $region26: #{deeplab_forward.17} parent=0
    _
  %s7 = ssub.s32 1, %s5
  %s8 = scalar_select 0, %s7, %s5
  // Predicated region
  $region2: #{deeplab_forward.17} parent=0 // pred_check
    _
  $region3: #{deeplab_forward.17} parent=0 // pred_check_branch
    %10 = sbr.rel (0) target = $region5
  $region4: #{deeplab_forward.17} parent=0 // pred_region
    _
  $region5: #{deeplab_forward.17} parent=0 // pred_fallthru
    _
  // Predicated region
  $region6: #{deeplab_forward.17} parent=0 // pred_check
    _
  $region7: #{deeplab_forward.17} parent=0 // pred_check_branch
    %12 = sbr.rel (0) target = $region9
  $region8: #{deeplab_forward.17} parent=0 // pred_region
    _
  $region9: #{deeplab_forward.17} parent=0 // pred_fallthru
    _
  // Predicated region
  $region10: #{deeplab_forward.17} parent=0 // pred_check
    _
  $region11: #{deeplab_forward.17} parent=0 // pred_check_branch
    %14 = sbr.rel (0) target = $region13
  $region12: #{deeplab_forward.17} parent=0 // pred_region
    _
  $region13: #{deeplab_forward.17} parent=0 // pred_fallthru
    _
  // Predicated region
  $region14: #{deeplab_forward.17} parent=0 // pred_check
    _
  $region15: #{deeplab_forward.17} parent=0 // pred_check_branch
    %16 = sbr.rel (0) target = $region17
  $region16: #{deeplab_forward.17} parent=0 // pred_region
    _
  $region17: #{deeplab_forward.17} parent=0 // pred_fallthru
    _
  %v18 = vld [vmem:[%s0] sm:$0xf]
  %v19 = vld [vmem:[%s0 + $0x4] sm:$0xf]
  %v20 = vld [vmem:[%s0 + $0x8] sm:$0xf]
  %v21 = vld [vmem:[%s0 + $0xc] sm:$0xf]
  %v22 = vld [vmem:[%s0 + $0x10] sm:$0xf]
  %v23 = vld [vmem:[%s0 + $0x14] sm:$0xf]
  %v24 = vld [vmem:[%s0 + $0x18] sm:$0xf]
  %v25 = vld [vmem:[%s0 + $0x1c] sm:$0xf]
  %v26 = vld [vmem:[%s0 + $0x20] sm:$0xf]
  %v27 = vld [vmem:[%s0 + $0x24] sm:$0xf]
  %v28 = vld [vmem:[%s0 + $0x28] sm:$0xf]
  %v29 = vld [vmem:[%s0 + $0x2c] sm:$0xf]
  %v30 = vld [vmem:[%s0 + $0x30] sm:$0xf]
  %v31 = vld [vmem:[%s0 + $0x34] sm:$0xf]
  %v32 = vld [vmem:[%s0 + $0x38] sm:$0xf]
  %v33 = vld [vmem:[%s0 + $0x3c] sm:$0xf]
  %v34 = vld [vmem:[%s1] sm:$0xf]
  %v35 = vld [vmem:[%s1 + $0x4] sm:$0xf]
  %v36 = vld [vmem:[%s1 + $0x8] sm:$0xf]
  %v37 = vld [vmem:[%s1 + $0xc] sm:$0xf]
  %v38 = vld [vmem:[%s1 + $0x10] sm:$0xf]
  %v39 = vld [vmem:[%s1 + $0x14] sm:$0xf]
  %v40 = vld [vmem:[%s1 + $0x18] sm:$0xf]
  %v41 = vld [vmem:[%s1 + $0x1c] sm:$0xf]
  %v42 = vld [vmem:[%s1 + $0x20] sm:$0xf]
  %v59 = vunpack.c.l.b16 %v18
  %v60 = vunpack.c.l.b16 %v19
  %v61 = vunpack.c.l.b16 %v20
  %v62 = vunpack.c.l.b16 %v21
  %v63 = vunpack.c.l.b16 %v22
  %v64 = vunpack.c.l.b16 %v23
  %v65 = vunpack.c.l.b16 %v24
  %v66 = vunpack.c.l.b16 %v25
  %v67 = vunpack.c.l.b16 %v26
  %v68 = vunpack.c.l.b16 %v27
  %v69 = vunpack.c.l.b16 %v28
  %v70 = vunpack.c.l.b16 %v29
  %v71 = vunpack.c.l.b16 %v30
  %v72 = vunpack.c.l.b16 %v31
  %v73 = vunpack.c.l.b16 %v32
  %v74 = vunpack.c.l.b16 %v33
  %v75 = vpack.c.b16 %v60, %v59
  %v76 = vpack.c.b16 %v62, %v61
  %v77 = vpack.c.b16 %v64, %v63
  %v78 = vpack.c.b16 %v66, %v65
  %v79 = vpack.c.b16 %v68, %v67
  %v80 = vpack.c.b16 %v70, %v69
  %v81 = vpack.c.b16 %v72, %v71
  %v82 = vpack.c.b16 %v74, %v73
  %v92 = vunpack.c.l.b16 %v34
  %v93 = vunpack.c.l.b16 %v35
  %v94 = vunpack.c.l.b16 %v36
  %v95 = vunpack.c.l.b16 %v37
  %v96 = vunpack.c.l.b16 %v38
  %v97 = vunpack.c.l.b16 %v39
  %v98 = vunpack.c.l.b16 %v40
  %v99 = vunpack.c.l.b16 %v41
  %v100 = vunpack.c.l.b16 %v42
  %v101 = vpack.c.b16 %v93, %v92
  %v102 = vpack.c.b16 %v95, %v94
  %v103 = vpack.c.b16 %v97, %v96
  %v104 = vpack.c.b16 %v99, %v98
  %v105 = vpack.c.b16 %v100, %v100
  %vm110 = vcmask 588800
  %v112 = vsel %vm110, %v75, 0
  %v115 = vsel %vm110, %v76, 0
  %v118 = vsel %vm110, %v77, 0
  %v121 = vsel %vm110, %v78, 0
  %v124 = vsel %vm110, %v79, 0
  %v127 = vsel %vm110, %v80, 0
  %v130 = vsel %vm110, %v81, 0
  %v133 = vsel %vm110, %v82, 0
  %vm135 = vcmask 1043456
  %v137 = vsel %vm135, %v105, 0
  %139 = vmatprep.subr.bf16.mxu0 0
  %140 = vmatpush1.bf16.msra.mxu0 %v101
  %141 = vmatprep.subr.bf16.mxu0 0
  %142 = vmatpush1.bf16.msra.mxu0 %v102
  %143 = vmatprep.subr.bf16.mxu0 0
  %144 = vmatpush1.bf16.msra.mxu0 %v103
  %145 = vmatprep.subr.bf16.mxu0 0
  %146 = vmatpush1.bf16.msra.mxu0 %v104
  %147 = vmatprep.subr.bf16.mxu0 0
  %148 = vmatpush1.bf16.msra.mxu0 %v137
  %149 = vmatprep.subr.bf16.mxu0 0
  %150 = vmatpush1.bf16.msra.mxu0 0
  %151 = vmatprep.subr.bf16.mxu0 0
  %152 = vmatpush1.bf16.msra.mxu0 0
  %153 = vmatprep.subr.bf16.mxu0 0
  %154 = vmatpush1.bf16.msra.mxu0 0
  %155 = vmatprep.subr.bf16.mxu0 0
  %156 = vmatpush1.bf16.msra.mxu0 0
  %157 = vmatprep.subr.bf16.mxu0 0
  %158 = vmatpush1.bf16.msra.mxu0 0
  %159 = vmatprep.subr.bf16.mxu0 0
  %160 = vmatpush1.bf16.msra.mxu0 0
  %161 = vmatprep.subr.bf16.mxu0 0
  %162 = vmatpush1.bf16.msra.mxu0 0
  %163 = vmatprep.subr.bf16.mxu0 0
  %164 = vmatpush1.bf16.msra.mxu0 0
  %165 = vmatprep.subr.bf16.mxu0 0
  %166 = vmatpush1.bf16.msra.mxu0 0
  %167 = vmatprep.subr.bf16.mxu0 0
  %168 = vmatpush1.bf16.msra.mxu0 0
  %169 = vmatprep.subr.bf16.mxu0 0
  %170 = vmatpush1.bf16.msra.mxu0 0
  %171 = vmatprep.mubr.bf16.mxu0 0
  %172 = vmatmul.mubr.bf16.gmra.mrb[0].mxu0 %v112
  %v173 = vpop.f32.mrb[0].mxu0
  %v174 = vadd.f32 0.0, %v173
  %v175 = vpop.f32.mrb[0].mxu0
  %v176 = vpop.f32.mrb[0].mxu0
  %v177 = vadd.f32 0.0, %v176
  %v178 = vpop.f32.mrb[0].mxu0
  %179 = vmatprep.mubr.bf16.mxu0 0
  %180 = vmatmul.mubr.bf16.gmra.mrb[0].mxu0 %v115
  %v181 = vpop.f32.mrb[0].mxu0
  %v182 = vadd.f32 0.0, %v181
  %v183 = vpop.f32.mrb[0].mxu0
  %v184 = vpop.f32.mrb[0].mxu0
  %v185 = vadd.f32 0.0, %v184
  %v186 = vpop.f32.mrb[0].mxu0
  %187 = vmatprep.mubr.bf16.mxu0 0
  %188 = vmatmul.mubr.bf16.gmra.mrb[0].mxu0 %v118
  %v189 = vpop.f32.mrb[0].mxu0
  %v190 = vadd.f32 0.0, %v189
  %v191 = vpop.f32.mrb[0].mxu0
  %v192 = vpop.f32.mrb[0].mxu0
  %v193 = vadd.f32 0.0, %v192
  %v194 = vpop.f32.mrb[0].mxu0
  %195 = vmatprep.mubr.bf16.mxu0 0
  %196 = vmatmul.mubr.bf16.gmra.mrb[0].mxu0 %v121
  %v197 = vpop.f32.mrb[0].mxu0
  %v198 = vadd.f32 0.0, %v197
  %v199 = vpop.f32.mrb[0].mxu0
  %v200 = vpop.f32.mrb[0].mxu0
  %v201 = vadd.f32 0.0, %v200
  %v202 = vpop.f32.mrb[0].mxu0
  %203 = vmatprep.mubr.bf16.mxu0 0
  %204 = vmatmul.mubr.bf16.gmra.mrb[0].mxu0 %v124
  %v205 = vpop.f32.mrb[0].mxu0
  %v206 = vadd.f32 0.0, %v205
  %v207 = vpop.f32.mrb[0].mxu0
  %v208 = vpop.f32.mrb[0].mxu0
  %v209 = vadd.f32 0.0, %v208
  %v210 = vpop.f32.mrb[0].mxu0
  %211 = vmatprep.mubr.bf16.mxu0 0
  %212 = vmatmul.mubr.bf16.gmra.mrb[0].mxu0 %v127
  %v213 = vpop.f32.mrb[0].mxu0
  %v214 = vadd.f32 0.0, %v213
  %v215 = vpop.f32.mrb[0].mxu0
  %v216 = vpop.f32.mrb[0].mxu0
  %v217 = vadd.f32 0.0, %v216
  %v218 = vpop.f32.mrb[0].mxu0
  %219 = vmatprep.mubr.bf16.mxu0 0
  %220 = vmatmul.mubr.bf16.gmra.mrb[0].mxu0 %v130
  %v221 = vpop.f32.mrb[0].mxu0
  %v222 = vadd.f32 0.0, %v221
  %v223 = vpop.f32.mrb[0].mxu0
  %v224 = vpop.f32.mrb[0].mxu0
  %v225 = vadd.f32 0.0, %v224
  %v226 = vpop.f32.mrb[0].mxu0
  %227 = vmatprep.mubr.bf16.mxu0 0
  %228 = vmatmul.mubr.bf16.gmra.mrb[0].mxu0 %v133
  %v229 = vpop.f32.mrb[0].mxu0
  %v230 = vadd.f32 0.0, %v229
  %v231 = vpop.f32.mrb[0].mxu0
  %v232 = vpop.f32.mrb[0].mxu0
  %v233 = vadd.f32 0.0, %v232
  %v234 = vpop.f32.mrb[0].mxu0
  %235 = vdwg.mxu0
  %v236 = vld [vmem:[%s2] sm:$0x1]
  %v238 = vlaneseq
  %v239 = vshrl.u32 %v238, 7
  %v240 = vsub.s32 0, %v239
  %v241 = vrot.slane %v236, %v240
  %v243 = vmul.f32 %v174, %v241
  %v244 = vmul.f32 %v177, %v241
  %v245 = vmul.f32 %v182, %v241
  %v246 = vmul.f32 %v185, %v241
  %v247 = vmul.f32 %v190, %v241
  %v248 = vmul.f32 %v193, %v241
  %v249 = vmul.f32 %v198, %v241
  %v250 = vmul.f32 %v201, %v241
  %v251 = vmul.f32 %v206, %v241
  %v252 = vmul.f32 %v209, %v241
  %v253 = vmul.f32 %v214, %v241
  %v254 = vmul.f32 %v217, %v241
  %v255 = vmul.f32 %v222, %v241
  %v256 = vmul.f32 %v225, %v241
  %v257 = vmul.f32 %v230, %v241
  %v258 = vmul.f32 %v233, %v241
  %v259 = vld [vmem:[%s3] sm:$0x1]
  %v261 = vlaneseq
  %v262 = vshrl.u32 %v261, 7
  %v263 = vsub.s32 0, %v262
  %v264 = vrot.slane %v259, %v263
  %v266 = vadd.f32 %v243, %v264
  %v267 = vadd.f32 %v244, %v264
  %v268 = vadd.f32 %v245, %v264
  %v269 = vadd.f32 %v246, %v264
  %v270 = vadd.f32 %v247, %v264
  %v271 = vadd.f32 %v248, %v264
  %v272 = vadd.f32 %v249, %v264
  %v273 = vadd.f32 %v250, %v264
  %v274 = vadd.f32 %v251, %v264
  %v275 = vadd.f32 %v252, %v264
  %v276 = vadd.f32 %v253, %v264
  %v277 = vadd.f32 %v254, %v264
  %v278 = vadd.f32 %v255, %v264
  %v279 = vadd.f32 %v256, %v264
  %v280 = vadd.f32 %v257, %v264
  %v281 = vadd.f32 %v258, %v264
  %v282 = vmax.f32 %v266, 0.0
  %v283 = vmax.f32 %v267, 0.0
  %v284 = vmax.f32 %v268, 0.0
  %v285 = vmax.f32 %v269, 0.0
  %v286 = vmax.f32 %v270, 0.0
  %v287 = vmax.f32 %v271, 0.0
  %v288 = vmax.f32 %v272, 0.0
  %v289 = vmax.f32 %v273, 0.0
  %v290 = vmax.f32 %v274, 0.0
  %v291 = vmax.f32 %v275, 0.0
  %v292 = vmax.f32 %v276, 0.0
  %v293 = vmax.f32 %v277, 0.0
  %v294 = vmax.f32 %v278, 0.0
  %v295 = vmax.f32 %v279, 0.0
  %v296 = vmax.f32 %v280, 0.0
  %v297 = vmax.f32 %v281, 0.0
  %v298 = vpack.c.bf16 %v283, %v282
  %v299 = vpack.c.bf16 %v285, %v284
  %v300 = vpack.c.bf16 %v287, %v286
  %v301 = vpack.c.bf16 %v289, %v288
  %v302 = vpack.c.bf16 %v291, %v290
  %v303 = vpack.c.bf16 %v293, %v292
  %v304 = vpack.c.bf16 %v295, %v294
  %v305 = vpack.c.bf16 %v297, %v296
  %v314 = vunpack.c.l.b16 %v298
  %v315 = vunpack.c.h.b16 %v298
  %v316 = vunpack.c.l.b16 %v299
  %v317 = vunpack.c.h.b16 %v299
  %v318 = vunpack.c.l.b16 %v300
  %v319 = vunpack.c.h.b16 %v300
  %v320 = vunpack.c.l.b16 %v301
  %v321 = vunpack.c.h.b16 %v301
  %v322 = vunpack.c.l.b16 %v302
  %v323 = vunpack.c.h.b16 %v302
  %v324 = vunpack.c.l.b16 %v303
  %v325 = vunpack.c.h.b16 %v303
  %v326 = vunpack.c.l.b16 %v304
  %v327 = vunpack.c.h.b16 %v304
  %v328 = vunpack.c.l.b16 %v305
  %v329 = vunpack.c.h.b16 %v305
  %v330 = vpack.c.b16 %v314, %v314
  %v331 = vpack.c.b16 %v315, %v315
  %v332 = vpack.c.b16 %v316, %v316
  %v333 = vpack.c.b16 %v317, %v317
  %v334 = vpack.c.b16 %v318, %v318
  %v335 = vpack.c.b16 %v319, %v319
  %v336 = vpack.c.b16 %v320, %v320
  %v337 = vpack.c.b16 %v321, %v321
  %v338 = vpack.c.b16 %v322, %v322
  %v339 = vpack.c.b16 %v323, %v323
  %v340 = vpack.c.b16 %v324, %v324
  %v341 = vpack.c.b16 %v325, %v325
  %v342 = vpack.c.b16 %v326, %v326
  %v343 = vpack.c.b16 %v327, %v327
  %v344 = vpack.c.b16 %v328, %v328
  %v345 = vpack.c.b16 %v329, %v329
  %vm362 = vcmask 125952
  %363 = vst.msk [vmem:[%s4] sm:$0xf] %vm362, %v330
  %364 = vst.msk [vmem:[%s4 + $0x4] sm:$0xf] %vm362, %v331
  %365 = vst.msk [vmem:[%s4 + $0x8] sm:$0xf] %vm362, %v332
  %366 = vst.msk [vmem:[%s4 + $0xc] sm:$0xf] %vm362, %v333
  %367 = vst.msk [vmem:[%s4 + $0x10] sm:$0xf] %vm362, %v334
  %368 = vst.msk [vmem:[%s4 + $0x14] sm:$0xf] %vm362, %v335
  %369 = vst.msk [vmem:[%s4 + $0x18] sm:$0xf] %vm362, %v336
  %370 = vst.msk [vmem:[%s4 + $0x1c] sm:$0xf] %vm362, %v337
  %371 = vst.msk [vmem:[%s4 + $0x20] sm:$0xf] %vm362, %v338
  %372 = vst.msk [vmem:[%s4 + $0x24] sm:$0xf] %vm362, %v339
  %373 = vst.msk [vmem:[%s4 + $0x28] sm:$0xf] %vm362, %v340
  %374 = vst.msk [vmem:[%s4 + $0x2c] sm:$0xf] %vm362, %v341
  %375 = vst.msk [vmem:[%s4 + $0x30] sm:$0xf] %vm362, %v342
  %376 = vst.msk [vmem:[%s4 + $0x34] sm:$0xf] %vm362, %v343
  %377 = vst.msk [vmem:[%s4 + $0x38] sm:$0xf] %vm362, %v344
  %378 = vst.msk [vmem:[%s4 + $0x3c] sm:$0xf] %vm362, %v345
  // Predicated region
  $region18: #{deeplab_forward.17} parent=0 // pred_check
    _
  $region19: #{deeplab_forward.17} parent=0 // pred_check_branch
    %380 = sbr.rel (0) target = $region21
  $region20: #{deeplab_forward.17} parent=0 // pred_region
    _
  $region21: #{deeplab_forward.17} parent=0 // pred_fallthru
    _
  // Predicated region
  $region22: #{deeplab_forward.17} parent=0 // pred_check
    _
  $region23: #{deeplab_forward.17} parent=0 // pred_check_branch
    %382 = sbr.rel (0) target = $region25
  $region24: #{deeplab_forward.17} parent=0 // pred_region
    _
  $region25: #{deeplab_forward.17} parent=0 // pred_fallthru
    _

// kernel: deeplab_forward.16
$region0: #{deeplab_forward.16}
  #allocation0 [shape = 'u32[]', space=smem, size = 0x4, offset = 0x4, fixed_abs, tag = 'smem constant byte address 0x4 - core index']
  #allocation1 [shape = 'u32[144,128]{1,0:T(1,128)}', space=vmem, size = 0x12000, scoped, tag = 'internal scratch']
  %s0 = inlined_call_operand.vmem [shape: bf16[512,27], index: 0, kind: input, shape index: {}]
  %s1 = inlined_call_operand.vmem [shape: bf16[27,8], index: 1, kind: input, shape index: {}]
  %s2 = inlined_call_operand.vmem [shape: f32[1,8], index: 2, kind: input, shape index: {}]
  %s3 = inlined_call_operand.vmem [shape: f32[1,8], index: 3, kind: input, shape index: {}]
  %s4 = inlined_call_operand.vmem [shape: bf16[512,8], index: 4, kind: output, shape index: {}]
  %s5 = sld [smem:[#allocation0]]
  $region26: #{deeplab_forward.16} parent=0
    _
  %s7 = ssub.s32 1, %s5
  %s8 = scalar_select 0, %s7, %s5
  // Predicated region
  $region2: #{deeplab_forward.16} parent=0 // pred_check
    _
  $region3: #{deeplab_forward.16} parent=0 // pred_check_branch
    %10 = sbr.rel (0) target = $region5
  $region4: #{deeplab_forward.16} parent=0 // pred_region
    _
  $region5: #{deeplab_forward.16} parent=0 // pred_fallthru
    _
  // Predicated region
  $region6: #{deeplab_forward.16} parent=0 // pred_check
    _
  $region7: #{deeplab_forward.16} parent=0 // pred_check_branch
    %12 = sbr.rel (0) target = $region9
  $region8: #{deeplab_forward.16} parent=0 // pred_region
    _
  $region9: #{deeplab_forward.16} parent=0 // pred_fallthru
    _
  // Predicated region
  $region10: #{deeplab_forward.16} parent=0 // pred_check
    _
  $region11: #{deeplab_forward.16} parent=0 // pred_check_branch
    %14 = sbr.rel (0) target = $region13
  $region12: #{deeplab_forward.16} parent=0 // pred_region
    _
  $region13: #{deeplab_forward.16} parent=0 // pred_fallthru
    _
  // Predicated region
  $region14: #{deeplab_forward.16} parent=0 // pred_check
    _
  $region15: #{deeplab_forward.16} parent=0 // pred_check_branch
    %16 = sbr.rel (0) target = $region17
  $region16: #{deeplab_forward.16} parent=0 // pred_region
    _
  $region17: #{deeplab_forward.16} parent=0 // pred_fallthru
    _
  %v18 = vld [vmem:[%s0] sm:$0xf]
  %v19 = vld [vmem:[%s0 + $0x4] sm:$0xf]
  %v20 = vld [vmem:[%s0 + $0x8] sm:$0xf]
  %v21 = vld [vmem:[%s0 + $0xc] sm:$0xf]
  %v22 = vld [vmem:[%s0 + $0x10] sm:$0xf]
  %v23 = vld [vmem:[%s0 + $0x14] sm:$0xf]
  %v24 = vld [vmem:[%s0 + $0x18] sm:$0xf]
  %v25 = vld [vmem:[%s0 + $0x1c] sm:$0xf]
  %v26 = vld [vmem:[%s0 + $0x20] sm:$0xf]
  %v27 = vld [vmem:[%s0 + $0x24] sm:$0xf]
  %v28 = vld [vmem:[%s0 + $0x28] sm:$0xf]
  %v29 = vld [vmem:[%s0 + $0x2c] sm:$0xf]
  %v30 = vld [vmem:[%s0 + $0x30] sm:$0xf]
  %v31 = vld [vmem:[%s0 + $0x34] sm:$0xf]
  %v32 = vld [vmem:[%s0 + $0x38] sm:$0xf]
  %v33 = vld [vmem:[%s0 + $0x3c] sm:$0xf]
  %v34 = vld [vmem:[%s0 + $0x40] sm:$0xf]
  %v35 = vld [vmem:[%s0 + $0x44] sm:$0xf]
  %v36 = vld [vmem:[%s0 + $0x48] sm:$0xf]
  %v37 = vld [vmem:[%s0 + $0x4c] sm:$0xf]
  %v38 = vld [vmem:[%s0 + $0x50] sm:$0xf]
  %v39 = vld [vmem:[%s0 + $0x54] sm:$0xf]
  %v40 = vld [vmem:[%s0 + $0x58] sm:$0xf]
  %v41 = vld [vmem:[%s0 + $0x5c] sm:$0xf]
  %v42 = vld [vmem:[%s0 + $0x60] sm:$0xf]
  %v43 = vld [vmem:[%s0 + $0x64] sm:$0xf]
  %v44 = vld [vmem:[%s0 + $0x68] sm:$0xf]
  %v45 = vld [vmem:[%s0 + $0x6c] sm:$0xf]
  %v46 = vld [vmem:[%s0 + $0x70] sm:$0xf]
  %v47 = vld [vmem:[%s0 + $0x74] sm:$0xf]
  %v48 = vld [vmem:[%s0 + $0x78] sm:$0xf]
  %v49 = vld [vmem:[%s0 + $0x7c] sm:$0xf]
  %v50 = vld [vmem:[%s0 + $0x80] sm:$0xf]
  %v51 = vld [vmem:[%s0 + $0x84] sm:$0xf]
  %v52 = vld [vmem:[%s0 + $0x88] sm:$0xf]
  %v53 = vld [vmem:[%s0 + $0x8c] sm:$0xf]
  %v54 = vld [vmem:[%s0 + $0x90] sm:$0xf]
  %v55 = vld [vmem:[%s0 + $0x94] sm:$0xf]
  %v56 = vld [vmem:[%s0 + $0x98] sm:$0xf]
  %v57 = vld [vmem:[%s0 + $0x9c] sm:$0xf]
  %v58 = vld [vmem:[%s0 + $0xa0] sm:$0xf]
  %v59 = vld [vmem:[%s0 + $0xa4] sm:$0xf]
  %v60 = vld [vmem:[%s0 + $0xa8] sm:$0xf]
  %v61 = vld [vmem:[%s0 + $0xac] sm:$0xf]
  %v62 = vld [vmem:[%s0 + $0xb0] sm:$0xf]
  %v63 = vld [vmem:[%s0 + $0xb4] sm:$0xf]
  %v64 = vld [vmem:[%s0 + $0xb8] sm:$0xf]
  %v65 = vld [vmem:[%s0 + $0xbc] sm:$0xf]
  %v66 = vld [vmem:[%s0 + $0xc0] sm:$0xf]
  %v67 = vld [vmem:[%s0 + $0xc4] sm:$0xf]
  %v68 = vld [vmem:[%s0 + $0xc8] sm:$0xf]
  %v69 = vld [vmem:[%s0 + $0xcc] sm:$0xf]
  %v70 = vld [vmem:[%s0 + $0xd0] sm:$0xf]
  %v71 = vld [vmem:[%s0 + $0xd4] sm:$0xf]
  %v72 = vld [vmem:[%s0 + $0xd8] sm:$0xf]
  %v73 = vld [vmem:[%s0 + $0xdc] sm:$0xf]
  %v74 = vld [vmem:[%s0 + $0xe0] sm:$0xf]
  %v75 = vld [vmem:[%s0 + $0xe4] sm:$0xf]
  %v76 = vld [vmem:[%s0 + $0xe8] sm:$0xf]
  %v77 = vld [vmem:[%s0 + $0xec] sm:$0xf]
  %v78 = vld [vmem:[%s0 + $0xf0] sm:$0xf]
  %v79 = vld [vmem:[%s0 + $0xf4] sm:$0xf]
  %v80 = vld [vmem:[%s0 + $0xf8] sm:$0xf]
  %v81 = vld [vmem:[%s0 + $0xfc] sm:$0xf]
  %v82 = vld [vmem:[%s1] sm:$0xf]
  %v83 = vld [vmem:[%s1 + $0x4] sm:$0xf]
  %v84 = vld [vmem:[%s1 + $0x8] sm:$0xf]
  %v85 = vld [vmem:[%s1 + $0xc] sm:$0x3]
  %v150 = vunpack.c.l.b16 %v18
  %v151 = vunpack.c.l.b16 %v19
  %v152 = vunpack.c.l.b16 %v20
  %v153 = vunpack.c.l.b16 %v21
  %v154 = vunpack.c.l.b16 %v22
  %v155 = vunpack.c.l.b16 %v23
  %v156 = vunpack.c.l.b16 %v24
  %v157 = vunpack.c.l.b16 %v25
  %v158 = vunpack.c.l.b16 %v26
  %v159 = vunpack.c.l.b16 %v27
  %v160 = vunpack.c.l.b16 %v28
  %v161 = vunpack.c.l.b16 %v29
  %v162 = vunpack.c.l.b16 %v30
  %v163 = vunpack.c.l.b16 %v31
  %v164 = vunpack.c.l.b16 %v32
  %v165 = vunpack.c.l.b16 %v33
  %v166 = vunpack.c.l.b16 %v34
  %v167 = vunpack.c.l.b16 %v35
  %v168 = vunpack.c.l.b16 %v36
  %v169 = vunpack.c.l.b16 %v37
  %v170 = vunpack.c.l.b16 %v38
  %v171 = vunpack.c.l.b16 %v39
  %v172 = vunpack.c.l.b16 %v40
  %v173 = vunpack.c.l.b16 %v41
  %v174 = vunpack.c.l.b16 %v42
  %v175 = vunpack.c.l.b16 %v43
  %v176 = vunpack.c.l.b16 %v44
  %v177 = vunpack.c.l.b16 %v45
  %v178 = vunpack.c.l.b16 %v46
  %v179 = vunpack.c.l.b16 %v47
  %v180 = vunpack.c.l.b16 %v48
  %v181 = vunpack.c.l.b16 %v49
  %v182 = vunpack.c.l.b16 %v50
  %v183 = vunpack.c.l.b16 %v51
  %v184 = vunpack.c.l.b16 %v52
  %v185 = vunpack.c.l.b16 %v53
  %v186 = vunpack.c.l.b16 %v54
  %v187 = vunpack.c.l.b16 %v55
  %v188 = vunpack.c.l.b16 %v56
  %v189 = vunpack.c.l.b16 %v57
  %v190 = vunpack.c.l.b16 %v58
  %v191 = vunpack.c.l.b16 %v59
  %v192 = vunpack.c.l.b16 %v60
  %v193 = vunpack.c.l.b16 %v61
  %v194 = vunpack.c.l.b16 %v62
  %v195 = vunpack.c.l.b16 %v63
  %v196 = vunpack.c.l.b16 %v64
  %v197 = vunpack.c.l.b16 %v65
  %v198 = vunpack.c.l.b16 %v66
  %v199 = vunpack.c.l.b16 %v67
  %v200 = vunpack.c.l.b16 %v68
  %v201 = vunpack.c.l.b16 %v69
  %v202 = vunpack.c.l.b16 %v70
  %v203 = vunpack.c.l.b16 %v71
  %v204 = vunpack.c.l.b16 %v72
  %v205 = vunpack.c.l.b16 %v73
  %v206 = vunpack.c.l.b16 %v74
  %v207 = vunpack.c.l.b16 %v75
  %v208 = vunpack.c.l.b16 %v76
  %v209 = vunpack.c.l.b16 %v77
  %v210 = vunpack.c.l.b16 %v78
  %v211 = vunpack.c.l.b16 %v79
  %v212 = vunpack.c.l.b16 %v80
  %v213 = vunpack.c.l.b16 %v81
  %v214 = vpack.c.b16 %v151, %v150
  %v215 = vpack.c.b16 %v153, %v152
  %v216 = vpack.c.b16 %v155, %v154
  %v217 = vpack.c.b16 %v157, %v156
  %v218 = vpack.c.b16 %v159, %v158
  %v219 = vpack.c.b16 %v161, %v160
  %v220 = vpack.c.b16 %v163, %v162
  %v221 = vpack.c.b16 %v165, %v164
  %v222 = vpack.c.b16 %v167, %v166
  %v223 = vpack.c.b16 %v169, %v168
  %v224 = vpack.c.b16 %v171, %v170
  %v225 = vpack.c.b16 %v173, %v172
  %v226 = vpack.c.b16 %v175, %v174
  %v227 = vpack.c.b16 %v177, %v176
  %v228 = vpack.c.b16 %v179, %v178
  %v229 = vpack.c.b16 %v181, %v180
  %v230 = vpack.c.b16 %v183, %v182
  %v231 = vpack.c.b16 %v185, %v184
  %v232 = vpack.c.b16 %v187, %v186
  %v233 = vpack.c.b16 %v189, %v188
  %v234 = vpack.c.b16 %v191, %v190
  %v235 = vpack.c.b16 %v193, %v192
  %v236 = vpack.c.b16 %v195, %v194
  %v237 = vpack.c.b16 %v197, %v196
  %v238 = vpack.c.b16 %v199, %v198
  %v239 = vpack.c.b16 %v201, %v200
  %v240 = vpack.c.b16 %v203, %v202
  %v241 = vpack.c.b16 %v205, %v204
  %v242 = vpack.c.b16 %v207, %v206
  %v243 = vpack.c.b16 %v209, %v208
  %v244 = vpack.c.b16 %v211, %v210
  %v245 = vpack.c.b16 %v213, %v212
  %v250 = vunpack.c.l.b16 %v82
  %v251 = vunpack.c.l.b16 %v83
  %v252 = vunpack.c.l.b16 %v84
  %v253 = vunpack.c.l.b16 %v85
  %v254 = vpack.c.b16 %v251, %v250
  %v255 = vpack.c.b16 %v253, %v252
  %vm257 = vcmask 220160
  %v259 = vsel %vm257, %v214, 0
  %v262 = vsel %vm257, %v215, 0
  %v265 = vsel %vm257, %v216, 0
  %v268 = vsel %vm257, %v217, 0
  %v271 = vsel %vm257, %v218, 0
  %v274 = vsel %vm257, %v219, 0
  %v277 = vsel %vm257, %v220, 0
  %v280 = vsel %vm257, %v221, 0
  %v283 = vsel %vm257, %v222, 0
  %v286 = vsel %vm257, %v223, 0
  %v289 = vsel %vm257, %v224, 0
  %v292 = vsel %vm257, %v225, 0
  %v295 = vsel %vm257, %v226, 0
  %v298 = vsel %vm257, %v227, 0
  %v301 = vsel %vm257, %v228, 0
  %v304 = vsel %vm257, %v229, 0
  %v307 = vsel %vm257, %v230, 0
  %v310 = vsel %vm257, %v231, 0
  %v313 = vsel %vm257, %v232, 0
  %v316 = vsel %vm257, %v233, 0
  %v319 = vsel %vm257, %v234, 0
  %v322 = vsel %vm257, %v235, 0
  %v325 = vsel %vm257, %v236, 0
  %v328 = vsel %vm257, %v237, 0
  %v331 = vsel %vm257, %v238, 0
  %v334 = vsel %vm257, %v239, 0
  %v337 = vsel %vm257, %v240, 0
  %v340 = vsel %vm257, %v241, 0
  %v343 = vsel %vm257, %v242, 0
  %v346 = vsel %vm257, %v243, 0
  %v349 = vsel %vm257, %v244, 0
  %v352 = vsel %vm257, %v245, 0
  %vm354 = vcmask 1044480
  %vm355 = vcmask 1045504
  %v356 = vsel %vm354, 4294967295, 65535
  %v357 = vsel %vm355, %v356, 0
  %v359 = vand.u32 %v255, %v357
  %361 = vmatprep.subr.bf16.mxu0 0
  %362 = vmatpush1.bf16.msra.mxu0 %v254
  %363 = vmatprep.subr.bf16.mxu0 0
  %364 = vmatpush1.bf16.msra.mxu0 %v359
  %365 = vmatprep.subr.bf16.mxu0 0
  %366 = vmatpush1.bf16.msra.mxu0 0
  %367 = vmatprep.subr.bf16.mxu0 0
  %368 = vmatpush1.bf16.msra.mxu0 0
  %369 = vmatprep.subr.bf16.mxu0 0
  %370 = vmatpush1.bf16.msra.mxu0 0
  %371 = vmatprep.subr.bf16.mxu0 0
  %372 = vmatpush1.bf16.msra.mxu0 0
  %373 = vmatprep.subr.bf16.mxu0 0
  %374 = vmatpush1.bf16.msra.mxu0 0
  %375 = vmatprep.subr.bf16.mxu0 0
  %376 = vmatpush1.bf16.msra.mxu0 0
  %377 = vmatprep.subr.bf16.mxu0 0
  %378 = vmatpush1.bf16.msra.mxu0 0
  %379 = vmatprep.subr.bf16.mxu0 0
  %380 = vmatpush1.bf16.msra.mxu0 0
  %381 = vmatprep.subr.bf16.mxu0 0
  %382 = vmatpush1.bf16.msra.mxu0 0
  %383 = vmatprep.subr.bf16.mxu0 0
  %384 = vmatpush1.bf16.msra.mxu0 0
  %385 = vmatprep.subr.bf16.mxu0 0
  %386 = vmatpush1.bf16.msra.mxu0 0
  %387 = vmatprep.subr.bf16.mxu0 0
  %388 = vmatpush1.bf16.msra.mxu0 0
  %389 = vmatprep.subr.bf16.mxu0 0
  %390 = vmatpush1.bf16.msra.mxu0 0
  %391 = vmatprep.subr.bf16.mxu0 0
  %392 = vmatpush1.bf16.msra.mxu0 0
  %393 = vmatprep.mubr.bf16.mxu0 0
  %394 = vmatmul.mubr.bf16.gmra.mrb[0].mxu0 %v259
  %v395 = vpop.f32.mrb[0].mxu0
  %v396 = vadd.f32 0.0, %v395
  %v397 = vpop.f32.mrb[0].mxu0
  %v398 = vpop.f32.mrb[0].mxu0
  %v399 = vadd.f32 0.0, %v398
  %v400 = vpop.f32.mrb[0].mxu0
  %401 = vmatprep.mubr.bf16.mxu0 0
  %402 = vmatmul.mubr.bf16.gmra.mrb[0].mxu0 %v262
  %v403 = vpop.f32.mrb[0].mxu0
  %v404 = vadd.f32 0.0, %v403
  %v405 = vpop.f32.mrb[0].mxu0
  %v406 = vpop.f32.mrb[0].mxu0
  %v407 = vadd.f32 0.0, %v406
  %v408 = vpop.f32.mrb[0].mxu0
  %409 = vmatprep.mubr.bf16.mxu0 0
  %410 = vmatmul.mubr.bf16.gmra.mrb[0].mxu0 %v265
  %v411 = vpop.f32.mrb[0].mxu0
  %v412 = vadd.f32 0.0, %v411
  %v413 = vpop.f32.mrb[0].mxu0
  %v414 = vpop.f32.mrb[0].mxu0
  %v415 = vadd.f32 0.0, %v414
  %v416 = vpop.f32.mrb[0].mxu0
  %417 = vmatprep.mubr.bf16.mxu0 0
  %418 = vmatmul.mubr.bf16.gmra.mrb[0].mxu0 %v268
  %v419 = vpop.f32.mrb[0].mxu0
  %v420 = vadd.f32 0.0, %v419
  %v421 = vpop.f32.mrb[0].mxu0
  %v422 = vpop.f32.mrb[0].mxu0
  %v423 = vadd.f32 0.0, %v422
  %v424 = vpop.f32.mrb[0].mxu0
  %425 = vmatprep.mubr.bf16.mxu0 0
  %426 = vmatmul.mubr.bf16.gmra.mrb[0].mxu0 %v271
  %v427 = vpop.f32.mrb[0].mxu0
  %v428 = vadd.f32 0.0, %v427
  %v429 = vpop.f32.mrb[0].mxu0
  %v430 = vpop.f32.mrb[0].mxu0
  %v431 = vadd.f32 0.0, %v430
  %v432 = vpop.f32.mrb[0].mxu0
  %433 = vmatprep.mubr.bf16.mxu0 0
  %434 = vmatmul.mubr.bf16.gmra.mrb[0].mxu0 %v274
  %v435 = vpop.f32.mrb[0].mxu0
  %v436 = vadd.f32 0.0, %v435
  %v437 = vpop.f32.mrb[0].mxu0
  %v438 = vpop.f32.mrb[0].mxu0
  %v439 = vadd.f32 0.0, %v438
  %v440 = vpop.f32.mrb[0].mxu0
  %441 = vmatprep.mubr.bf16.mxu0 0
  %442 = vmatmul.mubr.bf16.gmra.mrb[0].mxu0 %v277
  %v443 = vpop.f32.mrb[0].mxu0
  %v444 = vadd.f32 0.0, %v443
  %v445 = vpop.f32.mrb[0].mxu0
  %v446 = vpop.f32.mrb[0].mxu0
  %v447 = vadd.f32 0.0, %v446
  %v448 = vpop.f32.mrb[0].mxu0
  %449 = vmatprep.mubr.bf16.mxu0 0
  %450 = vmatmul.mubr.bf16.gmra.mrb[0].mxu0 %v280
  %v451 = vpop.f32.mrb[0].mxu0
  %v452 = vadd.f32 0.0, %v451
  %v453 = vpop.f32.mrb[0].mxu0
  %v454 = vpop.f32.mrb[0].mxu0
  %v455 = vadd.f32 0.0, %v454
  %v456 = vpop.f32.mrb[0].mxu0
  %457 = vmatprep.mubr.bf16.mxu0 0
  %458 = vmatmul.mubr.bf16.gmra.mrb[0].mxu0 %v283
  %v459 = vpop.f32.mrb[0].mxu0
  %v460 = vadd.f32 0.0, %v459
  %v461 = vpop.f32.mrb[0].mxu0
  %v462 = vpop.f32.mrb[0].mxu0
  %v463 = vadd.f32 0.0, %v462
  %v464 = vpop.f32.mrb[0].mxu0
  %465 = vmatprep.mubr.bf16.mxu0 0
  %466 = vmatmul.mubr.bf16.gmra.mrb[0].mxu0 %v286
  %v467 = vpop.f32.mrb[0].mxu0
  %v468 = vadd.f32 0.0, %v467
  %v469 = vpop.f32.mrb[0].mxu0
  %v470 = vpop.f32.mrb[0].mxu0
  %v471 = vadd.f32 0.0, %v470
  %v472 = vpop.f32.mrb[0].mxu0
  %473 = vmatprep.mubr.bf16.mxu0 0
  %474 = vmatmul.mubr.bf16.gmra.mrb[0].mxu0 %v289
  %v475 = vpop.f32.mrb[0].mxu0
  %v476 = vadd.f32 0.0, %v475
  %v477 = vpop.f32.mrb[0].mxu0
  %v478 = vpop.f32.mrb[0].mxu0
  %v479 = vadd.f32 0.0, %v478
  %v480 = vpop.f32.mrb[0].mxu0
  %481 = vmatprep.mubr.bf16.mxu0 0
  %482 = vmatmul.mubr.bf16.gmra.mrb[0].mxu0 %v292
  %v483 = vpop.f32.mrb[0].mxu0
  %v484 = vadd.f32 0.0, %v483
  %v485 = vpop.f32.mrb[0].mxu0
  %v486 = vpop.f32.mrb[0].mxu0
  %v487 = vadd.f32 0.0, %v486
  %v488 = vpop.f32.mrb[0].mxu0
  %489 = vmatprep.mubr.bf16.mxu0 0
  %490 = vmatmul.mubr.bf16.gmra.mrb[0].mxu0 %v295
  %v491 = vpop.f32.mrb[0].mxu0
  %v492 = vadd.f32 0.0, %v491
  %v493 = vpop.f32.mrb[0].mxu0
  %v494 = vpop.f32.mrb[0].mxu0
  %v495 = vadd.f32 0.0, %v494
  %v496 = vpop.f32.mrb[0].mxu0
  %497 = vmatprep.mubr.bf16.mxu0 0
  %498 = vmatmul.mubr.bf16.gmra.mrb[0].mxu0 %v298
  %v499 = vpop.f32.mrb[0].mxu0
  %v500 = vadd.f32 0.0, %v499
  %v501 = vpop.f32.mrb[0].mxu0
  %v502 = vpop.f32.mrb[0].mxu0
  %v503 = vadd.f32 0.0, %v502
  %v504 = vpop.f32.mrb[0].mxu0
  %505 = vmatprep.mubr.bf16.mxu0 0
  %506 = vmatmul.mubr.bf16.gmra.mrb[0].mxu0 %v301
  %v507 = vpop.f32.mrb[0].mxu0
  %v508 = vadd.f32 0.0, %v507
  %v509 = vpop.f32.mrb[0].mxu0
  %v510 = vpop.f32.mrb[0].mxu0
  %v511 = vadd.f32 0.0, %v510
  %v512 = vpop.f32.mrb[0].mxu0
  %513 = vmatprep.mubr.bf16.mxu0 0
  %514 = vmatmul.mubr.bf16.gmra.mrb[0].mxu0 %v304
  %v515 = vpop.f32.mrb[0].mxu0
  %v516 = vadd.f32 0.0, %v515
  %v517 = vpop.f32.mrb[0].mxu0
  %v518 = vpop.f32.mrb[0].mxu0
  %v519 = vadd.f32 0.0, %v518
  %v520 = vpop.f32.mrb[0].mxu0
  %521 = vmatprep.mubr.bf16.mxu0 0
  %522 = vmatmul.mubr.bf16.gmra.mrb[0].mxu0 %v307
  %v523 = vpop.f32.mrb[0].mxu0
  %v524 = vadd.f32 0.0, %v523
  %v525 = vpop.f32.mrb[0].mxu0
  %v526 = vpop.f32.mrb[0].mxu0
  %v527 = vadd.f32 0.0, %v526
  %v528 = vpop.f32.mrb[0].mxu0
  %529 = vmatprep.mubr.bf16.mxu0 0
  %530 = vmatmul.mubr.bf16.gmra.mrb[0].mxu0 %v310
  %v531 = vpop.f32.mrb[0].mxu0
  %v532 = vadd.f32 0.0, %v531
  %v533 = vpop.f32.mrb[0].mxu0
  %v534 = vpop.f32.mrb[0].mxu0
  %v535 = vadd.f32 0.0, %v534
  %v536 = vpop.f32.mrb[0].mxu0
  %537 = vmatprep.mubr.bf16.mxu0 0
  %538 = vmatmul.mubr.bf16.gmra.mrb[0].mxu0 %v313
  %v539 = vpop.f32.mrb[0].mxu0
  %v540 = vadd.f32 0.0, %v539
  %v541 = vpop.f32.mrb[0].mxu0
  %v542 = vpop.f32.mrb[0].mxu0
  %v543 = vadd.f32 0.0, %v542
  %v544 = vpop.f32.mrb[0].mxu0
  %545 = vmatprep.mubr.bf16.mxu0 0
  %546 = vmatmul.mubr.bf16.gmra.mrb[0].mxu0 %v316
  %v547 = vpop.f32.mrb[0].mxu0
  %v548 = vadd.f32 0.0, %v547
  %v549 = vpop.f32.mrb[0].mxu0
  %v550 = vpop.f32.mrb[0].mxu0
  %v551 = vadd.f32 0.0, %v550
  %v552 = vpop.f32.mrb[0].mxu0
  %553 = vmatprep.mubr.bf16.mxu0 0
  %554 = vmatmul.mubr.bf16.gmra.mrb[0].mxu0 %v319
  %v555 = vpop.f32.mrb[0].mxu0
  %v556 = vadd.f32 0.0, %v555
  %v557 = vpop.f32.mrb[0].mxu0
  %v558 = vpop.f32.mrb[0].mxu0
  %v559 = vadd.f32 0.0, %v558
  %v560 = vpop.f32.mrb[0].mxu0
  %561 = vmatprep.mubr.bf16.mxu0 0
  %562 = vmatmul.mubr.bf16.gmra.mrb[0].mxu0 %v322
  %v563 = vpop.f32.mrb[0].mxu0
  %v564 = vadd.f32 0.0, %v563
  %v565 = vpop.f32.mrb[0].mxu0
  %v566 = vpop.f32.mrb[0].mxu0
  %v567 = vadd.f32 0.0, %v566
  %v568 = vpop.f32.mrb[0].mxu0
  %569 = vmatprep.mubr.bf16.mxu0 0
  %570 = vmatmul.mubr.bf16.gmra.mrb[0].mxu0 %v325
  %v571 = vpop.f32.mrb[0].mxu0
  %v572 = vadd.f32 0.0, %v571
  %v573 = vpop.f32.mrb[0].mxu0
  %v574 = vpop.f32.mrb[0].mxu0
  %v575 = vadd.f32 0.0, %v574
  %v576 = vpop.f32.mrb[0].mxu0
  %577 = vmatprep.mubr.bf16.mxu0 0
  %578 = vmatmul.mubr.bf16.gmra.mrb[0].mxu0 %v328
  %v579 = vpop.f32.mrb[0].mxu0
  %v580 = vadd.f32 0.0, %v579
  %v581 = vpop.f32.mrb[0].mxu0
  %v582 = vpop.f32.mrb[0].mxu0
  %v583 = vadd.f32 0.0, %v582
  %v584 = vpop.f32.mrb[0].mxu0
  %585 = vmatprep.mubr.bf16.mxu0 0
  %586 = vmatmul.mubr.bf16.gmra.mrb[0].mxu0 %v331
  %v587 = vpop.f32.mrb[0].mxu0
  %v588 = vadd.f32 0.0, %v587
  %v589 = vpop.f32.mrb[0].mxu0
  %v590 = vpop.f32.mrb[0].mxu0
  %v591 = vadd.f32 0.0, %v590
  %v592 = vpop.f32.mrb[0].mxu0
  %593 = vmatprep.mubr.bf16.mxu0 0
  %594 = vmatmul.mubr.bf16.gmra.mrb[0].mxu0 %v334
  %v595 = vpop.f32.mrb[0].mxu0
  %v596 = vadd.f32 0.0, %v595
  %v597 = vpop.f32.mrb[0].mxu0
  %v598 = vpop.f32.mrb[0].mxu0
  %v599 = vadd.f32 0.0, %v598
  %v600 = vpop.f32.mrb[0].mxu0
  %601 = vmatprep.mubr.bf16.mxu0 0
  %602 = vmatmul.mubr.bf16.gmra.mrb[0].mxu0 %v337
  %v603 = vpop.f32.mrb[0].mxu0
  %v604 = vadd.f32 0.0, %v603
  %v605 = vpop.f32.mrb[0].mxu0
  %v606 = vpop.f32.mrb[0].mxu0
  %v607 = vadd.f32 0.0, %v606
  %v608 = vpop.f32.mrb[0].mxu0
  %609 = vmatprep.mubr.bf16.mxu0 0
  %610 = vmatmul.mubr.bf16.gmra.mrb[0].mxu0 %v340
  %v611 = vpop.f32.mrb[0].mxu0
  %v612 = vadd.f32 0.0, %v611
  %v613 = vpop.f32.mrb[0].mxu0
  %v614 = vpop.f32.mrb[0].mxu0
  %v615 = vadd.f32 0.0, %v614
  %v616 = vpop.f32.mrb[0].mxu0
  %617 = vmatprep.mubr.bf16.mxu0 0
  %618 = vmatmul.mubr.bf16.gmra.mrb[0].mxu0 %v343
  %v619 = vpop.f32.mrb[0].mxu0
  %v620 = vadd.f32 0.0, %v619
  %v621 = vpop.f32.mrb[0].mxu0
  %v622 = vpop.f32.mrb[0].mxu0
  %v623 = vadd.f32 0.0, %v622
  %v624 = vpop.f32.mrb[0].mxu0
  %625 = vmatprep.mubr.bf16.mxu0 0
  %626 = vmatmul.mubr.bf16.gmra.mrb[0].mxu0 %v346
  %v627 = vpop.f32.mrb[0].mxu0
  %v628 = vadd.f32 0.0, %v627
  %v629 = vpop.f32.mrb[0].mxu0
  %v630 = vpop.f32.mrb[0].mxu0
  %v631 = vadd.f32 0.0, %v630
  %v632 = vpop.f32.mrb[0].mxu0
  %633 = vmatprep.mubr.bf16.mxu0 0
  %634 = vmatmul.mubr.bf16.gmra.mrb[0].mxu0 %v349
  %v635 = vpop.f32.mrb[0].mxu0
  %v636 = vadd.f32 0.0, %v635
  %v637 = vpop.f32.mrb[0].mxu0
  %v638 = vpop.f32.mrb[0].mxu0
  %v639 = vadd.f32 0.0, %v638
  %v640 = vpop.f32.mrb[0].mxu0
  %641 = vmatprep.mubr.bf16.mxu0 0
  %642 = vmatmul.mubr.bf16.gmra.mrb[0].mxu0 %v352
  %v643 = vpop.f32.mrb[0].mxu0
  %v644 = vadd.f32 0.0, %v643
  %v645 = vpop.f32.mrb[0].mxu0
  %v646 = vpop.f32.mrb[0].mxu0
  %v647 = vadd.f32 0.0, %v646
  %v648 = vpop.f32.mrb[0].mxu0
  %649 = vdwg.mxu0
  %v650 = vld [vmem:[%s2] sm:$0x1]
  %v652 = vlaneseq
  %v653 = vshrl.u32 %v652, 7
  %v654 = vsub.s32 0, %v653
  %v655 = vrot.slane %v650, %v654
  %v657 = vmul.f32 %v396, %v655
  %v658 = vmul.f32 %v399, %v655
  %v659 = vmul.f32 %v404, %v655
  %v660 = vmul.f32 %v407, %v655
  %v661 = vmul.f32 %v412, %v655
  %v662 = vmul.f32 %v415, %v655
  %v663 = vmul.f32 %v420, %v655
  %v664 = vmul.f32 %v423, %v655
  %v665 = vmul.f32 %v428, %v655
  %v666 = vmul.f32 %v431, %v655
  %v667 = vmul.f32 %v436, %v655
  %v668 = vmul.f32 %v439, %v655
  %v669 = vmul.f32 %v444, %v655
  %v670 = vmul.f32 %v447, %v655
  %v671 = vmul.f32 %v452, %v655
  %v672 = vmul.f32 %v455, %v655
  %v673 = vmul.f32 %v460, %v655
  %v674 = vmul.f32 %v463, %v655
  %v675 = vmul.f32 %v468, %v655
  %v676 = vmul.f32 %v471, %v655
  %v677 = vmul.f32 %v476, %v655
  %v678 = vmul.f32 %v479, %v655
  %v679 = vmul.f32 %v484, %v655
  %v680 = vmul.f32 %v487, %v655
  %v681 = vmul.f32 %v492, %v655
  %v682 = vmul.f32 %v495, %v655
  %v683 = vmul.f32 %v500, %v655
  %v684 = vmul.f32 %v503, %v655
  %v685 = vmul.f32 %v508, %v655
  %v686 = vmul.f32 %v511, %v655
  %v687 = vmul.f32 %v516, %v655
  %v688 = vmul.f32 %v519, %v655
  %v689 = vmul.f32 %v524, %v655
  %v690 = vmul.f32 %v527, %v655
  %v691 = vmul.f32 %v532, %v655
  %v692 = vmul.f32 %v535, %v655
  %v693 = vmul.f32 %v540, %v655
  %v694 = vmul.f32 %v543, %v655
  %v695 = vmul.f32 %v548, %v655
  %v696 = vmul.f32 %v551, %v655
  %v697 = vmul.f32 %v556, %v655
  %v698 = vmul.f32 %v559, %v655
  %v699 = vmul.f32 %v564, %v655
  %v700 = vmul.f32 %v567, %v655
  %v701 = vmul.f32 %v572, %v655
  %v702 = vmul.f32 %v575, %v655
  %v703 = vmul.f32 %v580, %v655
  %v704 = vmul.f32 %v583, %v655
  %v705 = vmul.f32 %v588, %v655
  %v706 = vmul.f32 %v591, %v655
  %v707 = vmul.f32 %v596, %v655
  %v708 = vmul.f32 %v599, %v655
  %v709 = vmul.f32 %v604, %v655
  %v710 = vmul.f32 %v607, %v655
  %v711 = vmul.f32 %v612, %v655
  %v712 = vmul.f32 %v615, %v655
  %v713 = vmul.f32 %v620, %v655
  %v714 = vmul.f32 %v623, %v655
  %v715 = vmul.f32 %v628, %v655
  %v716 = vmul.f32 %v631, %v655
  %v717 = vmul.f32 %v636, %v655
  %v718 = vmul.f32 %v639, %v655
  %v719 = vmul.f32 %v644, %v655
  %v720 = vmul.f32 %v647, %v655
  %v721 = vld [vmem:[%s3] sm:$0x1]
  %v723 = vlaneseq
  %v724 = vshrl.u32 %v723, 7
  %v725 = vsub.s32 0, %v724
  %v726 = vrot.slane %v721, %v725
  %v728 = vadd.f32 %v657, %v726
  %v729 = vadd.f32 %v658, %v726
  %v730 = vadd.f32 %v659, %v726
  %v731 = vadd.f32 %v660, %v726
  %v732 = vadd.f32 %v661, %v726
  %v733 = vadd.f32 %v662, %v726
  %v734 = vadd.f32 %v663, %v726
  %v735 = vadd.f32 %v664, %v726
  %v736 = vadd.f32 %v665, %v726
  %v737 = vadd.f32 %v666, %v726
  %v738 = vadd.f32 %v667, %v726
  %v739 = vadd.f32 %v668, %v726
  %v740 = vadd.f32 %v669, %v726
  %v741 = vadd.f32 %v670, %v726
  %v742 = vadd.f32 %v671, %v726
  %v743 = vadd.f32 %v672, %v726
  %v744 = vadd.f32 %v673, %v726
  %v745 = vadd.f32 %v674, %v726
  %v746 = vadd.f32 %v675, %v726
  %v747 = vadd.f32 %v676, %v726
  %v748 = vadd.f32 %v677, %v726
  %v749 = vadd.f32 %v678, %v726
  %v750 = vadd.f32 %v679, %v726
  %v751 = vadd.f32 %v680, %v726
  %v752 = vadd.f32 %v681, %v726
  %v753 = vadd.f32 %v682, %v726
  %v754 = vadd.f32 %v683, %v726
  %v755 = vadd.f32 %v684, %v726
  %v756 = vadd.f32 %v685, %v726
  %v757 = vadd.f32 %v686, %v726
  %v758 = vadd.f32 %v687, %v726
  %v759 = vadd.f32 %v688, %v726
  %v760 = vadd.f32 %v689, %v726
  %v761 = vadd.f32 %v690, %v726
  %v762 = vadd.f32 %v691, %v726
  %v763 = vadd.f32 %v692, %v726
  %v764 = vadd.f32 %v693, %v726
  %v765 = vadd.f32 %v694, %v726
  %v766 = vadd.f32 %v695, %v726
  %v767 = vadd.f32 %v696, %v726
  %v768 = vadd.f32 %v697, %v726
  %v769 = vadd.f32 %v698, %v726
  %v770 = vadd.f32 %v699, %v726
  %v771 = vadd.f32 %v700, %v726
  %v772 = vadd.f32 %v701, %v726
  %v773 = vadd.f32 %v702, %v726
  %v774 = vadd.f32 %v703, %v726
  %v775 = vadd.f32 %v704, %v726
  %v776 = vadd.f32 %v705, %v726
  %v777 = vadd.f32 %v706, %v726
  %v778 = vadd.f32 %v707, %v726
  %v779 = vadd.f32 %v708, %v726
  %v780 = vadd.f32 %v709, %v726
  %v781 = vadd.f32 %v710, %v726
  %v782 = vadd.f32 %v711, %v726
  %v783 = vadd.f32 %v712, %v726
  %v784 = vadd.f32 %v713, %v726
  %v785 = vadd.f32 %v714, %v726
  %v786 = vadd.f32 %v715, %v726
  %v787 = vadd.f32 %v716, %v726
  %v788 = vadd.f32 %v717, %v726
  %v789 = vadd.f32 %v718, %v726
  %v790 = vadd.f32 %v719, %v726
  %v791 = vadd.f32 %v720, %v726
  %v792 = vmax.f32 %v728, 0.0
  %v793 = vmax.f32 %v729, 0.0
  %v794 = vmax.f32 %v730, 0.0
  %v795 = vmax.f32 %v731, 0.0
  %v796 = vmax.f32 %v732, 0.0
  %v797 = vmax.f32 %v733, 0.0
  %v798 = vmax.f32 %v734, 0.0
  %v799 = vmax.f32 %v735, 0.0
  %v800 = vmax.f32 %v736, 0.0
  %v801 = vmax.f32 %v737, 0.0
  %v802 = vmax.f32 %v738, 0.0
  %v803 = vmax.f32 %v739, 0.0
  %v804 = vmax.f32 %v740, 0.0
  %v805 = vmax.f32 %v741, 0.0
  %v806 = vmax.f32 %v742, 0.0
  %v807 = vmax.f32 %v743, 0.0
  %v808 = vmax.f32 %v744, 0.0
  %v809 = vmax.f32 %v745, 0.0
  %v810 = vmax.f32 %v746, 0.0
  %v811 = vmax.f32 %v747, 0.0
  %v812 = vmax.f32 %v748, 0.0
  %v813 = vmax.f32 %v749, 0.0
  %v814 = vmax.f32 %v750, 0.0
  %v815 = vmax.f32 %v751, 0.0
  %v816 = vmax.f32 %v752, 0.0
  %v817 = vmax.f32 %v753, 0.0
  %v818 = vmax.f32 %v754, 0.0
  %v819 = vmax.f32 %v755, 0.0
  %v820 = vmax.f32 %v756, 0.0
  %v821 = vmax.f32 %v757, 0.0
  %v822 = vmax.f32 %v758, 0.0
  %v823 = vmax.f32 %v759, 0.0
  %v824 = vmax.f32 %v760, 0.0
  %v825 = vmax.f32 %v761, 0.0
  %v826 = vmax.f32 %v762, 0.0
  %v827 = vmax.f32 %v763, 0.0
  %v828 = vmax.f32 %v764, 0.0
  %v829 = vmax.f32 %v765, 0.0
  %v830 = vmax.f32 %v766, 0.0
  %v831 = vmax.f32 %v767, 0.0
  %v832 = vmax.f32 %v768, 0.0
  %v833 = vmax.f32 %v769, 0.0
  %v834 = vmax.f32 %v770, 0.0
  %v835 = vmax.f32 %v771, 0.0
  %v836 = vmax.f32 %v772, 0.0
  %v837 = vmax.f32 %v773, 0.0
  %v838 = vmax.f32 %v774, 0.0
  %v839 = vmax.f32 %v775, 0.0
  %v840 = vmax.f32 %v776, 0.0
  %v841 = vmax.f32 %v777, 0.0
  %v842 = vmax.f32 %v778, 0.0
  %v843 = vmax.f32 %v779, 0.0
  %v844 = vmax.f32 %v780, 0.0
  %v845 = vmax.f32 %v781, 0.0
  %v846 = vmax.f32 %v782, 0.0
  %v847 = vmax.f32 %v783, 0.0
  %v848 = vmax.f32 %v784, 0.0
  %v849 = vmax.f32 %v785, 0.0
  %v850 = vmax.f32 %v786, 0.0
  %v851 = vmax.f32 %v787, 0.0
  %v852 = vmax.f32 %v788, 0.0
  %v853 = vmax.f32 %v789, 0.0
  %v854 = vmax.f32 %v790, 0.0
  %v855 = vmax.f32 %v791, 0.0
  %v856 = vpack.c.bf16 %v793, %v792
  %v857 = vpack.c.bf16 %v795, %v794
  %v858 = vpack.c.bf16 %v797, %v796
  %v859 = vpack.c.bf16 %v799, %v798
  %v860 = vpack.c.bf16 %v801, %v800
  %v861 = vpack.c.bf16 %v803, %v802
  %v862 = vpack.c.bf16 %v805, %v804
  %v863 = vpack.c.bf16 %v807, %v806
  %v864 = vpack.c.bf16 %v809, %v808
  %v865 = vpack.c.bf16 %v811, %v810
  %v866 = vpack.c.bf16 %v813, %v812
  %v867 = vpack.c.bf16 %v815, %v814
  %v868 = vpack.c.bf16 %v817, %v816
  %v869 = vpack.c.bf16 %v819, %v818
  %v870 = vpack.c.bf16 %v821, %v820
  %v871 = vpack.c.bf16 %v823, %v822
  %v872 = vpack.c.bf16 %v825, %v824
  %v873 = vpack.c.bf16 %v827, %v826
  %v874 = vpack.c.bf16 %v829, %v828
  %v875 = vpack.c.bf16 %v831, %v830
  %v876 = vpack.c.bf16 %v833, %v832
  %v877 = vpack.c.bf16 %v835, %v834
  %v878 = vpack.c.bf16 %v837, %v836
  %v879 = vpack.c.bf16 %v839, %v838
  %v880 = vpack.c.bf16 %v841, %v840
  %v881 = vpack.c.bf16 %v843, %v842
  %v882 = vpack.c.bf16 %v845, %v844
  %v883 = vpack.c.bf16 %v847, %v846
  %v884 = vpack.c.bf16 %v849, %v848
  %v885 = vpack.c.bf16 %v851, %v850
  %v886 = vpack.c.bf16 %v853, %v852
  %v887 = vpack.c.bf16 %v855, %v854
  %v920 = vunpack.c.l.b16 %v856
  %v921 = vunpack.c.h.b16 %v856
  %v922 = vunpack.c.l.b16 %v857
  %v923 = vunpack.c.h.b16 %v857
  %v924 = vunpack.c.l.b16 %v858
  %v925 = vunpack.c.h.b16 %v858
  %v926 = vunpack.c.l.b16 %v859
  %v927 = vunpack.c.h.b16 %v859
  %v928 = vunpack.c.l.b16 %v860
  %v929 = vunpack.c.h.b16 %v860
  %v930 = vunpack.c.l.b16 %v861
  %v931 = vunpack.c.h.b16 %v861
  %v932 = vunpack.c.l.b16 %v862
  %v933 = vunpack.c.h.b16 %v862
  %v934 = vunpack.c.l.b16 %v863
  %v935 = vunpack.c.h.b16 %v863
  %v936 = vunpack.c.l.b16 %v864
  %v937 = vunpack.c.h.b16 %v864
  %v938 = vunpack.c.l.b16 %v865
  %v939 = vunpack.c.h.b16 %v865
  %v940 = vunpack.c.l.b16 %v866
  %v941 = vunpack.c.h.b16 %v866
  %v942 = vunpack.c.l.b16 %v867
  %v943 = vunpack.c.h.b16 %v867
  %v944 = vunpack.c.l.b16 %v868
  %v945 = vunpack.c.h.b16 %v868
  %v946 = vunpack.c.l.b16 %v869
  %v947 = vunpack.c.h.b16 %v869
  %v948 = vunpack.c.l.b16 %v870
  %v949 = vunpack.c.h.b16 %v870
  %v950 = vunpack.c.l.b16 %v871
  %v951 = vunpack.c.h.b16 %v871
  %v952 = vunpack.c.l.b16 %v872
  %v953 = vunpack.c.h.b16 %v872
  %v954 = vunpack.c.l.b16 %v873
  %v955 = vunpack.c.h.b16 %v873
  %v956 = vunpack.c.l.b16 %v874
  %v957 = vunpack.c.h.b16 %v874
  %v958 = vunpack.c.l.b16 %v875
  %v959 = vunpack.c.h.b16 %v875
  %v960 = vunpack.c.l.b16 %v876
  %v961 = vunpack.c.h.b16 %v876
  %v962 = vunpack.c.l.b16 %v877
  %v963 = vunpack.c.h.b16 %v877
  %v964 = vunpack.c.l.b16 %v878
  %v965 = vunpack.c.h.b16 %v878
  %v966 = vunpack.c.l.b16 %v879
  %v967 = vunpack.c.h.b16 %v879
  %v968 = vunpack.c.l.b16 %v880
  %v969 = vunpack.c.h.b16 %v880
  %v970 = vunpack.c.l.b16 %v881
  %v971 = vunpack.c.h.b16 %v881
  %v972 = vunpack.c.l.b16 %v882
  %v973 = vunpack.c.h.b16 %v882
  %v974 = vunpack.c.l.b16 %v883
  %v975 = vunpack.c.h.b16 %v883
  %v976 = vunpack.c.l.b16 %v884
  %v977 = vunpack.c.h.b16 %v884
  %v978 = vunpack.c.l.b16 %v885
  %v979 = vunpack.c.h.b16 %v885
  %v980 = vunpack.c.l.b16 %v886
  %v981 = vunpack.c.h.b16 %v886
  %v982 = vunpack.c.l.b16 %v887
  %v983 = vunpack.c.h.b16 %v887
  %v984 = vpack.c.b16 %v920, %v920
  %v985 = vpack.c.b16 %v921, %v921
  %v986 = vpack.c.b16 %v922, %v922
  %v987 = vpack.c.b16 %v923, %v923
  %v988 = vpack.c.b16 %v924, %v924
  %v989 = vpack.c.b16 %v925, %v925
  %v990 = vpack.c.b16 %v926, %v926
  %v991 = vpack.c.b16 %v927, %v927
  %v992 = vpack.c.b16 %v928, %v928
  %v993 = vpack.c.b16 %v929, %v929
  %v994 = vpack.c.b16 %v930, %v930
  %v995 = vpack.c.b16 %v931, %v931
  %v996 = vpack.c.b16 %v932, %v932
  %v997 = vpack.c.b16 %v933, %v933
  %v998 = vpack.c.b16 %v934, %v934
  %v999 = vpack.c.b16 %v935, %v935
  %v1000 = vpack.c.b16 %v936, %v936
  %v1001 = vpack.c.b16 %v937, %v937
  %v1002 = vpack.c.b16 %v938, %v938
  %v1003 = vpack.c.b16 %v939, %v939
  %v1004 = vpack.c.b16 %v940, %v940
  %v1005 = vpack.c.b16 %v941, %v941
  %v1006 = vpack.c.b16 %v942, %v942
  %v1007 = vpack.c.b16 %v943, %v943
  %v1008 = vpack.c.b16 %v944, %v944
  %v1009 = vpack.c.b16 %v945, %v945
  %v1010 = vpack.c.b16 %v946, %v946
  %v1011 = vpack.c.b16 %v947, %v947
  %v1012 = vpack.c.b16 %v948, %v948
  %v1013 = vpack.c.b16 %v949, %v949
  %v1014 = vpack.c.b16 %v950, %v950
  %v1015 = vpack.c.b16 %v951, %v951
  %v1016 = vpack.c.b16 %v952, %v952
  %v1017 = vpack.c.b16 %v953, %v953
  %v1018 = vpack.c.b16 %v954, %v954
  %v1019 = vpack.c.b16 %v955, %v955
  %v1020 = vpack.c.b16 %v956, %v956
  %v1021 = vpack.c.b16 %v957, %v957
  %v1022 = vpack.c.b16 %v958, %v958
  %v1023 = vpack.c.b16 %v959, %v959
  %v1024 = vpack.c.b16 %v960, %v960
  %v1025 = vpack.c.b16 %v961, %v961
  %v1026 = vpack.c.b16 %v962, %v962
  %v1027 = vpack.c.b16 %v963, %v963
  %v1028 = vpack.c.b16 %v964, %v964
  %v1029 = vpack.c.b16 %v965, %v965
  %v1030 = vpack.c.b16 %v966, %v966
  %v1031 = vpack.c.b16 %v967, %v967
  %v1032 = vpack.c.b16 %v968, %v968
  %v1033 = vpack.c.b16 %v969, %v969
  %v1034 = vpack.c.b16 %v970, %v970
  %v1035 = vpack.c.b16 %v971, %v971
  %v1036 = vpack.c.b16 %v972, %v972
  %v1037 = vpack.c.b16 %v973, %v973
  %v1038 = vpack.c.b16 %v974, %v974
  %v1039 = vpack.c.b16 %v975, %v975
  %v1040 = vpack.c.b16 %v976, %v976
  %v1041 = vpack.c.b16 %v977, %v977
  %v1042 = vpack.c.b16 %v978, %v978
  %v1043 = vpack.c.b16 %v979, %v979
  %v1044 = vpack.c.b16 %v980, %v980
  %v1045 = vpack.c.b16 %v981, %v981
  %v1046 = vpack.c.b16 %v982, %v982
  %v1047 = vpack.c.b16 %v983, %v983
  %vm1112 = vcmask 60416
  %1113 = vst.msk [vmem:[%s4] sm:$0xf] %vm1112, %v984
  %1114 = vst.msk [vmem:[%s4 + $0x4] sm:$0xf] %vm1112, %v985
  %1115 = vst.msk [vmem:[%s4 + $0x8] sm:$0xf] %vm1112, %v986
  %1116 = vst.msk [vmem:[%s4 + $0xc] sm:$0xf] %vm1112, %v987
  %1117 = vst.msk [vmem:[%s4 + $0x10] sm:$0xf] %vm1112, %v988
  %1118 = vst.msk [vmem:[%s4 + $0x14] sm:$0xf] %vm1112, %v989
  %1119 = vst.msk [vmem:[%s4 + $0x18] sm:$0xf] %vm1112, %v990
  %1120 = vst.msk [vmem:[%s4 + $0x1c] sm:$0xf] %vm1112, %v991
  %1121 = vst.msk [vmem:[%s4 + $0x20] sm:$0xf] %vm1112, %v992
  %1122 = vst.msk [vmem:[%s4 + $0x24] sm:$0xf] %vm1112, %v993
  %1123 = vst.msk [vmem:[%s4 + $0x28] sm:$0xf] %vm1112, %v994
  %1124 = vst.msk [vmem:[%s4 + $0x2c] sm:$0xf] %vm1112, %v995
  %1125 = vst.msk [vmem:[%s4 + $0x30] sm:$0xf] %vm1112, %v996
  %1126 = vst.msk [vmem:[%s4 + $0x34] sm:$0xf] %vm1112, %v997
  %1127 = vst.msk [vmem:[%s4 + $0x38] sm:$0xf] %vm1112, %v998
  %1128 = vst.msk [vmem:[%s4 + $0x3c] sm:$0xf] %vm1112, %v999
  %1129 = vst.msk [vmem:[%s4 + $0x40] sm:$0xf] %vm1112, %v1000
  %1130 = vst.msk [vmem:[%s4 + $0x44] sm:$0xf] %vm1112, %v1001
  %1131 = vst.msk [vmem:[%s4 + $0x48] sm:$0xf] %vm1112, %v1002
  %1132 = vst.msk [vmem:[%s4 + $0x4c] sm:$0xf] %vm1112, %v1003
  %1133 = vst.msk [vmem:[%s4 + $0x50] sm:$0xf] %vm1112, %v1004
  %1134 = vst.msk [vmem:[%s4 + $0x54] sm:$0xf] %vm1112, %v1005
  %1135 = vst.msk [vmem:[%s4 + $0x58] sm:$0xf] %vm1112, %v1006
  %1136 = vst.msk [vmem:[%s4 + $0x5c] sm:$0xf] %vm1112, %v1007
  %1137 = vst.msk [vmem:[%s4 + $0x60] sm:$0xf] %vm1112, %v1008
  %1138 = vst.msk [vmem:[%s4 + $0x64] sm:$0xf] %vm1112, %v1009
  %1139 = vst.msk [vmem:[%s4 + $0x68] sm:$0xf] %vm1112, %v1010
  %1140 = vst.msk [vmem:[%s4 + $0x6c] sm:$0xf] %vm1112, %v1011
  %1141 = vst.msk [vmem:[%s4 + $0x70] sm:$0xf] %vm1112, %v1012
  %1142 = vst.msk [vmem:[%s4 + $0x74] sm:$0xf] %vm1112, %v1013
  %1143 = vst.msk [vmem:[%s4 + $0x78] sm:$0xf] %vm1112, %v1014
  %1144 = vst.msk [vmem:[%s4 + $0x7c] sm:$0xf] %vm1112, %v1015
  %1145 = vst.msk [vmem:[%s4 + $0x80] sm:$0xf] %vm1112, %v1016
  %1146 = vst.msk [vmem:[%s4 + $0x84] sm:$0xf] %vm1112, %v1017
  %1147 = vst.msk [vmem:[%s4 + $0x88] sm:$0xf] %vm1112, %v1018
  %1148 = vst.msk [vmem:[%s4 + $0x8c] sm:$0xf] %vm1112, %v1019
  %1149 = vst.msk [vmem:[%s4 + $0x90] sm:$0xf] %vm1112, %v1020
  %1150 = vst.msk [vmem:[%s4 + $0x94] sm:$0xf] %vm1112, %v1021
  %1151 = vst.msk [vmem:[%s4 + $0x98] sm:$0xf] %vm1112, %v1022
  %1152 = vst.msk [vmem:[%s4 + $0x9c] sm:$0xf] %vm1112, %v1023
  %1153 = vst.msk [vmem:[%s4 + $0xa0] sm:$0xf] %vm1112, %v1024
  %1154 = vst.msk [vmem:[%s4 + $0xa4] sm:$0xf] %vm1112, %v1025
  %1155 = vst.msk [vmem:[%s4 + $0xa8] sm:$0xf] %vm1112, %v1026
  %1156 = vst.msk [vmem:[%s4 + $0xac] sm:$0xf] %vm1112, %v1027
  %1157 = vst.msk [vmem:[%s4 + $0xb0] sm:$0xf] %vm1112, %v1028
  %1158 = vst.msk [vmem:[%s4 + $0xb4] sm:$0xf] %vm1112, %v1029
  %1159 = vst.msk [vmem:[%s4 + $0xb8] sm:$0xf] %vm1112, %v1030
  %1160 = vst.msk [vmem:[%s4 + $0xbc] sm:$0xf] %vm1112, %v1031
  %1161 = vst.msk [vmem:[%s4 + $0xc0] sm:$0xf] %vm1112, %v1032
  %1162 = vst.msk [vmem:[%s4 + $0xc4] sm:$0xf] %vm1112, %v1033
  %1163 = vst.msk [vmem:[%s4 + $0xc8] sm:$0xf] %vm1112, %v1034
  %1164 = vst.msk [vmem:[%s4 + $0xcc] sm:$0xf] %vm1112, %v1035
  %1165 = vst.msk [vmem:[%s4 + $0xd0] sm:$0xf] %vm1112, %v1036
  %1166 = vst.msk [vmem:[%s4 + $0xd4] sm:$0xf] %vm1112, %v1037
  %1167 = vst.msk [vmem:[%s4 + $0xd8] sm:$0xf] %vm1112, %v1038
  %1168 = vst.msk [vmem:[%s4 + $0xdc] sm:$0xf] %vm1112, %v1039
  %1169 = vst.msk [vmem:[%s4 + $0xe0] sm:$0xf] %vm1112, %v1040
  %1170 = vst.msk [vmem:[%s4 + $0xe4] sm:$0xf] %vm1112, %v1041
  %1171 = vst.msk [vmem:[%s4 + $0xe8] sm:$0xf] %vm1112, %v1042
  %1172 = vst.msk [vmem:[%s4 + $0xec] sm:$0xf] %vm1112, %v1043
  %1173 = vst.msk [vmem:[%s4 + $0xf0] sm:$0xf] %vm1112, %v1044
  %1174 = vst.msk [vmem:[%s4 + $0xf4] sm:$0xf] %vm1112, %v1045
  %1175 = vst.msk [vmem:[%s4 + $0xf8] sm:$0xf] %vm1112, %v1046
  %1176 = vst.msk [vmem:[%s4 + $0xfc] sm:$0xf] %vm1112, %v1047
  // Predicated region
  $region18: #{deeplab_forward.16} parent=0 // pred_check
    _
  $region19: #{deeplab_forward.16} parent=0 // pred_check_branch
    %1178 = sbr.rel (0) target = $region21
  $region20: #{deeplab_forward.16} parent=0 // pred_region
    _
  $region21: #{deeplab_forward.16} parent=0 // pred_fallthru
    _
  // Predicated region
  $region22: #{deeplab_forward.16} parent=0 // pred_check
    _
  $region23: #{deeplab_forward.16} parent=0 // pred_check_branch
    %1180 = sbr.rel (0) target = $region25
  $region24: #{deeplab_forward.16} parent=0 // pred_region
    _
  $region25: #{deeplab_forward.16} parent=0 // pred_fallthru
    _

// kernel: deeplab_forward.18
$region0: #{deeplab_forward.18}
  #allocation0 [shape = 'u32[]', space=smem, size = 0x4, offset = 0x4, fixed_abs, tag = 'smem constant byte address 0x4 - core index']
  #allocation1 [shape = 'u32[144,128]{1,0:T(1,128)}', space=vmem, size = 0x12000, scoped, tag = 'internal scratch']
  %s0 = inlined_call_operand.vmem [shape: bf16[32,144], index: 0, kind: input, shape index: {}]
  %s1 = inlined_call_operand.vmem [shape: bf16[144,32], index: 1, kind: input, shape index: {}]
  %s2 = inlined_call_operand.vmem [shape: f32[1,32], index: 2, kind: input, shape index: {}]
  %s3 = inlined_call_operand.vmem [shape: f32[1,32], index: 3, kind: input, shape index: {}]
  %s4 = inlined_call_operand.vmem [shape: bf16[32,32], index: 4, kind: output, shape index: {}]
  %s5 = sld [smem:[#allocation0]]
  $region26: #{deeplab_forward.18} parent=0
    _
  %s7 = ssub.s32 1, %s5
  %s8 = scalar_select 0, %s7, %s5
  // Predicated region
  $region2: #{deeplab_forward.18} parent=0 // pred_check
    _
  $region3: #{deeplab_forward.18} parent=0 // pred_check_branch
    %10 = sbr.rel (0) target = $region5
  $region4: #{deeplab_forward.18} parent=0 // pred_region
    _
  $region5: #{deeplab_forward.18} parent=0 // pred_fallthru
    _
  // Predicated region
  $region6: #{deeplab_forward.18} parent=0 // pred_check
    _
  $region7: #{deeplab_forward.18} parent=0 // pred_check_branch
    %12 = sbr.rel (0) target = $region9
  $region8: #{deeplab_forward.18} parent=0 // pred_region
    _
  $region9: #{deeplab_forward.18} parent=0 // pred_fallthru
    _
  // Predicated region
  $region10: #{deeplab_forward.18} parent=0 // pred_check
    _
  $region11: #{deeplab_forward.18} parent=0 // pred_check_branch
    %14 = sbr.rel (0) target = $region13
  $region12: #{deeplab_forward.18} parent=0 // pred_region
    _
  $region13: #{deeplab_forward.18} parent=0 // pred_fallthru
    _
  // Predicated region
  $region14: #{deeplab_forward.18} parent=0 // pred_check
    _
  $region15: #{deeplab_forward.18} parent=0 // pred_check_branch
    %16 = sbr.rel (0) target = $region17
  $region16: #{deeplab_forward.18} parent=0 // pred_region
    _
  $region17: #{deeplab_forward.18} parent=0 // pred_fallthru
    _
  %v18 = vld [vmem:[%s0] sm:$0xff]
  %v19 = vld [vmem:[%s0 + $0x8] sm:$0xff]
  %v20 = vld [vmem:[%s0 + $0x10] sm:$0xff]
  %v21 = vld [vmem:[%s0 + $0x18] sm:$0xff]
  %v22 = vld [vmem:[%s1] sm:$0xf]
  %v23 = vld [vmem:[%s1 + $0x4] sm:$0xf]
  %v24 = vld [vmem:[%s1 + $0x8] sm:$0xf]
  %v25 = vld [vmem:[%s1 + $0xc] sm:$0xf]
  %v26 = vld [vmem:[%s1 + $0x10] sm:$0xf]
  %v27 = vld [vmem:[%s1 + $0x14] sm:$0xf]
  %v28 = vld [vmem:[%s1 + $0x18] sm:$0xf]
  %v29 = vld [vmem:[%s1 + $0x1c] sm:$0xf]
  %v30 = vld [vmem:[%s1 + $0x20] sm:$0xf]
  %v31 = vld [vmem:[%s1 + $0x24] sm:$0xf]
  %v32 = vld [vmem:[%s1 + $0x28] sm:$0xf]
  %v33 = vld [vmem:[%s1 + $0x2c] sm:$0xf]
  %v34 = vld [vmem:[%s1 + $0x30] sm:$0xf]
  %v35 = vld [vmem:[%s1 + $0x34] sm:$0xf]
  %v36 = vld [vmem:[%s1 + $0x38] sm:$0xf]
  %v37 = vld [vmem:[%s1 + $0x3c] sm:$0xf]
  %v38 = vld [vmem:[%s1 + $0x40] sm:$0xf]
  %v39 = vld [vmem:[%s1 + $0x44] sm:$0xf]
  %v44 = vunpack.c.l.b16 %v18
  %v45 = vunpack.c.h.b16 %v18
  %v46 = vunpack.c.l.b16 %v19
  %v47 = vunpack.c.h.b16 %v19
  %v48 = vunpack.c.l.b16 %v20
  %v49 = vunpack.c.h.b16 %v20
  %v50 = vunpack.c.l.b16 %v21
  %v51 = vunpack.c.h.b16 %v21
  %v52 = vpack.c.b16 %v46, %v44
  %v53 = vpack.c.b16 %v47, %v45
  %v54 = vpack.c.b16 %v50, %v48
  %v55 = vpack.c.b16 %v51, %v49
  %v76 = vunpack.c.l.b16 %v22
  %v77 = vunpack.c.l.b16 %v23
  %v78 = vunpack.c.l.b16 %v24
  %v79 = vunpack.c.l.b16 %v25
  %v80 = vunpack.c.l.b16 %v26
  %v81 = vunpack.c.l.b16 %v27
  %v82 = vunpack.c.l.b16 %v28
  %v83 = vunpack.c.l.b16 %v29
  %v84 = vunpack.c.l.b16 %v30
  %v85 = vunpack.c.l.b16 %v31
  %v86 = vunpack.c.l.b16 %v32
  %v87 = vunpack.c.l.b16 %v33
  %v88 = vunpack.c.l.b16 %v34
  %v89 = vunpack.c.l.b16 %v35
  %v90 = vunpack.c.l.b16 %v36
  %v91 = vunpack.c.l.b16 %v37
  %v92 = vunpack.c.l.b16 %v38
  %v93 = vunpack.c.l.b16 %v39
  %v94 = vpack.c.b16 %v77, %v76
  %v95 = vpack.c.b16 %v79, %v78
  %v96 = vpack.c.b16 %v81, %v80
  %v97 = vpack.c.b16 %v83, %v82
  %v98 = vpack.c.b16 %v85, %v84
  %v99 = vpack.c.b16 %v87, %v86
  %v100 = vpack.c.b16 %v89, %v88
  %v101 = vpack.c.b16 %v91, %v90
  %v102 = vpack.c.b16 %v93, %v92
  %vm112 = vcmask 130048
  %v114 = vsel %vm112, %v53, 0
  %v117 = vsel %vm112, %v55, 0
  %119 = vmatprep.subr.bf16.mxu0 0
  %120 = vmatpush1.bf16.msra.mxu0 %v94
  %121 = vmatprep.subr.bf16.mxu0 0
  %122 = vmatpush1.bf16.msra.mxu0 %v95
  %123 = vmatprep.subr.bf16.mxu0 0
  %124 = vmatpush1.bf16.msra.mxu0 %v96
  %125 = vmatprep.subr.bf16.mxu0 0
  %126 = vmatpush1.bf16.msra.mxu0 %v97
  %127 = vmatprep.subr.bf16.mxu0 0
  %128 = vmatpush1.bf16.msra.mxu0 %v98
  %129 = vmatprep.subr.bf16.mxu0 0
  %130 = vmatpush1.bf16.msra.mxu0 %v99
  %131 = vmatprep.subr.bf16.mxu0 0
  %132 = vmatpush1.bf16.msra.mxu0 %v100
  %133 = vmatprep.subr.bf16.mxu0 0
  %134 = vmatpush1.bf16.msra.mxu0 %v101
  %135 = vmatprep.subr.bf16.mxu0 0
  %136 = vmatpush1.bf16.msra.mxu0 %v102
  %137 = vmatprep.subr.bf16.mxu0 0
  %138 = vmatpush1.bf16.msra.mxu0 0
  %139 = vmatprep.subr.bf16.mxu0 0
  %140 = vmatpush1.bf16.msra.mxu0 0
  %141 = vmatprep.subr.bf16.mxu0 0
  %142 = vmatpush1.bf16.msra.mxu0 0
  %143 = vmatprep.subr.bf16.mxu0 0
  %144 = vmatpush1.bf16.msra.mxu0 0
  %145 = vmatprep.subr.bf16.mxu0 0
  %146 = vmatpush1.bf16.msra.mxu0 0
  %147 = vmatprep.subr.bf16.mxu0 0
  %148 = vmatpush1.bf16.msra.mxu0 0
  %149 = vmatprep.subr.bf16.mxu0 0
  %150 = vmatpush1.bf16.msra.mxu0 0
  %151 = vmatprep.mubr.bf16.mxu0 %v114
  %152 = vmatmul.mubr.bf16.gmra.mrb[0].mxu0 %v52
  %v153 = vpop.f32.mrb[0].mxu0
  %v154 = vadd.f32 0.0, %v153
  %v155 = vpop.f32.mrb[0].mxu0
  %v156 = vpop.f32.mrb[0].mxu0
  %v157 = vadd.f32 0.0, %v156
  %v158 = vpop.f32.mrb[0].mxu0
  %159 = vmatprep.mubr.bf16.mxu0 %v117
  %160 = vmatmul.mubr.bf16.gmra.mrb[0].mxu0 %v54
  %v161 = vpop.f32.mrb[0].mxu0
  %v162 = vadd.f32 0.0, %v161
  %v163 = vpop.f32.mrb[0].mxu0
  %v164 = vpop.f32.mrb[0].mxu0
  %v165 = vadd.f32 0.0, %v164
  %v166 = vpop.f32.mrb[0].mxu0
  %167 = vdwg.mxu0
  %v168 = vld [vmem:[%s2] sm:$0x1]
  %v170 = vlaneseq
  %v171 = vshrl.u32 %v170, 7
  %v172 = vsub.s32 0, %v171
  %v173 = vrot.slane %v168, %v172
  %v175 = vmul.f32 %v154, %v173
  %v176 = vmul.f32 %v157, %v173
  %v177 = vmul.f32 %v162, %v173
  %v178 = vmul.f32 %v165, %v173
  %v179 = vld [vmem:[%s3] sm:$0x1]
  %v181 = vlaneseq
  %v182 = vshrl.u32 %v181, 7
  %v183 = vsub.s32 0, %v182
  %v184 = vrot.slane %v179, %v183
  %v186 = vadd.f32 %v175, %v184
  %v187 = vadd.f32 %v176, %v184
  %v188 = vadd.f32 %v177, %v184
  %v189 = vadd.f32 %v178, %v184
  %v190 = vmax.f32 %v186, 0.0
  %v191 = vmax.f32 %v187, 0.0
  %v192 = vmax.f32 %v188, 0.0
  %v193 = vmax.f32 %v189, 0.0
  %v194 = vpack.c.bf16 %v191, %v190
  %v195 = vpack.c.bf16 %v193, %v192
  %v198 = vunpack.c.l.b16 %v194
  %v199 = vunpack.c.h.b16 %v194
  %v200 = vunpack.c.l.b16 %v195
  %v201 = vunpack.c.h.b16 %v195
  %v202 = vpack.c.b16 %v198, %v198
  %v203 = vpack.c.b16 %v199, %v199
  %v204 = vpack.c.b16 %v200, %v200
  %v205 = vpack.c.b16 %v201, %v201
  %vm210 = vcmask 257024
  %211 = vst.msk [vmem:[%s4] sm:$0xf] %vm210, %v202
  %212 = vst.msk [vmem:[%s4 + $0x4] sm:$0xf] %vm210, %v203
  %213 = vst.msk [vmem:[%s4 + $0x8] sm:$0xf] %vm210, %v204
  %214 = vst.msk [vmem:[%s4 + $0xc] sm:$0xf] %vm210, %v205
  // Predicated region
  $region18: #{deeplab_forward.18} parent=0 // pred_check
    _
  $region19: #{deeplab_forward.18} parent=0 // pred_check_branch
    %216 = sbr.rel (0) target = $region21
  $region20: #{deeplab_forward.18} parent=0 // pred_region
    _
  $region21: #{deeplab_forward.18} parent=0 // pred_fallthru
    _
  // Predicated region
  $region22: #{deeplab_forward.18} parent=0 // pred_check
    _
  $region23: #{deeplab_forward.18} parent=0 // pred_check_branch
    %218 = sbr.rel (0) target = $region25
  $region24: #{deeplab_forward.18} parent=0 // pred_region
    _
  $region25: #{deeplab_forward.18} parent=0 // pred_fallthru
    _

// kernel: deeplab_forward.26
$region0: #{deeplab_forward.26}
  #allocation0 [shape = 'u32[]', space=smem, size = 0x4, offset = 0x4, fixed_abs, tag = 'smem constant byte address 0x4 - core index']
  #allocation1 [shape = 'u32[144,128]{1,0:T(1,128)}', space=vmem, size = 0x12000, scoped, tag = 'internal scratch']
  %s0 = inlined_call_operand.vmem [shape: bf16[128,16], index: 0, kind: input, shape index: {}]
  %s1 = inlined_call_operand.vmem [shape: bf16[16,8], index: 1, kind: input, shape index: {}]
  %s2 = inlined_call_operand.vmem [shape: f32[1,8], index: 2, kind: input, shape index: {}]
  %s3 = inlined_call_operand.vmem [shape: f32[1,8], index: 3, kind: input, shape index: {}]
  %s4 = inlined_call_operand.vmem [shape: bf16[128,8], index: 4, kind: output, shape index: {}]
  %s5 = sld [smem:[#allocation0]]
  $region26: #{deeplab_forward.26} parent=0
    _
  %s7 = ssub.s32 1, %s5
  %s8 = scalar_select 0, %s7, %s5
  // Predicated region
  $region2: #{deeplab_forward.26} parent=0 // pred_check
    _
  $region3: #{deeplab_forward.26} parent=0 // pred_check_branch
    %10 = sbr.rel (0) target = $region5
  $region4: #{deeplab_forward.26} parent=0 // pred_region
    _
  $region5: #{deeplab_forward.26} parent=0 // pred_fallthru
    _
  // Predicated region
  $region6: #{deeplab_forward.26} parent=0 // pred_check
    _
  $region7: #{deeplab_forward.26} parent=0 // pred_check_branch
    %12 = sbr.rel (0) target = $region9
  $region8: #{deeplab_forward.26} parent=0 // pred_region
    _
  $region9: #{deeplab_forward.26} parent=0 // pred_fallthru
    _
  // Predicated region
  $region10: #{deeplab_forward.26} parent=0 // pred_check
    _
  $region11: #{deeplab_forward.26} parent=0 // pred_check_branch
    %14 = sbr.rel (0) target = $region13
  $region12: #{deeplab_forward.26} parent=0 // pred_region
    _
  $region13: #{deeplab_forward.26} parent=0 // pred_fallthru
    _
  // Predicated region
  $region14: #{deeplab_forward.26} parent=0 // pred_check
    _
  $region15: #{deeplab_forward.26} parent=0 // pred_check_branch
    %16 = sbr.rel (0) target = $region17
  $region16: #{deeplab_forward.26} parent=0 // pred_region
    _
  $region17: #{deeplab_forward.26} parent=0 // pred_fallthru
    _
  %v18 = vld [vmem:[%s0] sm:$0xf]
  %v19 = vld [vmem:[%s0 + $0x4] sm:$0xf]
  %v20 = vld [vmem:[%s0 + $0x8] sm:$0xf]
  %v21 = vld [vmem:[%s0 + $0xc] sm:$0xf]
  %v22 = vld [vmem:[%s0 + $0x10] sm:$0xf]
  %v23 = vld [vmem:[%s0 + $0x14] sm:$0xf]
  %v24 = vld [vmem:[%s0 + $0x18] sm:$0xf]
  %v25 = vld [vmem:[%s0 + $0x1c] sm:$0xf]
  %v26 = vld [vmem:[%s0 + $0x20] sm:$0xf]
  %v27 = vld [vmem:[%s0 + $0x24] sm:$0xf]
  %v28 = vld [vmem:[%s0 + $0x28] sm:$0xf]
  %v29 = vld [vmem:[%s0 + $0x2c] sm:$0xf]
  %v30 = vld [vmem:[%s0 + $0x30] sm:$0xf]
  %v31 = vld [vmem:[%s0 + $0x34] sm:$0xf]
  %v32 = vld [vmem:[%s0 + $0x38] sm:$0xf]
  %v33 = vld [vmem:[%s0 + $0x3c] sm:$0xf]
  %v34 = vld [vmem:[%s1] sm:$0xf]
  %v35 = vld [vmem:[%s1 + $0x4] sm:$0xf]
  %v52 = vunpack.c.l.b16 %v18
  %v53 = vunpack.c.l.b16 %v19
  %v54 = vunpack.c.l.b16 %v20
  %v55 = vunpack.c.l.b16 %v21
  %v56 = vunpack.c.l.b16 %v22
  %v57 = vunpack.c.l.b16 %v23
  %v58 = vunpack.c.l.b16 %v24
  %v59 = vunpack.c.l.b16 %v25
  %v60 = vunpack.c.l.b16 %v26
  %v61 = vunpack.c.l.b16 %v27
  %v62 = vunpack.c.l.b16 %v28
  %v63 = vunpack.c.l.b16 %v29
  %v64 = vunpack.c.l.b16 %v30
  %v65 = vunpack.c.l.b16 %v31
  %v66 = vunpack.c.l.b16 %v32
  %v67 = vunpack.c.l.b16 %v33
  %v68 = vpack.c.b16 %v53, %v52
  %v69 = vpack.c.b16 %v55, %v54
  %v70 = vpack.c.b16 %v57, %v56
  %v71 = vpack.c.b16 %v59, %v58
  %v72 = vpack.c.b16 %v61, %v60
  %v73 = vpack.c.b16 %v63, %v62
  %v74 = vpack.c.b16 %v65, %v64
  %v75 = vpack.c.b16 %v67, %v66
  %v78 = vunpack.c.l.b16 %v34
  %v79 = vunpack.c.l.b16 %v35
  %v80 = vpack.c.b16 %v79, %v78
  %vm82 = vcmask 130048
  %v84 = vsel %vm82, %v68, 0
  %v87 = vsel %vm82, %v69, 0
  %v90 = vsel %vm82, %v70, 0
  %v93 = vsel %vm82, %v71, 0
  %v96 = vsel %vm82, %v72, 0
  %v99 = vsel %vm82, %v73, 0
  %v102 = vsel %vm82, %v74, 0
  %v105 = vsel %vm82, %v75, 0
  %107 = vmatprep.subr.bf16.mxu0 0
  %108 = vmatpush1.bf16.msra.mxu0 %v80
  %109 = vmatprep.subr.bf16.mxu0 0
  %110 = vmatpush1.bf16.msra.mxu0 0
  %111 = vmatprep.subr.bf16.mxu0 0
  %112 = vmatpush1.bf16.msra.mxu0 0
  %113 = vmatprep.subr.bf16.mxu0 0
  %114 = vmatpush1.bf16.msra.mxu0 0
  %115 = vmatprep.subr.bf16.mxu0 0
  %116 = vmatpush1.bf16.msra.mxu0 0
  %117 = vmatprep.subr.bf16.mxu0 0
  %118 = vmatpush1.bf16.msra.mxu0 0
  %119 = vmatprep.subr.bf16.mxu0 0
  %120 = vmatpush1.bf16.msra.mxu0 0
  %121 = vmatprep.subr.bf16.mxu0 0
  %122 = vmatpush1.bf16.msra.mxu0 0
  %123 = vmatprep.subr.bf16.mxu0 0
  %124 = vmatpush1.bf16.msra.mxu0 0
  %125 = vmatprep.subr.bf16.mxu0 0
  %126 = vmatpush1.bf16.msra.mxu0 0
  %127 = vmatprep.subr.bf16.mxu0 0
  %128 = vmatpush1.bf16.msra.mxu0 0
  %129 = vmatprep.subr.bf16.mxu0 0
  %130 = vmatpush1.bf16.msra.mxu0 0
  %131 = vmatprep.subr.bf16.mxu0 0
  %132 = vmatpush1.bf16.msra.mxu0 0
  %133 = vmatprep.subr.bf16.mxu0 0
  %134 = vmatpush1.bf16.msra.mxu0 0
  %135 = vmatprep.subr.bf16.mxu0 0
  %136 = vmatpush1.bf16.msra.mxu0 0
  %137 = vmatprep.subr.bf16.mxu0 0
  %138 = vmatpush1.bf16.msra.mxu0 0
  %139 = vmatprep.mubr.bf16.mxu0 0
  %140 = vmatmul.mubr.bf16.gmra.mrb[0].mxu0 %v84
  %v141 = vpop.f32.mrb[0].mxu0
  %v142 = vadd.f32 0.0, %v141
  %v143 = vpop.f32.mrb[0].mxu0
  %v144 = vpop.f32.mrb[0].mxu0
  %v145 = vadd.f32 0.0, %v144
  %v146 = vpop.f32.mrb[0].mxu0
  %147 = vmatprep.mubr.bf16.mxu0 0
  %148 = vmatmul.mubr.bf16.gmra.mrb[0].mxu0 %v87
  %v149 = vpop.f32.mrb[0].mxu0
  %v150 = vadd.f32 0.0, %v149
  %v151 = vpop.f32.mrb[0].mxu0
  %v152 = vpop.f32.mrb[0].mxu0
  %v153 = vadd.f32 0.0, %v152
  %v154 = vpop.f32.mrb[0].mxu0
  %155 = vmatprep.mubr.bf16.mxu0 0
  %156 = vmatmul.mubr.bf16.gmra.mrb[0].mxu0 %v90
  %v157 = vpop.f32.mrb[0].mxu0
  %v158 = vadd.f32 0.0, %v157
  %v159 = vpop.f32.mrb[0].mxu0
  %v160 = vpop.f32.mrb[0].mxu0
  %v161 = vadd.f32 0.0, %v160
  %v162 = vpop.f32.mrb[0].mxu0
  %163 = vmatprep.mubr.bf16.mxu0 0
  %164 = vmatmul.mubr.bf16.gmra.mrb[0].mxu0 %v93
  %v165 = vpop.f32.mrb[0].mxu0
  %v166 = vadd.f32 0.0, %v165
  %v167 = vpop.f32.mrb[0].mxu0
  %v168 = vpop.f32.mrb[0].mxu0
  %v169 = vadd.f32 0.0, %v168
  %v170 = vpop.f32.mrb[0].mxu0
  %171 = vmatprep.mubr.bf16.mxu0 0
  %172 = vmatmul.mubr.bf16.gmra.mrb[0].mxu0 %v96
  %v173 = vpop.f32.mrb[0].mxu0
  %v174 = vadd.f32 0.0, %v173
  %v175 = vpop.f32.mrb[0].mxu0
  %v176 = vpop.f32.mrb[0].mxu0
  %v177 = vadd.f32 0.0, %v176
  %v178 = vpop.f32.mrb[0].mxu0
  %179 = vmatprep.mubr.bf16.mxu0 0
  %180 = vmatmul.mubr.bf16.gmra.mrb[0].mxu0 %v99
  %v181 = vpop.f32.mrb[0].mxu0
  %v182 = vadd.f32 0.0, %v181
  %v183 = vpop.f32.mrb[0].mxu0
  %v184 = vpop.f32.mrb[0].mxu0
  %v185 = vadd.f32 0.0, %v184
  %v186 = vpop.f32.mrb[0].mxu0
  %187 = vmatprep.mubr.bf16.mxu0 0
  %188 = vmatmul.mubr.bf16.gmra.mrb[0].mxu0 %v102
  %v189 = vpop.f32.mrb[0].mxu0
  %v190 = vadd.f32 0.0, %v189
  %v191 = vpop.f32.mrb[0].mxu0
  %v192 = vpop.f32.mrb[0].mxu0
  %v193 = vadd.f32 0.0, %v192
  %v194 = vpop.f32.mrb[0].mxu0
  %195 = vmatprep.mubr.bf16.mxu0 0
  %196 = vmatmul.mubr.bf16.gmra.mrb[0].mxu0 %v105
  %v197 = vpop.f32.mrb[0].mxu0
  %v198 = vadd.f32 0.0, %v197
  %v199 = vpop.f32.mrb[0].mxu0
  %v200 = vpop.f32.mrb[0].mxu0
  %v201 = vadd.f32 0.0, %v200
  %v202 = vpop.f32.mrb[0].mxu0
  %203 = vdwg.mxu0
  %v204 = vld [vmem:[%s2] sm:$0x1]
  %v206 = vlaneseq
  %v207 = vshrl.u32 %v206, 7
  %v208 = vsub.s32 0, %v207
  %v209 = vrot.slane %v204, %v208
  %v211 = vmul.f32 %v142, %v209
  %v212 = vmul.f32 %v145, %v209
  %v213 = vmul.f32 %v150, %v209
  %v214 = vmul.f32 %v153, %v209
  %v215 = vmul.f32 %v158, %v209
  %v216 = vmul.f32 %v161, %v209
  %v217 = vmul.f32 %v166, %v209
  %v218 = vmul.f32 %v169, %v209
  %v219 = vmul.f32 %v174, %v209
  %v220 = vmul.f32 %v177, %v209
  %v221 = vmul.f32 %v182, %v209
  %v222 = vmul.f32 %v185, %v209
  %v223 = vmul.f32 %v190, %v209
  %v224 = vmul.f32 %v193, %v209
  %v225 = vmul.f32 %v198, %v209
  %v226 = vmul.f32 %v201, %v209
  %v227 = vld [vmem:[%s3] sm:$0x1]
  %v229 = vlaneseq
  %v230 = vshrl.u32 %v229, 7
  %v231 = vsub.s32 0, %v230
  %v232 = vrot.slane %v227, %v231
  %v234 = vadd.f32 %v211, %v232
  %v235 = vadd.f32 %v212, %v232
  %v236 = vadd.f32 %v213, %v232
  %v237 = vadd.f32 %v214, %v232
  %v238 = vadd.f32 %v215, %v232
  %v239 = vadd.f32 %v216, %v232
  %v240 = vadd.f32 %v217, %v232
  %v241 = vadd.f32 %v218, %v232
  %v242 = vadd.f32 %v219, %v232
  %v243 = vadd.f32 %v220, %v232
  %v244 = vadd.f32 %v221, %v232
  %v245 = vadd.f32 %v222, %v232
  %v246 = vadd.f32 %v223, %v232
  %v247 = vadd.f32 %v224, %v232
  %v248 = vadd.f32 %v225, %v232
  %v249 = vadd.f32 %v226, %v232
  %v250 = vmax.f32 %v234, 0.0
  %v251 = vmax.f32 %v235, 0.0
  %v252 = vmax.f32 %v236, 0.0
  %v253 = vmax.f32 %v237, 0.0
  %v254 = vmax.f32 %v238, 0.0
  %v255 = vmax.f32 %v239, 0.0
  %v256 = vmax.f32 %v240, 0.0
  %v257 = vmax.f32 %v241, 0.0
  %v258 = vmax.f32 %v242, 0.0
  %v259 = vmax.f32 %v243, 0.0
  %v260 = vmax.f32 %v244, 0.0
  %v261 = vmax.f32 %v245, 0.0
  %v262 = vmax.f32 %v246, 0.0
  %v263 = vmax.f32 %v247, 0.0
  %v264 = vmax.f32 %v248, 0.0
  %v265 = vmax.f32 %v249, 0.0
  %v266 = vpack.c.bf16 %v251, %v250
  %v267 = vpack.c.bf16 %v253, %v252
  %v268 = vpack.c.bf16 %v255, %v254
  %v269 = vpack.c.bf16 %v257, %v256
  %v270 = vpack.c.bf16 %v259, %v258
  %v271 = vpack.c.bf16 %v261, %v260
  %v272 = vpack.c.bf16 %v263, %v262
  %v273 = vpack.c.bf16 %v265, %v264
  %v282 = vunpack.c.l.b16 %v266
  %v283 = vunpack.c.h.b16 %v266
  %v284 = vunpack.c.l.b16 %v267
  %v285 = vunpack.c.h.b16 %v267
  %v286 = vunpack.c.l.b16 %v268
  %v287 = vunpack.c.h.b16 %v268
  %v288 = vunpack.c.l.b16 %v269
  %v289 = vunpack.c.h.b16 %v269
  %v290 = vunpack.c.l.b16 %v270
  %v291 = vunpack.c.h.b16 %v270
  %v292 = vunpack.c.l.b16 %v271
  %v293 = vunpack.c.h.b16 %v271
  %v294 = vunpack.c.l.b16 %v272
  %v295 = vunpack.c.h.b16 %v272
  %v296 = vunpack.c.l.b16 %v273
  %v297 = vunpack.c.h.b16 %v273
  %v298 = vpack.c.b16 %v282, %v282
  %v299 = vpack.c.b16 %v283, %v283
  %v300 = vpack.c.b16 %v284, %v284
  %v301 = vpack.c.b16 %v285, %v285
  %v302 = vpack.c.b16 %v286, %v286
  %v303 = vpack.c.b16 %v287, %v287
  %v304 = vpack.c.b16 %v288, %v288
  %v305 = vpack.c.b16 %v289, %v289
  %v306 = vpack.c.b16 %v290, %v290
  %v307 = vpack.c.b16 %v291, %v291
  %v308 = vpack.c.b16 %v292, %v292
  %v309 = vpack.c.b16 %v293, %v293
  %v310 = vpack.c.b16 %v294, %v294
  %v311 = vpack.c.b16 %v295, %v295
  %v312 = vpack.c.b16 %v296, %v296
  %v313 = vpack.c.b16 %v297, %v297
  %vm330 = vcmask 60416
  %331 = vst.msk [vmem:[%s4] sm:$0xf] %vm330, %v298
  %332 = vst.msk [vmem:[%s4 + $0x4] sm:$0xf] %vm330, %v299
  %333 = vst.msk [vmem:[%s4 + $0x8] sm:$0xf] %vm330, %v300
  %334 = vst.msk [vmem:[%s4 + $0xc] sm:$0xf] %vm330, %v301
  %335 = vst.msk [vmem:[%s4 + $0x10] sm:$0xf] %vm330, %v302
  %336 = vst.msk [vmem:[%s4 + $0x14] sm:$0xf] %vm330, %v303
  %337 = vst.msk [vmem:[%s4 + $0x18] sm:$0xf] %vm330, %v304
  %338 = vst.msk [vmem:[%s4 + $0x1c] sm:$0xf] %vm330, %v305
  %339 = vst.msk [vmem:[%s4 + $0x20] sm:$0xf] %vm330, %v306
  %340 = vst.msk [vmem:[%s4 + $0x24] sm:$0xf] %vm330, %v307
  %341 = vst.msk [vmem:[%s4 + $0x28] sm:$0xf] %vm330, %v308
  %342 = vst.msk [vmem:[%s4 + $0x2c] sm:$0xf] %vm330, %v309
  %343 = vst.msk [vmem:[%s4 + $0x30] sm:$0xf] %vm330, %v310
  %344 = vst.msk [vmem:[%s4 + $0x34] sm:$0xf] %vm330, %v311
  %345 = vst.msk [vmem:[%s4 + $0x38] sm:$0xf] %vm330, %v312
  %346 = vst.msk [vmem:[%s4 + $0x3c] sm:$0xf] %vm330, %v313
  // Predicated region
  $region18: #{deeplab_forward.26} parent=0 // pred_check
    _
  $region19: #{deeplab_forward.26} parent=0 // pred_check_branch
    %348 = sbr.rel (0) target = $region21
  $region20: #{deeplab_forward.26} parent=0 // pred_region
    _
  $region21: #{deeplab_forward.26} parent=0 // pred_fallthru
    _
  // Predicated region
  $region22: #{deeplab_forward.26} parent=0 // pred_check
    _
  $region23: #{deeplab_forward.26} parent=0 // pred_check_branch
    %350 = sbr.rel (0) target = $region25
  $region24: #{deeplab_forward.26} parent=0 // pred_region
    _
  $region25: #{deeplab_forward.26} parent=0 // pred_fallthru
    _

// kernel: deeplab_forward.19
$region0: #{deeplab_forward.19}
  #allocation0 [shape = 'u32[]', space=smem, size = 0x4, offset = 0x4, fixed_abs, tag = 'smem constant byte address 0x4 - core index']
  #allocation1 [shape = 'u32[144,128]{1,0:T(1,128)}', space=vmem, size = 0x12000, scoped, tag = 'internal scratch']
  %s0 = inlined_call_operand.vmem [shape: bf16[8,288], index: 0, kind: input, shape index: {}]
  %s1 = inlined_call_operand.vmem [shape: bf16[288,32], index: 1, kind: input, shape index: {}]
  %s2 = inlined_call_operand.vmem [shape: f32[1,32], index: 2, kind: input, shape index: {}]
  %s3 = inlined_call_operand.vmem [shape: f32[1,32], index: 3, kind: input, shape index: {}]
  %s4 = inlined_call_operand.vmem [shape: bf16[8,32], index: 4, kind: output, shape index: {}]
  %s5 = sld [smem:[#allocation0]]
  $region26: #{deeplab_forward.19} parent=0
    _
  %s7 = ssub.s32 1, %s5
  %s8 = scalar_select 0, %s7, %s5
  // Predicated region
  $region2: #{deeplab_forward.19} parent=0 // pred_check
    _
  $region3: #{deeplab_forward.19} parent=0 // pred_check_branch
    %10 = sbr.rel (0) target = $region5
  $region4: #{deeplab_forward.19} parent=0 // pred_region
    _
  $region5: #{deeplab_forward.19} parent=0 // pred_fallthru
    _
  // Predicated region
  $region6: #{deeplab_forward.19} parent=0 // pred_check
    _
  $region7: #{deeplab_forward.19} parent=0 // pred_check_branch
    %12 = sbr.rel (0) target = $region9
  $region8: #{deeplab_forward.19} parent=0 // pred_region
    _
  $region9: #{deeplab_forward.19} parent=0 // pred_fallthru
    _
  // Predicated region
  $region10: #{deeplab_forward.19} parent=0 // pred_check
    _
  $region11: #{deeplab_forward.19} parent=0 // pred_check_branch
    %14 = sbr.rel (0) target = $region13
  $region12: #{deeplab_forward.19} parent=0 // pred_region
    _
  $region13: #{deeplab_forward.19} parent=0 // pred_fallthru
    _
  // Predicated region
  $region14: #{deeplab_forward.19} parent=0 // pred_check
    _
  $region15: #{deeplab_forward.19} parent=0 // pred_check_branch
    %16 = sbr.rel (0) target = $region17
  $region16: #{deeplab_forward.19} parent=0 // pred_region
    _
  $region17: #{deeplab_forward.19} parent=0 // pred_fallthru
    _
  %v18 = vld [vmem:[%s0] sm:$0xff]
  %v19 = vld [vmem:[%s0 + $0x8] sm:$0xf]
  %v20 = vld [vmem:[%s1] sm:$0xf]
  %v21 = vld [vmem:[%s1 + $0x4] sm:$0xf]
  %v22 = vld [vmem:[%s1 + $0x8] sm:$0xf]
  %v23 = vld [vmem:[%s1 + $0xc] sm:$0xf]
  %v24 = vld [vmem:[%s1 + $0x10] sm:$0xf]
  %v25 = vld [vmem:[%s1 + $0x14] sm:$0xf]
  %v26 = vld [vmem:[%s1 + $0x18] sm:$0xf]
  %v27 = vld [vmem:[%s1 + $0x1c] sm:$0xf]
  %v28 = vld [vmem:[%s1 + $0x20] sm:$0xf]
  %v29 = vld [vmem:[%s1 + $0x24] sm:$0xf]
  %v30 = vld [vmem:[%s1 + $0x28] sm:$0xf]
  %v31 = vld [vmem:[%s1 + $0x2c] sm:$0xf]
  %v32 = vld [vmem:[%s1 + $0x30] sm:$0xf]
  %v33 = vld [vmem:[%s1 + $0x34] sm:$0xf]
  %v34 = vld [vmem:[%s1 + $0x38] sm:$0xf]
  %v35 = vld [vmem:[%s1 + $0x3c] sm:$0xf]
  %v36 = vld [vmem:[%s1 + $0x40] sm:$0xf]
  %v37 = vld [vmem:[%s1 + $0x44] sm:$0xf]
  %v38 = vld [vmem:[%s1 + $0x48] sm:$0xf]
  %v39 = vld [vmem:[%s1 + $0x4c] sm:$0xf]
  %v40 = vld [vmem:[%s1 + $0x50] sm:$0xf]
  %v41 = vld [vmem:[%s1 + $0x54] sm:$0xf]
  %v42 = vld [vmem:[%s1 + $0x58] sm:$0xf]
  %v43 = vld [vmem:[%s1 + $0x5c] sm:$0xf]
  %v44 = vld [vmem:[%s1 + $0x60] sm:$0xf]
  %v45 = vld [vmem:[%s1 + $0x64] sm:$0xf]
  %v46 = vld [vmem:[%s1 + $0x68] sm:$0xf]
  %v47 = vld [vmem:[%s1 + $0x6c] sm:$0xf]
  %v48 = vld [vmem:[%s1 + $0x70] sm:$0xf]
  %v49 = vld [vmem:[%s1 + $0x74] sm:$0xf]
  %v50 = vld [vmem:[%s1 + $0x78] sm:$0xf]
  %v51 = vld [vmem:[%s1 + $0x7c] sm:$0xf]
  %v52 = vld [vmem:[%s1 + $0x80] sm:$0xf]
  %v53 = vld [vmem:[%s1 + $0x84] sm:$0xf]
  %v54 = vld [vmem:[%s1 + $0x88] sm:$0xf]
  %v55 = vld [vmem:[%s1 + $0x8c] sm:$0xf]
  %v58 = vunpack.c.l.b16 %v18
  %v59 = vunpack.c.h.b16 %v18
  %v60 = vunpack.c.l.b16 %v19
  %v61 = vpack.c.b16 %v58, %v58
  %v62 = vpack.c.b16 %v59, %v59
  %v63 = vpack.c.b16 %v60, %v60
  %v102 = vunpack.c.l.b16 %v20
  %v103 = vunpack.c.l.b16 %v21
  %v104 = vunpack.c.l.b16 %v22
  %v105 = vunpack.c.l.b16 %v23
  %v106 = vunpack.c.l.b16 %v24
  %v107 = vunpack.c.l.b16 %v25
  %v108 = vunpack.c.l.b16 %v26
  %v109 = vunpack.c.l.b16 %v27
  %v110 = vunpack.c.l.b16 %v28
  %v111 = vunpack.c.l.b16 %v29
  %v112 = vunpack.c.l.b16 %v30
  %v113 = vunpack.c.l.b16 %v31
  %v114 = vunpack.c.l.b16 %v32
  %v115 = vunpack.c.l.b16 %v33
  %v116 = vunpack.c.l.b16 %v34
  %v117 = vunpack.c.l.b16 %v35
  %v118 = vunpack.c.l.b16 %v36
  %v119 = vunpack.c.l.b16 %v37
  %v120 = vunpack.c.l.b16 %v38
  %v121 = vunpack.c.l.b16 %v39
  %v122 = vunpack.c.l.b16 %v40
  %v123 = vunpack.c.l.b16 %v41
  %v124 = vunpack.c.l.b16 %v42
  %v125 = vunpack.c.l.b16 %v43
  %v126 = vunpack.c.l.b16 %v44
  %v127 = vunpack.c.l.b16 %v45
  %v128 = vunpack.c.l.b16 %v46
  %v129 = vunpack.c.l.b16 %v47
  %v130 = vunpack.c.l.b16 %v48
  %v131 = vunpack.c.l.b16 %v49
  %v132 = vunpack.c.l.b16 %v50
  %v133 = vunpack.c.l.b16 %v51
  %v134 = vunpack.c.l.b16 %v52
  %v135 = vunpack.c.l.b16 %v53
  %v136 = vunpack.c.l.b16 %v54
  %v137 = vunpack.c.l.b16 %v55
  %v138 = vpack.c.b16 %v103, %v102
  %v139 = vpack.c.b16 %v105, %v104
  %v140 = vpack.c.b16 %v107, %v106
  %v141 = vpack.c.b16 %v109, %v108
  %v142 = vpack.c.b16 %v111, %v110
  %v143 = vpack.c.b16 %v113, %v112
  %v144 = vpack.c.b16 %v115, %v114
  %v145 = vpack.c.b16 %v117, %v116
  %v146 = vpack.c.b16 %v119, %v118
  %v147 = vpack.c.b16 %v121, %v120
  %v148 = vpack.c.b16 %v123, %v122
  %v149 = vpack.c.b16 %v125, %v124
  %v150 = vpack.c.b16 %v127, %v126
  %v151 = vpack.c.b16 %v129, %v128
  %v152 = vpack.c.b16 %v131, %v130
  %v153 = vpack.c.b16 %v133, %v132
  %v154 = vpack.c.b16 %v135, %v134
  %v155 = vpack.c.b16 %v137, %v136
  %vm174 = vcmask 261120
  %v176 = vsel %vm174, %v63, 0
  %178 = vmatprep.subr.bf16.mxu0 0
  %179 = vmatpush1.bf16.msra.mxu0 %v138
  %180 = vmatprep.subr.bf16.mxu0 0
  %181 = vmatpush1.bf16.msra.mxu0 %v139
  %182 = vmatprep.subr.bf16.mxu0 0
  %183 = vmatpush1.bf16.msra.mxu0 %v140
  %184 = vmatprep.subr.bf16.mxu0 0
  %185 = vmatpush1.bf16.msra.mxu0 %v141
  %186 = vmatprep.subr.bf16.mxu0 0
  %187 = vmatpush1.bf16.msra.mxu0 %v142
  %188 = vmatprep.subr.bf16.mxu0 0
  %189 = vmatpush1.bf16.msra.mxu0 %v143
  %190 = vmatprep.subr.bf16.mxu0 0
  %191 = vmatpush1.bf16.msra.mxu0 %v144
  %192 = vmatprep.subr.bf16.mxu0 0
  %193 = vmatpush1.bf16.msra.mxu0 %v145
  %194 = vmatprep.subr.bf16.mxu0 0
  %195 = vmatpush1.bf16.msra.mxu0 %v146
  %196 = vmatprep.subr.bf16.mxu0 0
  %197 = vmatpush1.bf16.msra.mxu0 %v147
  %198 = vmatprep.subr.bf16.mxu0 0
  %199 = vmatpush1.bf16.msra.mxu0 %v148
  %200 = vmatprep.subr.bf16.mxu0 0
  %201 = vmatpush1.bf16.msra.mxu0 %v149
  %202 = vmatprep.subr.bf16.mxu0 0
  %203 = vmatpush1.bf16.msra.mxu0 %v150
  %204 = vmatprep.subr.bf16.mxu0 0
  %205 = vmatpush1.bf16.msra.mxu0 %v151
  %206 = vmatprep.subr.bf16.mxu0 0
  %207 = vmatpush1.bf16.msra.mxu0 %v152
  %208 = vmatprep.subr.bf16.mxu0 0
  %209 = vmatpush1.bf16.msra.mxu0 %v153
  %210 = vmatprep.mubr.bf16.mxu0 %v62
  %211 = vmatmul.mubr.bf16.gmra.mrb[0].mxu0 %v61
  %v212 = vpop.f32.mrb[0].mxu0
  %v213 = vadd.f32 0.0, %v212
  %v214 = vpop.f32.mrb[0].mxu0
  %v215 = vpop.f32.mrb[0].mxu0
  %v216 = vpop.f32.mrb[0].mxu0
  %217 = vdwg.mxu0
  %218 = vmatprep.subr.bf16.mxu0 0
  %219 = vmatpush1.bf16.msra.mxu0 %v154
  %220 = vmatprep.subr.bf16.mxu0 0
  %221 = vmatpush1.bf16.msra.mxu0 %v155
  %222 = vmatprep.subr.bf16.mxu0 0
  %223 = vmatpush1.bf16.msra.mxu0 0
  %224 = vmatprep.subr.bf16.mxu0 0
  %225 = vmatpush1.bf16.msra.mxu0 0
  %226 = vmatprep.subr.bf16.mxu0 0
  %227 = vmatpush1.bf16.msra.mxu0 0
  %228 = vmatprep.subr.bf16.mxu0 0
  %229 = vmatpush1.bf16.msra.mxu0 0
  %230 = vmatprep.subr.bf16.mxu0 0
  %231 = vmatpush1.bf16.msra.mxu0 0
  %232 = vmatprep.subr.bf16.mxu0 0
  %233 = vmatpush1.bf16.msra.mxu0 0
  %234 = vmatprep.subr.bf16.mxu0 0
  %235 = vmatpush1.bf16.msra.mxu0 0
  %236 = vmatprep.subr.bf16.mxu0 0
  %237 = vmatpush1.bf16.msra.mxu0 0
  %238 = vmatprep.subr.bf16.mxu0 0
  %239 = vmatpush1.bf16.msra.mxu0 0
  %240 = vmatprep.subr.bf16.mxu0 0
  %241 = vmatpush1.bf16.msra.mxu0 0
  %242 = vmatprep.subr.bf16.mxu0 0
  %243 = vmatpush1.bf16.msra.mxu0 0
  %244 = vmatprep.subr.bf16.mxu0 0
  %245 = vmatpush1.bf16.msra.mxu0 0
  %246 = vmatprep.subr.bf16.mxu0 0
  %247 = vmatpush1.bf16.msra.mxu0 0
  %248 = vmatprep.subr.bf16.mxu0 0
  %249 = vmatpush1.bf16.msra.mxu0 0
  %250 = vmatprep.mubr.bf16.mxu0 0
  %251 = vmatmul.mubr.bf16.gmra.mrb[0].mxu0 %v176
  %v252 = vpop.f32.mrb[0].mxu0
  %v253 = vadd.f32 %v213, %v252
  %v254 = vpop.f32.mrb[0].mxu0
  %v255 = vpop.f32.mrb[0].mxu0
  %v256 = vpop.f32.mrb[0].mxu0
  %257 = vdwg.mxu0
  %v258 = vld [vmem:[%s2] sm:$0x1]
  %v260 = vlaneseq
  %v261 = vshrl.u32 %v260, 7
  %v262 = vsub.s32 0, %v261
  %v263 = vrot.slane %v258, %v262
  %v265 = vmul.f32 %v253, %v263
  %v266 = vld [vmem:[%s3] sm:$0x1]
  %v268 = vlaneseq
  %v269 = vshrl.u32 %v268, 7
  %v270 = vsub.s32 0, %v269
  %v271 = vrot.slane %v266, %v270
  %v273 = vadd.f32 %v265, %v271
  %v274 = vmax.f32 %v273, 0.0
  %v275 = vpack.c.bf16 %v274, %v274
  %vm276 = vcmask 257024
  %277 = vst.msk [vmem:[%s4] sm:$0xf] %vm276, %v275
  // Predicated region
  $region18: #{deeplab_forward.19} parent=0 // pred_check
    _
  $region19: #{deeplab_forward.19} parent=0 // pred_check_branch
    %279 = sbr.rel (0) target = $region21
  $region20: #{deeplab_forward.19} parent=0 // pred_region
    _
  $region21: #{deeplab_forward.19} parent=0 // pred_fallthru
    _
  // Predicated region
  $region22: #{deeplab_forward.19} parent=0 // pred_check
    _
  $region23: #{deeplab_forward.19} parent=0 // pred_check_branch
    %281 = sbr.rel (0) target = $region25
  $region24: #{deeplab_forward.19} parent=0 // pred_region
    _
  $region25: #{deeplab_forward.19} parent=0 // pred_fallthru
    _

// kernel: deeplab_forward.24
$region0: #{deeplab_forward.24}
  #allocation0 [shape = 'u32[]', space=smem, size = 0x4, offset = 0x4, fixed_abs, tag = 'smem constant byte address 0x4 - core index']
  #allocation1 [shape = 'u32[144,128]{1,0:T(1,128)}', space=vmem, size = 0x12000, scoped, tag = 'internal scratch']
  %s0 = inlined_call_operand.vmem [shape: bf16[8,32], index: 0, kind: input, shape index: {}]
  %s1 = inlined_call_operand.vmem [shape: bf16[32,16], index: 1, kind: input, shape index: {}]
  %s2 = inlined_call_operand.vmem [shape: f32[1,16], index: 2, kind: input, shape index: {}]
  %s3 = inlined_call_operand.vmem [shape: f32[1,16], index: 3, kind: input, shape index: {}]
  %s4 = inlined_call_operand.vmem [shape: bf16[8,16], index: 4, kind: output, shape index: {}]
  %s5 = sld [smem:[#allocation0]]
  $region26: #{deeplab_forward.24} parent=0
    _
  %s7 = ssub.s32 1, %s5
  %s8 = scalar_select 0, %s7, %s5
  // Predicated region
  $region2: #{deeplab_forward.24} parent=0 // pred_check
    _
  $region3: #{deeplab_forward.24} parent=0 // pred_check_branch
    %10 = sbr.rel (0) target = $region5
  $region4: #{deeplab_forward.24} parent=0 // pred_region
    _
  $region5: #{deeplab_forward.24} parent=0 // pred_fallthru
    _
  // Predicated region
  $region6: #{deeplab_forward.24} parent=0 // pred_check
    _
  $region7: #{deeplab_forward.24} parent=0 // pred_check_branch
    %12 = sbr.rel (0) target = $region9
  $region8: #{deeplab_forward.24} parent=0 // pred_region
    _
  $region9: #{deeplab_forward.24} parent=0 // pred_fallthru
    _
  // Predicated region
  $region10: #{deeplab_forward.24} parent=0 // pred_check
    _
  $region11: #{deeplab_forward.24} parent=0 // pred_check_branch
    %14 = sbr.rel (0) target = $region13
  $region12: #{deeplab_forward.24} parent=0 // pred_region
    _
  $region13: #{deeplab_forward.24} parent=0 // pred_fallthru
    _
  // Predicated region
  $region14: #{deeplab_forward.24} parent=0 // pred_check
    _
  $region15: #{deeplab_forward.24} parent=0 // pred_check_branch
    %16 = sbr.rel (0) target = $region17
  $region16: #{deeplab_forward.24} parent=0 // pred_region
    _
  $region17: #{deeplab_forward.24} parent=0 // pred_fallthru
    _
  %v18 = vld [vmem:[%s0] sm:$0xf]
  %v19 = vld [vmem:[%s1] sm:$0xf]
  %v20 = vld [vmem:[%s1 + $0x4] sm:$0xf]
  %v21 = vld [vmem:[%s1 + $0x8] sm:$0xf]
  %v22 = vld [vmem:[%s1 + $0xc] sm:$0xf]
  %v27 = vunpack.c.l.b16 %v19
  %v28 = vunpack.c.l.b16 %v20
  %v29 = vunpack.c.l.b16 %v21
  %v30 = vunpack.c.l.b16 %v22
  %v31 = vpack.c.b16 %v28, %v27
  %v32 = vpack.c.b16 %v30, %v29
  %vm35 = vcmask 261120
  %v37 = vsel %vm35, %v18, 0
  %39 = vmatprep.subr.bf16.mxu0 0
  %40 = vmatpush1.bf16.msra.mxu0 %v31
  %41 = vmatprep.subr.bf16.mxu0 0
  %42 = vmatpush1.bf16.msra.mxu0 %v32
  %43 = vmatprep.subr.bf16.mxu0 0
  %44 = vmatpush1.bf16.msra.mxu0 0
  %45 = vmatprep.subr.bf16.mxu0 0
  %46 = vmatpush1.bf16.msra.mxu0 0
  %47 = vmatprep.subr.bf16.mxu0 0
  %48 = vmatpush1.bf16.msra.mxu0 0
  %49 = vmatprep.subr.bf16.mxu0 0
  %50 = vmatpush1.bf16.msra.mxu0 0
  %51 = vmatprep.subr.bf16.mxu0 0
  %52 = vmatpush1.bf16.msra.mxu0 0
  %53 = vmatprep.subr.bf16.mxu0 0
  %54 = vmatpush1.bf16.msra.mxu0 0
  %55 = vmatprep.subr.bf16.mxu0 0
  %56 = vmatpush1.bf16.msra.mxu0 0
  %57 = vmatprep.subr.bf16.mxu0 0
  %58 = vmatpush1.bf16.msra.mxu0 0
  %59 = vmatprep.subr.bf16.mxu0 0
  %60 = vmatpush1.bf16.msra.mxu0 0
  %61 = vmatprep.subr.bf16.mxu0 0
  %62 = vmatpush1.bf16.msra.mxu0 0
  %63 = vmatprep.subr.bf16.mxu0 0
  %64 = vmatpush1.bf16.msra.mxu0 0
  %65 = vmatprep.subr.bf16.mxu0 0
  %66 = vmatpush1.bf16.msra.mxu0 0
  %67 = vmatprep.subr.bf16.mxu0 0
  %68 = vmatpush1.bf16.msra.mxu0 0
  %69 = vmatprep.subr.bf16.mxu0 0
  %70 = vmatpush1.bf16.msra.mxu0 0
  %71 = vmatprep.mubr.bf16.mxu0 0
  %72 = vmatmul.mubr.bf16.gmra.mrb[0].mxu0 %v37
  %v73 = vpop.f32.mrb[0].mxu0
  %v74 = vadd.f32 0.0, %v73
  %v75 = vpop.f32.mrb[0].mxu0
  %v76 = vpop.f32.mrb[0].mxu0
  %v77 = vpop.f32.mrb[0].mxu0
  %78 = vdwg.mxu0
  %v79 = vld [vmem:[%s2] sm:$0x1]
  %v81 = vlaneseq
  %v82 = vshrl.u32 %v81, 7
  %v83 = vsub.s32 0, %v82
  %v84 = vrot.slane %v79, %v83
  %v86 = vmul.f32 %v74, %v84
  %v87 = vld [vmem:[%s3] sm:$0x1]
  %v89 = vlaneseq
  %v90 = vshrl.u32 %v89, 7
  %v91 = vsub.s32 0, %v90
  %v92 = vrot.slane %v87, %v91
  %v94 = vadd.f32 %v86, %v92
  %v95 = vmax.f32 %v94, 0.0
  %v96 = vpack.c.bf16 %v95, %v95
  %vm97 = vcmask 125952
  %98 = vst.msk [vmem:[%s4] sm:$0xf] %vm97, %v96
  // Predicated region
  $region18: #{deeplab_forward.24} parent=0 // pred_check
    _
  $region19: #{deeplab_forward.24} parent=0 // pred_check_branch
    %100 = sbr.rel (0) target = $region21
  $region20: #{deeplab_forward.24} parent=0 // pred_region
    _
  $region21: #{deeplab_forward.24} parent=0 // pred_fallthru
    _
  // Predicated region
  $region22: #{deeplab_forward.24} parent=0 // pred_check
    _
  $region23: #{deeplab_forward.24} parent=0 // pred_check_branch
    %102 = sbr.rel (0) target = $region25
  $region24: #{deeplab_forward.24} parent=0 // pred_region
    _
  $region25: #{deeplab_forward.24} parent=0 // pred_fallthru
    _

// kernel: deeplab_forward.23
$region0: #{deeplab_forward.23}
  #allocation0 [shape = 'u32[]', space=smem, size = 0x4, offset = 0x4, fixed_abs, tag = 'smem constant byte address 0x4 - core index']
  #allocation1 [shape = 'u32[144,128]{1,0:T(1,128)}', space=vmem, size = 0x12000, scoped, tag = 'internal scratch']
  %s0 = inlined_call_operand.vmem [shape: bf16[8,288], index: 0, kind: input, shape index: {}]
  %s1 = inlined_call_operand.vmem [shape: bf16[288,16], index: 1, kind: input, shape index: {}]
  %s2 = inlined_call_operand.vmem [shape: f32[1,16], index: 2, kind: input, shape index: {}]
  %s3 = inlined_call_operand.vmem [shape: f32[1,16], index: 3, kind: input, shape index: {}]
  %s4 = inlined_call_operand.vmem [shape: bf16[8,16], index: 4, kind: output, shape index: {}]
  %s5 = sld [smem:[#allocation0]]
  $region26: #{deeplab_forward.23} parent=0
    _
  %s7 = ssub.s32 1, %s5
  %s8 = scalar_select 0, %s7, %s5
  // Predicated region
  $region2: #{deeplab_forward.23} parent=0 // pred_check
    _
  $region3: #{deeplab_forward.23} parent=0 // pred_check_branch
    %10 = sbr.rel (0) target = $region5
  $region4: #{deeplab_forward.23} parent=0 // pred_region
    _
  $region5: #{deeplab_forward.23} parent=0 // pred_fallthru
    _
  // Predicated region
  $region6: #{deeplab_forward.23} parent=0 // pred_check
    _
  $region7: #{deeplab_forward.23} parent=0 // pred_check_branch
    %12 = sbr.rel (0) target = $region9
  $region8: #{deeplab_forward.23} parent=0 // pred_region
    _
  $region9: #{deeplab_forward.23} parent=0 // pred_fallthru
    _
  // Predicated region
  $region10: #{deeplab_forward.23} parent=0 // pred_check
    _
  $region11: #{deeplab_forward.23} parent=0 // pred_check_branch
    %14 = sbr.rel (0) target = $region13
  $region12: #{deeplab_forward.23} parent=0 // pred_region
    _
  $region13: #{deeplab_forward.23} parent=0 // pred_fallthru
    _
  // Predicated region
  $region14: #{deeplab_forward.23} parent=0 // pred_check
    _
  $region15: #{deeplab_forward.23} parent=0 // pred_check_branch
    %16 = sbr.rel (0) target = $region17
  $region16: #{deeplab_forward.23} parent=0 // pred_region
    _
  $region17: #{deeplab_forward.23} parent=0 // pred_fallthru
    _
  %v18 = vld [vmem:[%s0] sm:$0xff]
  %v19 = vld [vmem:[%s0 + $0x8] sm:$0xf]
  %v20 = vld [vmem:[%s1] sm:$0xf]
  %v21 = vld [vmem:[%s1 + $0x4] sm:$0xf]
  %v22 = vld [vmem:[%s1 + $0x8] sm:$0xf]
  %v23 = vld [vmem:[%s1 + $0xc] sm:$0xf]
  %v24 = vld [vmem:[%s1 + $0x10] sm:$0xf]
  %v25 = vld [vmem:[%s1 + $0x14] sm:$0xf]
  %v26 = vld [vmem:[%s1 + $0x18] sm:$0xf]
  %v27 = vld [vmem:[%s1 + $0x1c] sm:$0xf]
  %v28 = vld [vmem:[%s1 + $0x20] sm:$0xf]
  %v29 = vld [vmem:[%s1 + $0x24] sm:$0xf]
  %v30 = vld [vmem:[%s1 + $0x28] sm:$0xf]
  %v31 = vld [vmem:[%s1 + $0x2c] sm:$0xf]
  %v32 = vld [vmem:[%s1 + $0x30] sm:$0xf]
  %v33 = vld [vmem:[%s1 + $0x34] sm:$0xf]
  %v34 = vld [vmem:[%s1 + $0x38] sm:$0xf]
  %v35 = vld [vmem:[%s1 + $0x3c] sm:$0xf]
  %v36 = vld [vmem:[%s1 + $0x40] sm:$0xf]
  %v37 = vld [vmem:[%s1 + $0x44] sm:$0xf]
  %v38 = vld [vmem:[%s1 + $0x48] sm:$0xf]
  %v39 = vld [vmem:[%s1 + $0x4c] sm:$0xf]
  %v40 = vld [vmem:[%s1 + $0x50] sm:$0xf]
  %v41 = vld [vmem:[%s1 + $0x54] sm:$0xf]
  %v42 = vld [vmem:[%s1 + $0x58] sm:$0xf]
  %v43 = vld [vmem:[%s1 + $0x5c] sm:$0xf]
  %v44 = vld [vmem:[%s1 + $0x60] sm:$0xf]
  %v45 = vld [vmem:[%s1 + $0x64] sm:$0xf]
  %v46 = vld [vmem:[%s1 + $0x68] sm:$0xf]
  %v47 = vld [vmem:[%s1 + $0x6c] sm:$0xf]
  %v48 = vld [vmem:[%s1 + $0x70] sm:$0xf]
  %v49 = vld [vmem:[%s1 + $0x74] sm:$0xf]
  %v50 = vld [vmem:[%s1 + $0x78] sm:$0xf]
  %v51 = vld [vmem:[%s1 + $0x7c] sm:$0xf]
  %v52 = vld [vmem:[%s1 + $0x80] sm:$0xf]
  %v53 = vld [vmem:[%s1 + $0x84] sm:$0xf]
  %v54 = vld [vmem:[%s1 + $0x88] sm:$0xf]
  %v55 = vld [vmem:[%s1 + $0x8c] sm:$0xf]
  %v58 = vunpack.c.l.b16 %v18
  %v59 = vunpack.c.h.b16 %v18
  %v60 = vunpack.c.l.b16 %v19
  %v61 = vpack.c.b16 %v58, %v58
  %v62 = vpack.c.b16 %v59, %v59
  %v63 = vpack.c.b16 %v60, %v60
  %v102 = vunpack.c.l.b16 %v20
  %v103 = vunpack.c.l.b16 %v21
  %v104 = vunpack.c.l.b16 %v22
  %v105 = vunpack.c.l.b16 %v23
  %v106 = vunpack.c.l.b16 %v24
  %v107 = vunpack.c.l.b16 %v25
  %v108 = vunpack.c.l.b16 %v26
  %v109 = vunpack.c.l.b16 %v27
  %v110 = vunpack.c.l.b16 %v28
  %v111 = vunpack.c.l.b16 %v29
  %v112 = vunpack.c.l.b16 %v30
  %v113 = vunpack.c.l.b16 %v31
  %v114 = vunpack.c.l.b16 %v32
  %v115 = vunpack.c.l.b16 %v33
  %v116 = vunpack.c.l.b16 %v34
  %v117 = vunpack.c.l.b16 %v35
  %v118 = vunpack.c.l.b16 %v36
  %v119 = vunpack.c.l.b16 %v37
  %v120 = vunpack.c.l.b16 %v38
  %v121 = vunpack.c.l.b16 %v39
  %v122 = vunpack.c.l.b16 %v40
  %v123 = vunpack.c.l.b16 %v41
  %v124 = vunpack.c.l.b16 %v42
  %v125 = vunpack.c.l.b16 %v43
  %v126 = vunpack.c.l.b16 %v44
  %v127 = vunpack.c.l.b16 %v45
  %v128 = vunpack.c.l.b16 %v46
  %v129 = vunpack.c.l.b16 %v47
  %v130 = vunpack.c.l.b16 %v48
  %v131 = vunpack.c.l.b16 %v49
  %v132 = vunpack.c.l.b16 %v50
  %v133 = vunpack.c.l.b16 %v51
  %v134 = vunpack.c.l.b16 %v52
  %v135 = vunpack.c.l.b16 %v53
  %v136 = vunpack.c.l.b16 %v54
  %v137 = vunpack.c.l.b16 %v55
  %v138 = vpack.c.b16 %v103, %v102
  %v139 = vpack.c.b16 %v105, %v104
  %v140 = vpack.c.b16 %v107, %v106
  %v141 = vpack.c.b16 %v109, %v108
  %v142 = vpack.c.b16 %v111, %v110
  %v143 = vpack.c.b16 %v113, %v112
  %v144 = vpack.c.b16 %v115, %v114
  %v145 = vpack.c.b16 %v117, %v116
  %v146 = vpack.c.b16 %v119, %v118
  %v147 = vpack.c.b16 %v121, %v120
  %v148 = vpack.c.b16 %v123, %v122
  %v149 = vpack.c.b16 %v125, %v124
  %v150 = vpack.c.b16 %v127, %v126
  %v151 = vpack.c.b16 %v129, %v128
  %v152 = vpack.c.b16 %v131, %v130
  %v153 = vpack.c.b16 %v133, %v132
  %v154 = vpack.c.b16 %v135, %v134
  %v155 = vpack.c.b16 %v137, %v136
  %vm174 = vcmask 261120
  %v176 = vsel %vm174, %v63, 0
  %178 = vmatprep.subr.bf16.mxu0 0
  %179 = vmatpush1.bf16.msra.mxu0 %v138
  %180 = vmatprep.subr.bf16.mxu0 0
  %181 = vmatpush1.bf16.msra.mxu0 %v139
  %182 = vmatprep.subr.bf16.mxu0 0
  %183 = vmatpush1.bf16.msra.mxu0 %v140
  %184 = vmatprep.subr.bf16.mxu0 0
  %185 = vmatpush1.bf16.msra.mxu0 %v141
  %186 = vmatprep.subr.bf16.mxu0 0
  %187 = vmatpush1.bf16.msra.mxu0 %v142
  %188 = vmatprep.subr.bf16.mxu0 0
  %189 = vmatpush1.bf16.msra.mxu0 %v143
  %190 = vmatprep.subr.bf16.mxu0 0
  %191 = vmatpush1.bf16.msra.mxu0 %v144
  %192 = vmatprep.subr.bf16.mxu0 0
  %193 = vmatpush1.bf16.msra.mxu0 %v145
  %194 = vmatprep.subr.bf16.mxu0 0
  %195 = vmatpush1.bf16.msra.mxu0 %v146
  %196 = vmatprep.subr.bf16.mxu0 0
  %197 = vmatpush1.bf16.msra.mxu0 %v147
  %198 = vmatprep.subr.bf16.mxu0 0
  %199 = vmatpush1.bf16.msra.mxu0 %v148
  %200 = vmatprep.subr.bf16.mxu0 0
  %201 = vmatpush1.bf16.msra.mxu0 %v149
  %202 = vmatprep.subr.bf16.mxu0 0
  %203 = vmatpush1.bf16.msra.mxu0 %v150
  %204 = vmatprep.subr.bf16.mxu0 0
  %205 = vmatpush1.bf16.msra.mxu0 %v151
  %206 = vmatprep.subr.bf16.mxu0 0
  %207 = vmatpush1.bf16.msra.mxu0 %v152
  %208 = vmatprep.subr.bf16.mxu0 0
  %209 = vmatpush1.bf16.msra.mxu0 %v153
  %210 = vmatprep.mubr.bf16.mxu0 %v62
  %211 = vmatmul.mubr.bf16.gmra.mrb[0].mxu0 %v61
  %v212 = vpop.f32.mrb[0].mxu0
  %v213 = vadd.f32 0.0, %v212
  %v214 = vpop.f32.mrb[0].mxu0
  %v215 = vpop.f32.mrb[0].mxu0
  %v216 = vpop.f32.mrb[0].mxu0
  %217 = vdwg.mxu0
  %218 = vmatprep.subr.bf16.mxu0 0
  %219 = vmatpush1.bf16.msra.mxu0 %v154
  %220 = vmatprep.subr.bf16.mxu0 0
  %221 = vmatpush1.bf16.msra.mxu0 %v155
  %222 = vmatprep.subr.bf16.mxu0 0
  %223 = vmatpush1.bf16.msra.mxu0 0
  %224 = vmatprep.subr.bf16.mxu0 0
  %225 = vmatpush1.bf16.msra.mxu0 0
  %226 = vmatprep.subr.bf16.mxu0 0
  %227 = vmatpush1.bf16.msra.mxu0 0
  %228 = vmatprep.subr.bf16.mxu0 0
  %229 = vmatpush1.bf16.msra.mxu0 0
  %230 = vmatprep.subr.bf16.mxu0 0
  %231 = vmatpush1.bf16.msra.mxu0 0
  %232 = vmatprep.subr.bf16.mxu0 0
  %233 = vmatpush1.bf16.msra.mxu0 0
  %234 = vmatprep.subr.bf16.mxu0 0
  %235 = vmatpush1.bf16.msra.mxu0 0
  %236 = vmatprep.subr.bf16.mxu0 0
  %237 = vmatpush1.bf16.msra.mxu0 0
  %238 = vmatprep.subr.bf16.mxu0 0
  %239 = vmatpush1.bf16.msra.mxu0 0
  %240 = vmatprep.subr.bf16.mxu0 0
  %241 = vmatpush1.bf16.msra.mxu0 0
  %242 = vmatprep.subr.bf16.mxu0 0
  %243 = vmatpush1.bf16.msra.mxu0 0
  %244 = vmatprep.subr.bf16.mxu0 0
  %245 = vmatpush1.bf16.msra.mxu0 0
  %246 = vmatprep.subr.bf16.mxu0 0
  %247 = vmatpush1.bf16.msra.mxu0 0
  %248 = vmatprep.subr.bf16.mxu0 0
  %249 = vmatpush1.bf16.msra.mxu0 0
  %250 = vmatprep.mubr.bf16.mxu0 0
  %251 = vmatmul.mubr.bf16.gmra.mrb[0].mxu0 %v176
  %v252 = vpop.f32.mrb[0].mxu0
  %v253 = vadd.f32 %v213, %v252
  %v254 = vpop.f32.mrb[0].mxu0
  %v255 = vpop.f32.mrb[0].mxu0
  %v256 = vpop.f32.mrb[0].mxu0
  %257 = vdwg.mxu0
  %v258 = vld [vmem:[%s2] sm:$0x1]
  %v260 = vlaneseq
  %v261 = vshrl.u32 %v260, 7
  %v262 = vsub.s32 0, %v261
  %v263 = vrot.slane %v258, %v262
  %v265 = vmul.f32 %v253, %v263
  %v266 = vld [vmem:[%s3] sm:$0x1]
  %v268 = vlaneseq
  %v269 = vshrl.u32 %v268, 7
  %v270 = vsub.s32 0, %v269
  %v271 = vrot.slane %v266, %v270
  %v273 = vadd.f32 %v265, %v271
  %v274 = vmax.f32 %v273, 0.0
  %v275 = vpack.c.bf16 %v274, %v274
  %vm276 = vcmask 125952
  %277 = vst.msk [vmem:[%s4] sm:$0xf] %vm276, %v275
  // Predicated region
  $region18: #{deeplab_forward.23} parent=0 // pred_check
    _
  $region19: #{deeplab_forward.23} parent=0 // pred_check_branch
    %279 = sbr.rel (0) target = $region21
  $region20: #{deeplab_forward.23} parent=0 // pred_region
    _
  $region21: #{deeplab_forward.23} parent=0 // pred_fallthru
    _
  // Predicated region
  $region22: #{deeplab_forward.23} parent=0 // pred_check
    _
  $region23: #{deeplab_forward.23} parent=0 // pred_check_branch
    %281 = sbr.rel (0) target = $region25
  $region24: #{deeplab_forward.23} parent=0 // pred_region
    _
  $region25: #{deeplab_forward.23} parent=0 // pred_fallthru
    _

// kernel: deeplab_forward.27
$region0: #{deeplab_forward.27}
  #allocation0 [shape = 'u32[]', space=smem, size = 0x4, offset = 0x4, fixed_abs, tag = 'smem constant byte address 0x4 - core index']
  #allocation1 [shape = 'u32[144,128]{1,0:T(1,128)}', space=vmem, size = 0x12000, scoped, tag = 'internal scratch']
  %s0 = inlined_call_operand.vmem [shape: bf16[32,4], index: 0, kind: input, shape index: {}]
  %s1 = inlined_call_operand.vmem [shape: f32[4,64], index: 1, kind: input, shape index: {}]
  %s2 = inlined_call_operand.vmem [shape: bf16[32,64], index: 2, kind: output, shape index: {}]
  %s3 = sld [smem:[#allocation0]]
  $region18: #{deeplab_forward.27} parent=0
    _
  %s5 = ssub.s32 1, %s3
  %s6 = scalar_select 0, %s5, %s3
  // Predicated region
  $region2: #{deeplab_forward.27} parent=0 // pred_check
    _
  $region3: #{deeplab_forward.27} parent=0 // pred_check_branch
    %8 = sbr.rel (0) target = $region5
  $region4: #{deeplab_forward.27} parent=0 // pred_region
    _
  $region5: #{deeplab_forward.27} parent=0 // pred_fallthru
    _
  // Predicated region
  $region6: #{deeplab_forward.27} parent=0 // pred_check
    _
  $region7: #{deeplab_forward.27} parent=0 // pred_check_branch
    %10 = sbr.rel (0) target = $region9
  $region8: #{deeplab_forward.27} parent=0 // pred_region
    _
  $region9: #{deeplab_forward.27} parent=0 // pred_fallthru
    _
  %v11 = vld [vmem:[%s0] sm:$0xf]
  %v12 = vld [vmem:[%s0 + $0x4] sm:$0xf]
  %v13 = vld [vmem:[%s0 + $0x8] sm:$0xf]
  %v14 = vld [vmem:[%s0 + $0xc] sm:$0xf]
  %v15 = vunpack.c.l.bf16 %v11
  %v16 = vunpack.c.l.bf16 %v12
  %v17 = vunpack.c.l.bf16 %v13
  %v18 = vunpack.c.l.bf16 %v14
  %v19 = vld [vmem:[%s1] sm:$0xf]
  %vm20 = vcmask 31744
  %v22 = vsel %vm20, %v15, 0
  %v25 = vsel %vm20, %v16, 0
  %v28 = vsel %vm20, %v17, 0
  %v31 = vsel %vm20, %v18, 0
  %vm33 = vcmask 1043456
  %v35 = vsel %vm33, %v19, 0
  %37 = vmatprep.subr.mxu0 0.0
  %38 = vmatpush1.msra.mxu0 %v35
  %39 = vmatprep.subr.mxu0 0.0
  %40 = vmatpush1.msra.mxu0 0.0
  %41 = vmatprep.subr.mxu0 0.0
  %42 = vmatpush1.msra.mxu0 0.0
  %43 = vmatprep.subr.mxu0 0.0
  %44 = vmatpush1.msra.mxu0 0.0
  %45 = vmatprep.subr.mxu0 0.0
  %46 = vmatpush1.msra.mxu0 0.0
  %47 = vmatprep.subr.mxu0 0.0
  %48 = vmatpush1.msra.mxu0 0.0
  %49 = vmatprep.subr.mxu0 0.0
  %50 = vmatpush1.msra.mxu0 0.0
  %51 = vmatprep.subr.mxu0 0.0
  %52 = vmatpush1.msra.mxu0 0.0
  %53 = vmatprep.subr.mxu0 0.0
  %54 = vmatpush1.msra.mxu0 0.0
  %55 = vmatprep.subr.mxu0 0.0
  %56 = vmatpush1.msra.mxu0 0.0
  %57 = vmatprep.subr.mxu0 0.0
  %58 = vmatpush1.msra.mxu0 0.0
  %59 = vmatprep.subr.mxu0 0.0
  %60 = vmatpush1.msra.mxu0 0.0
  %61 = vmatprep.subr.mxu0 0.0
  %62 = vmatpush1.msra.mxu0 0.0
  %63 = vmatprep.subr.mxu0 0.0
  %64 = vmatpush1.msra.mxu0 0.0
  %65 = vmatprep.subr.mxu0 0.0
  %66 = vmatpush1.msra.mxu0 0.0
  %67 = vmatprep.subr.mxu0 0.0
  %68 = vmatpush1.msra.mxu0 0.0
  %69 = vmatprep.subr.mxu0 0.0
  %70 = vmatpush1.msra.mxu0 0.0
  %71 = vmatprep.subr.mxu0 0.0
  %72 = vmatpush1.msra.mxu0 0.0
  %73 = vmatprep.subr.mxu0 0.0
  %74 = vmatpush1.msra.mxu0 0.0
  %75 = vmatprep.subr.mxu0 0.0
  %76 = vmatpush1.msra.mxu0 0.0
  %77 = vmatprep.subr.mxu0 0.0
  %78 = vmatpush1.msra.mxu0 0.0
  %79 = vmatprep.subr.mxu0 0.0
  %80 = vmatpush1.msra.mxu0 0.0
  %81 = vmatprep.subr.mxu0 0.0
  %82 = vmatpush1.msra.mxu0 0.0
  %83 = vmatprep.subr.mxu0 0.0
  %84 = vmatpush1.msra.mxu0 0.0
  %85 = vmatprep.subr.mxu0 0.0
  %86 = vmatpush1.msra.mxu0 0.0
  %87 = vmatprep.subr.mxu0 0.0
  %88 = vmatpush1.msra.mxu0 0.0
  %89 = vmatprep.subr.mxu0 0.0
  %90 = vmatpush1.msra.mxu0 0.0
  %91 = vmatprep.subr.mxu0 0.0
  %92 = vmatpush1.msra.mxu0 0.0
  %93 = vmatprep.subr.mxu0 0.0
  %94 = vmatpush1.msra.mxu0 0.0
  %95 = vmatprep.subr.mxu0 0.0
  %96 = vmatpush1.msra.mxu0 0.0
  %97 = vmatprep.subr.mxu0 0.0
  %98 = vmatpush1.msra.mxu0 0.0
  %99 = vmatprep.subr.mxu0 0.0
  %100 = vmatpush1.msra.mxu0 0.0
  %101 = vmatprep.mubr.f32.mxu0 0.0
  %102 = vmatmul.mubr.f32.gmra.mrb[0].mxu0 %v22
  %v103 = vpop.f32.mrb[0].mxu0
  %v104 = vadd.f32 0.0, %v103
  %v105 = vpop.f32.mrb[0].mxu0
  %106 = vmatprep.mubr.f32.mxu0 0.0
  %107 = vmatmul.mubr.f32.gmra.mrb[0].mxu0 %v25
  %v108 = vpop.f32.mrb[0].mxu0
  %v109 = vadd.f32 0.0, %v108
  %v110 = vpop.f32.mrb[0].mxu0
  %111 = vmatprep.mubr.f32.mxu0 0.0
  %112 = vmatmul.mubr.f32.gmra.mrb[0].mxu0 %v28
  %v113 = vpop.f32.mrb[0].mxu0
  %v114 = vadd.f32 0.0, %v113
  %v115 = vpop.f32.mrb[0].mxu0
  %116 = vmatprep.mubr.f32.mxu0 0.0
  %117 = vmatmul.mubr.f32.gmra.mrb[0].mxu0 %v31
  %v118 = vpop.f32.mrb[0].mxu0
  %v119 = vadd.f32 0.0, %v118
  %v120 = vpop.f32.mrb[0].mxu0
  %121 = vdwg.mxu0
  %v122 = vpack.c.bf16 %v109, %v104
  %v123 = vpack.c.bf16 %v119, %v114
  %v126 = vunpack.c.l.b16 %v122
  %v127 = vunpack.c.h.b16 %v122
  %v128 = vunpack.c.l.b16 %v123
  %v129 = vunpack.c.h.b16 %v123
  %v130 = vpack.c.b16 %v126, %v126
  %v131 = vpack.c.b16 %v127, %v127
  %v132 = vpack.c.b16 %v128, %v128
  %v133 = vpack.c.b16 %v129, %v129
  %vm138 = vcmask 519168
  %139 = vst.msk [vmem:[%s2] sm:$0xf] %vm138, %v130
  %140 = vst.msk [vmem:[%s2 + $0x4] sm:$0xf] %vm138, %v131
  %141 = vst.msk [vmem:[%s2 + $0x8] sm:$0xf] %vm138, %v132
  %142 = vst.msk [vmem:[%s2 + $0xc] sm:$0xf] %vm138, %v133
  // Predicated region
  $region10: #{deeplab_forward.27} parent=0 // pred_check
    _
  $region11: #{deeplab_forward.27} parent=0 // pred_check_branch
    %144 = sbr.rel (0) target = $region13
  $region12: #{deeplab_forward.27} parent=0 // pred_region
    _
  $region13: #{deeplab_forward.27} parent=0 // pred_fallthru
    _
  // Predicated region
  $region14: #{deeplab_forward.27} parent=0 // pred_check
    _
  $region15: #{deeplab_forward.27} parent=0 // pred_check_branch
    %146 = sbr.rel (0) target = $region17
  $region16: #{deeplab_forward.27} parent=0 // pred_region
    _
  $region17: #{deeplab_forward.27} parent=0 // pred_fallthru
    _

// kernel: deeplab_forward.25
$region0: #{deeplab_forward.25}
  #allocation0 [shape = 'u32[]', space=smem, size = 0x4, offset = 0x4, fixed_abs, tag = 'smem constant byte address 0x4 - core index']
  #allocation1 [shape = 'u32[144,128]{1,0:T(1,128)}', space=vmem, size = 0x12000, scoped, tag = 'internal scratch']
  %s0 = inlined_call_operand.vmem [shape: bf16[8,80], index: 0, kind: input, shape index: {}]
  %s1 = inlined_call_operand.vmem [shape: bf16[80,16], index: 1, kind: input, shape index: {}]
  %s2 = inlined_call_operand.vmem [shape: f32[1,16], index: 2, kind: input, shape index: {}]
  %s3 = inlined_call_operand.vmem [shape: f32[1,16], index: 3, kind: input, shape index: {}]
  %s4 = inlined_call_operand.vmem [shape: bf16[8,16], index: 4, kind: output, shape index: {}]
  %s5 = sld [smem:[#allocation0]]
  $region26: #{deeplab_forward.25} parent=0
    _
  %s7 = ssub.s32 1, %s5
  %s8 = scalar_select 0, %s7, %s5
  // Predicated region
  $region2: #{deeplab_forward.25} parent=0 // pred_check
    _
  $region3: #{deeplab_forward.25} parent=0 // pred_check_branch
    %10 = sbr.rel (0) target = $region5
  $region4: #{deeplab_forward.25} parent=0 // pred_region
    _
  $region5: #{deeplab_forward.25} parent=0 // pred_fallthru
    _
  // Predicated region
  $region6: #{deeplab_forward.25} parent=0 // pred_check
    _
  $region7: #{deeplab_forward.25} parent=0 // pred_check_branch
    %12 = sbr.rel (0) target = $region9
  $region8: #{deeplab_forward.25} parent=0 // pred_region
    _
  $region9: #{deeplab_forward.25} parent=0 // pred_fallthru
    _
  // Predicated region
  $region10: #{deeplab_forward.25} parent=0 // pred_check
    _
  $region11: #{deeplab_forward.25} parent=0 // pred_check_branch
    %14 = sbr.rel (0) target = $region13
  $region12: #{deeplab_forward.25} parent=0 // pred_region
    _
  $region13: #{deeplab_forward.25} parent=0 // pred_fallthru
    _
  // Predicated region
  $region14: #{deeplab_forward.25} parent=0 // pred_check
    _
  $region15: #{deeplab_forward.25} parent=0 // pred_check_branch
    %16 = sbr.rel (0) target = $region17
  $region16: #{deeplab_forward.25} parent=0 // pred_region
    _
  $region17: #{deeplab_forward.25} parent=0 // pred_fallthru
    _
  %v18 = vld [vmem:[%s0] sm:$0xf]
  %v19 = vld [vmem:[%s1] sm:$0xf]
  %v20 = vld [vmem:[%s1 + $0x4] sm:$0xf]
  %v21 = vld [vmem:[%s1 + $0x8] sm:$0xf]
  %v22 = vld [vmem:[%s1 + $0xc] sm:$0xf]
  %v23 = vld [vmem:[%s1 + $0x10] sm:$0xf]
  %v24 = vld [vmem:[%s1 + $0x14] sm:$0xf]
  %v25 = vld [vmem:[%s1 + $0x18] sm:$0xf]
  %v26 = vld [vmem:[%s1 + $0x1c] sm:$0xf]
  %v27 = vld [vmem:[%s1 + $0x20] sm:$0xf]
  %v28 = vld [vmem:[%s1 + $0x24] sm:$0xf]
  %v39 = vunpack.c.l.b16 %v19
  %v40 = vunpack.c.l.b16 %v20
  %v41 = vunpack.c.l.b16 %v21
  %v42 = vunpack.c.l.b16 %v22
  %v43 = vunpack.c.l.b16 %v23
  %v44 = vunpack.c.l.b16 %v24
  %v45 = vunpack.c.l.b16 %v25
  %v46 = vunpack.c.l.b16 %v26
  %v47 = vunpack.c.l.b16 %v27
  %v48 = vunpack.c.l.b16 %v28
  %v49 = vpack.c.b16 %v40, %v39
  %v50 = vpack.c.b16 %v42, %v41
  %v51 = vpack.c.b16 %v44, %v43
  %v52 = vpack.c.b16 %v46, %v45
  %v53 = vpack.c.b16 %v48, %v47
  %vm59 = vcmask 654336
  %v61 = vsel %vm59, %v18, 0
  %63 = vmatprep.subr.bf16.mxu0 0
  %64 = vmatpush1.bf16.msra.mxu0 %v49
  %65 = vmatprep.subr.bf16.mxu0 0
  %66 = vmatpush1.bf16.msra.mxu0 %v50
  %67 = vmatprep.subr.bf16.mxu0 0
  %68 = vmatpush1.bf16.msra.mxu0 %v51
  %69 = vmatprep.subr.bf16.mxu0 0
  %70 = vmatpush1.bf16.msra.mxu0 %v52
  %71 = vmatprep.subr.bf16.mxu0 0
  %72 = vmatpush1.bf16.msra.mxu0 %v53
  %73 = vmatprep.subr.bf16.mxu0 0
  %74 = vmatpush1.bf16.msra.mxu0 0
  %75 = vmatprep.subr.bf16.mxu0 0
  %76 = vmatpush1.bf16.msra.mxu0 0
  %77 = vmatprep.subr.bf16.mxu0 0
  %78 = vmatpush1.bf16.msra.mxu0 0
  %79 = vmatprep.subr.bf16.mxu0 0
  %80 = vmatpush1.bf16.msra.mxu0 0
  %81 = vmatprep.subr.bf16.mxu0 0
  %82 = vmatpush1.bf16.msra.mxu0 0
  %83 = vmatprep.subr.bf16.mxu0 0
  %84 = vmatpush1.bf16.msra.mxu0 0
  %85 = vmatprep.subr.bf16.mxu0 0
  %86 = vmatpush1.bf16.msra.mxu0 0
  %87 = vmatprep.subr.bf16.mxu0 0
  %88 = vmatpush1.bf16.msra.mxu0 0
  %89 = vmatprep.subr.bf16.mxu0 0
  %90 = vmatpush1.bf16.msra.mxu0 0
  %91 = vmatprep.subr.bf16.mxu0 0
  %92 = vmatpush1.bf16.msra.mxu0 0
  %93 = vmatprep.subr.bf16.mxu0 0
  %94 = vmatpush1.bf16.msra.mxu0 0
  %95 = vmatprep.mubr.bf16.mxu0 0
  %96 = vmatmul.mubr.bf16.gmra.mrb[0].mxu0 %v61
  %v97 = vpop.f32.mrb[0].mxu0
  %v98 = vadd.f32 0.0, %v97
  %v99 = vpop.f32.mrb[0].mxu0
  %v100 = vpop.f32.mrb[0].mxu0
  %v101 = vpop.f32.mrb[0].mxu0
  %102 = vdwg.mxu0
  %v103 = vld [vmem:[%s2] sm:$0x1]
  %v105 = vlaneseq
  %v106 = vshrl.u32 %v105, 7
  %v107 = vsub.s32 0, %v106
  %v108 = vrot.slane %v103, %v107
  %v110 = vmul.f32 %v98, %v108
  %v111 = vld [vmem:[%s3] sm:$0x1]
  %v113 = vlaneseq
  %v114 = vshrl.u32 %v113, 7
  %v115 = vsub.s32 0, %v114
  %v116 = vrot.slane %v111, %v115
  %v118 = vadd.f32 %v110, %v116
  %v119 = vmax.f32 %v118, 0.0
  %v120 = vpack.c.bf16 %v119, %v119
  %vm121 = vcmask 125952
  %122 = vst.msk [vmem:[%s4] sm:$0xf] %vm121, %v120
  // Predicated region
  $region18: #{deeplab_forward.25} parent=0 // pred_check
    _
  $region19: #{deeplab_forward.25} parent=0 // pred_check_branch
    %124 = sbr.rel (0) target = $region21
  $region20: #{deeplab_forward.25} parent=0 // pred_region
    _
  $region21: #{deeplab_forward.25} parent=0 // pred_fallthru
    _
  // Predicated region
  $region22: #{deeplab_forward.25} parent=0 // pred_check
    _
  $region23: #{deeplab_forward.25} parent=0 // pred_check_branch
    %126 = sbr.rel (0) target = $region25
  $region24: #{deeplab_forward.25} parent=0 // pred_region
    _
  $region25: #{deeplab_forward.25} parent=0 // pred_fallthru
    _

// kernel: deeplab_forward.28
$region0: #{deeplab_forward.28}
  #allocation0 [shape = 'u32[]', space=smem, size = 0x4, offset = 0x4, fixed_abs, tag = 'smem constant byte address 0x4 - core index']
  #allocation1 [shape = 'u32[144,128]{1,0:T(1,128)}', space=vmem, size = 0x12000, scoped, tag = 'internal scratch']
  %s0 = inlined_call_operand.vmem [shape: bf16[128,216], index: 0, kind: input, shape index: {}]
  %s1 = inlined_call_operand.vmem [shape: bf16[216,16], index: 1, kind: input, shape index: {}]
  %s2 = inlined_call_operand.vmem [shape: f32[1,16], index: 2, kind: input, shape index: {}]
  %s3 = inlined_call_operand.vmem [shape: f32[1,16], index: 3, kind: input, shape index: {}]
  %s4 = inlined_call_operand.vmem [shape: bf16[128,16], index: 4, kind: output, shape index: {}]
  %s5 = sld [smem:[#allocation0]]
  $region26: #{deeplab_forward.28} parent=0
    _
  %s7 = ssub.s32 1, %s5
  %s8 = scalar_select 0, %s7, %s5
  // Predicated region
  $region2: #{deeplab_forward.28} parent=0 // pred_check
    _
  $region3: #{deeplab_forward.28} parent=0 // pred_check_branch
    %10 = sbr.rel (0) target = $region5
  $region4: #{deeplab_forward.28} parent=0 // pred_region
    _
  $region5: #{deeplab_forward.28} parent=0 // pred_fallthru
    _
  // Predicated region
  $region6: #{deeplab_forward.28} parent=0 // pred_check
    _
  $region7: #{deeplab_forward.28} parent=0 // pred_check_branch
    %12 = sbr.rel (0) target = $region9
  $region8: #{deeplab_forward.28} parent=0 // pred_region
    _
  $region9: #{deeplab_forward.28} parent=0 // pred_fallthru
    _
  // Predicated region
  $region10: #{deeplab_forward.28} parent=0 // pred_check
    _
  $region11: #{deeplab_forward.28} parent=0 // pred_check_branch
    %14 = sbr.rel (0) target = $region13
  $region12: #{deeplab_forward.28} parent=0 // pred_region
    _
  $region13: #{deeplab_forward.28} parent=0 // pred_fallthru
    _
  // Predicated region
  $region14: #{deeplab_forward.28} parent=0 // pred_check
    _
  $region15: #{deeplab_forward.28} parent=0 // pred_check_branch
    %16 = sbr.rel (0) target = $region17
  $region16: #{deeplab_forward.28} parent=0 // pred_region
    _
  $region17: #{deeplab_forward.28} parent=0 // pred_fallthru
    _
  %v18 = vld [vmem:[%s0] sm:$0xff]
  %v19 = vld [vmem:[%s0 + $0x8] sm:$0xff]
  %v20 = vld [vmem:[%s0 + $0x10] sm:$0xff]
  %v21 = vld [vmem:[%s0 + $0x18] sm:$0xff]
  %v22 = vld [vmem:[%s0 + $0x20] sm:$0xff]
  %v23 = vld [vmem:[%s0 + $0x28] sm:$0xff]
  %v24 = vld [vmem:[%s0 + $0x30] sm:$0xff]
  %v25 = vld [vmem:[%s0 + $0x38] sm:$0xff]
  %v26 = vld [vmem:[%s0 + $0x40] sm:$0xff]
  %v27 = vld [vmem:[%s0 + $0x48] sm:$0xff]
  %v28 = vld [vmem:[%s0 + $0x50] sm:$0xff]
  %v29 = vld [vmem:[%s0 + $0x58] sm:$0xff]
  %v30 = vld [vmem:[%s0 + $0x60] sm:$0xff]
  %v31 = vld [vmem:[%s0 + $0x68] sm:$0xff]
  %v32 = vld [vmem:[%s0 + $0x70] sm:$0xff]
  %v33 = vld [vmem:[%s0 + $0x78] sm:$0xff]
  %v34 = vld [vmem:[%s1] sm:$0xf]
  %v35 = vld [vmem:[%s1 + $0x4] sm:$0xf]
  %v36 = vld [vmem:[%s1 + $0x8] sm:$0xf]
  %v37 = vld [vmem:[%s1 + $0xc] sm:$0xf]
  %v38 = vld [vmem:[%s1 + $0x10] sm:$0xf]
  %v39 = vld [vmem:[%s1 + $0x14] sm:$0xf]
  %v40 = vld [vmem:[%s1 + $0x18] sm:$0xf]
  %v41 = vld [vmem:[%s1 + $0x1c] sm:$0xf]
  %v42 = vld [vmem:[%s1 + $0x20] sm:$0xf]
  %v43 = vld [vmem:[%s1 + $0x24] sm:$0xf]
  %v44 = vld [vmem:[%s1 + $0x28] sm:$0xf]
  %v45 = vld [vmem:[%s1 + $0x2c] sm:$0xf]
  %v46 = vld [vmem:[%s1 + $0x30] sm:$0xf]
  %v47 = vld [vmem:[%s1 + $0x34] sm:$0xf]
  %v48 = vld [vmem:[%s1 + $0x38] sm:$0xf]
  %v49 = vld [vmem:[%s1 + $0x3c] sm:$0xf]
  %v50 = vld [vmem:[%s1 + $0x40] sm:$0xf]
  %v51 = vld [vmem:[%s1 + $0x44] sm:$0xf]
  %v52 = vld [vmem:[%s1 + $0x48] sm:$0xf]
  %v53 = vld [vmem:[%s1 + $0x4c] sm:$0xf]
  %v54 = vld [vmem:[%s1 + $0x50] sm:$0xf]
  %v55 = vld [vmem:[%s1 + $0x54] sm:$0xf]
  %v56 = vld [vmem:[%s1 + $0x58] sm:$0xf]
  %v57 = vld [vmem:[%s1 + $0x5c] sm:$0xf]
  %v58 = vld [vmem:[%s1 + $0x60] sm:$0xf]
  %v59 = vld [vmem:[%s1 + $0x64] sm:$0xf]
  %v60 = vld [vmem:[%s1 + $0x68] sm:$0xf]
  %v77 = vunpack.c.l.b16 %v18
  %v78 = vunpack.c.h.b16 %v18
  %v79 = vunpack.c.l.b16 %v19
  %v80 = vunpack.c.h.b16 %v19
  %v81 = vunpack.c.l.b16 %v20
  %v82 = vunpack.c.h.b16 %v20
  %v83 = vunpack.c.l.b16 %v21
  %v84 = vunpack.c.h.b16 %v21
  %v85 = vunpack.c.l.b16 %v22
  %v86 = vunpack.c.h.b16 %v22
  %v87 = vunpack.c.l.b16 %v23
  %v88 = vunpack.c.h.b16 %v23
  %v89 = vunpack.c.l.b16 %v24
  %v90 = vunpack.c.h.b16 %v24
  %v91 = vunpack.c.l.b16 %v25
  %v92 = vunpack.c.h.b16 %v25
  %v93 = vunpack.c.l.b16 %v26
  %v94 = vunpack.c.h.b16 %v26
  %v95 = vunpack.c.l.b16 %v27
  %v96 = vunpack.c.h.b16 %v27
  %v97 = vunpack.c.l.b16 %v28
  %v98 = vunpack.c.h.b16 %v28
  %v99 = vunpack.c.l.b16 %v29
  %v100 = vunpack.c.h.b16 %v29
  %v101 = vunpack.c.l.b16 %v30
  %v102 = vunpack.c.h.b16 %v30
  %v103 = vunpack.c.l.b16 %v31
  %v104 = vunpack.c.h.b16 %v31
  %v105 = vunpack.c.l.b16 %v32
  %v106 = vunpack.c.h.b16 %v32
  %v107 = vunpack.c.l.b16 %v33
  %v108 = vunpack.c.h.b16 %v33
  %v109 = vpack.c.b16 %v79, %v77
  %v110 = vpack.c.b16 %v80, %v78
  %v111 = vpack.c.b16 %v83, %v81
  %v112 = vpack.c.b16 %v84, %v82
  %v113 = vpack.c.b16 %v87, %v85
  %v114 = vpack.c.b16 %v88, %v86
  %v115 = vpack.c.b16 %v91, %v89
  %v116 = vpack.c.b16 %v92, %v90
  %v117 = vpack.c.b16 %v95, %v93
  %v118 = vpack.c.b16 %v96, %v94
  %v119 = vpack.c.b16 %v99, %v97
  %v120 = vpack.c.b16 %v100, %v98
  %v121 = vpack.c.b16 %v103, %v101
  %v122 = vpack.c.b16 %v104, %v102
  %v123 = vpack.c.b16 %v107, %v105
  %v124 = vpack.c.b16 %v108, %v106
  %v160 = vunpack.c.l.b16 %v34
  %v161 = vunpack.c.l.b16 %v35
  %v162 = vunpack.c.l.b16 %v36
  %v163 = vunpack.c.l.b16 %v37
  %v164 = vunpack.c.l.b16 %v38
  %v165 = vunpack.c.l.b16 %v39
  %v166 = vunpack.c.l.b16 %v40
  %v167 = vunpack.c.l.b16 %v41
  %v168 = vunpack.c.l.b16 %v42
  %v169 = vunpack.c.l.b16 %v43
  %v170 = vunpack.c.l.b16 %v44
  %v171 = vunpack.c.l.b16 %v45
  %v172 = vunpack.c.l.b16 %v46
  %v173 = vunpack.c.l.b16 %v47
  %v174 = vunpack.c.l.b16 %v48
  %v175 = vunpack.c.l.b16 %v49
  %v176 = vunpack.c.l.b16 %v50
  %v177 = vunpack.c.l.b16 %v51
  %v178 = vunpack.c.l.b16 %v52
  %v179 = vunpack.c.l.b16 %v53
  %v180 = vunpack.c.l.b16 %v54
  %v181 = vunpack.c.l.b16 %v55
  %v182 = vunpack.c.l.b16 %v56
  %v183 = vunpack.c.l.b16 %v57
  %v184 = vunpack.c.l.b16 %v58
  %v185 = vunpack.c.l.b16 %v59
  %v186 = vunpack.c.l.b16 %v60
  %v187 = vpack.c.b16 %v161, %v160
  %v188 = vpack.c.b16 %v163, %v162
  %v189 = vpack.c.b16 %v165, %v164
  %v190 = vpack.c.b16 %v167, %v166
  %v191 = vpack.c.b16 %v169, %v168
  %v192 = vpack.c.b16 %v171, %v170
  %v193 = vpack.c.b16 %v173, %v172
  %v194 = vpack.c.b16 %v175, %v174
  %v195 = vpack.c.b16 %v177, %v176
  %v196 = vpack.c.b16 %v179, %v178
  %v197 = vpack.c.b16 %v181, %v180
  %v198 = vpack.c.b16 %v183, %v182
  %v199 = vpack.c.b16 %v185, %v184
  %v200 = vpack.c.b16 %v186, %v186
  %vm214 = vcmask 719872
  %v216 = vsel %vm214, %v110, 0
  %v219 = vsel %vm214, %v112, 0
  %v222 = vsel %vm214, %v114, 0
  %v225 = vsel %vm214, %v116, 0
  %v228 = vsel %vm214, %v118, 0
  %v231 = vsel %vm214, %v120, 0
  %v234 = vsel %vm214, %v122, 0
  %v237 = vsel %vm214, %v124, 0
  %vm239 = vcmask 1043456
  %v241 = vsel %vm239, %v200, 0
  %243 = vmatprep.subr.bf16.mxu0 0
  %244 = vmatpush1.bf16.msra.mxu0 %v187
  %245 = vmatprep.subr.bf16.mxu0 0
  %246 = vmatpush1.bf16.msra.mxu0 %v188
  %247 = vmatprep.subr.bf16.mxu0 0
  %248 = vmatpush1.bf16.msra.mxu0 %v189
  %249 = vmatprep.subr.bf16.mxu0 0
  %250 = vmatpush1.bf16.msra.mxu0 %v190
  %251 = vmatprep.subr.bf16.mxu0 0
  %252 = vmatpush1.bf16.msra.mxu0 %v191
  %253 = vmatprep.subr.bf16.mxu0 0
  %254 = vmatpush1.bf16.msra.mxu0 %v192
  %255 = vmatprep.subr.bf16.mxu0 0
  %256 = vmatpush1.bf16.msra.mxu0 %v193
  %257 = vmatprep.subr.bf16.mxu0 0
  %258 = vmatpush1.bf16.msra.mxu0 %v194
  %259 = vmatprep.subr.bf16.mxu0 0
  %260 = vmatpush1.bf16.msra.mxu0 %v195
  %261 = vmatprep.subr.bf16.mxu0 0
  %262 = vmatpush1.bf16.msra.mxu0 %v196
  %263 = vmatprep.subr.bf16.mxu0 0
  %264 = vmatpush1.bf16.msra.mxu0 %v197
  %265 = vmatprep.subr.bf16.mxu0 0
  %266 = vmatpush1.bf16.msra.mxu0 %v198
  %267 = vmatprep.subr.bf16.mxu0 0
  %268 = vmatpush1.bf16.msra.mxu0 %v199
  %269 = vmatprep.subr.bf16.mxu0 0
  %270 = vmatpush1.bf16.msra.mxu0 %v241
  %271 = vmatprep.subr.bf16.mxu0 0
  %272 = vmatpush1.bf16.msra.mxu0 0
  %273 = vmatprep.subr.bf16.mxu0 0
  %274 = vmatpush1.bf16.msra.mxu0 0
  %275 = vmatprep.mubr.bf16.mxu0 %v216
  %276 = vmatmul.mubr.bf16.gmra.mrb[0].mxu0 %v109
  %v277 = vpop.f32.mrb[0].mxu0
  %v278 = vadd.f32 0.0, %v277
  %v279 = vpop.f32.mrb[0].mxu0
  %v280 = vpop.f32.mrb[0].mxu0
  %v281 = vadd.f32 0.0, %v280
  %v282 = vpop.f32.mrb[0].mxu0
  %283 = vmatprep.mubr.bf16.mxu0 %v219
  %284 = vmatmul.mubr.bf16.gmra.mrb[0].mxu0 %v111
  %v285 = vpop.f32.mrb[0].mxu0
  %v286 = vadd.f32 0.0, %v285
  %v287 = vpop.f32.mrb[0].mxu0
  %v288 = vpop.f32.mrb[0].mxu0
  %v289 = vadd.f32 0.0, %v288
  %v290 = vpop.f32.mrb[0].mxu0
  %291 = vmatprep.mubr.bf16.mxu0 %v222
  %292 = vmatmul.mubr.bf16.gmra.mrb[0].mxu0 %v113
  %v293 = vpop.f32.mrb[0].mxu0
  %v294 = vadd.f32 0.0, %v293
  %v295 = vpop.f32.mrb[0].mxu0
  %v296 = vpop.f32.mrb[0].mxu0
  %v297 = vadd.f32 0.0, %v296
  %v298 = vpop.f32.mrb[0].mxu0
  %299 = vmatprep.mubr.bf16.mxu0 %v225
  %300 = vmatmul.mubr.bf16.gmra.mrb[0].mxu0 %v115
  %v301 = vpop.f32.mrb[0].mxu0
  %v302 = vadd.f32 0.0, %v301
  %v303 = vpop.f32.mrb[0].mxu0
  %v304 = vpop.f32.mrb[0].mxu0
  %v305 = vadd.f32 0.0, %v304
  %v306 = vpop.f32.mrb[0].mxu0
  %307 = vmatprep.mubr.bf16.mxu0 %v228
  %308 = vmatmul.mubr.bf16.gmra.mrb[0].mxu0 %v117
  %v309 = vpop.f32.mrb[0].mxu0
  %v310 = vadd.f32 0.0, %v309
  %v311 = vpop.f32.mrb[0].mxu0
  %v312 = vpop.f32.mrb[0].mxu0
  %v313 = vadd.f32 0.0, %v312
  %v314 = vpop.f32.mrb[0].mxu0
  %315 = vmatprep.mubr.bf16.mxu0 %v231
  %316 = vmatmul.mubr.bf16.gmra.mrb[0].mxu0 %v119
  %v317 = vpop.f32.mrb[0].mxu0
  %v318 = vadd.f32 0.0, %v317
  %v319 = vpop.f32.mrb[0].mxu0
  %v320 = vpop.f32.mrb[0].mxu0
  %v321 = vadd.f32 0.0, %v320
  %v322 = vpop.f32.mrb[0].mxu0
  %323 = vmatprep.mubr.bf16.mxu0 %v234
  %324 = vmatmul.mubr.bf16.gmra.mrb[0].mxu0 %v121
  %v325 = vpop.f32.mrb[0].mxu0
  %v326 = vadd.f32 0.0, %v325
  %v327 = vpop.f32.mrb[0].mxu0
  %v328 = vpop.f32.mrb[0].mxu0
  %v329 = vadd.f32 0.0, %v328
  %v330 = vpop.f32.mrb[0].mxu0
  %331 = vmatprep.mubr.bf16.mxu0 %v237
  %332 = vmatmul.mubr.bf16.gmra.mrb[0].mxu0 %v123
  %v333 = vpop.f32.mrb[0].mxu0
  %v334 = vadd.f32 0.0, %v333
  %v335 = vpop.f32.mrb[0].mxu0
  %v336 = vpop.f32.mrb[0].mxu0
  %v337 = vadd.f32 0.0, %v336
  %v338 = vpop.f32.mrb[0].mxu0
  %339 = vdwg.mxu0
  %v340 = vld [vmem:[%s2] sm:$0x1]
  %v342 = vlaneseq
  %v343 = vshrl.u32 %v342, 7
  %v344 = vsub.s32 0, %v343
  %v345 = vrot.slane %v340, %v344
  %v347 = vmul.f32 %v278, %v345
  %v348 = vmul.f32 %v281, %v345
  %v349 = vmul.f32 %v286, %v345
  %v350 = vmul.f32 %v289, %v345
  %v351 = vmul.f32 %v294, %v345
  %v352 = vmul.f32 %v297, %v345
  %v353 = vmul.f32 %v302, %v345
  %v354 = vmul.f32 %v305, %v345
  %v355 = vmul.f32 %v310, %v345
  %v356 = vmul.f32 %v313, %v345
  %v357 = vmul.f32 %v318, %v345
  %v358 = vmul.f32 %v321, %v345
  %v359 = vmul.f32 %v326, %v345
  %v360 = vmul.f32 %v329, %v345
  %v361 = vmul.f32 %v334, %v345
  %v362 = vmul.f32 %v337, %v345
  %v363 = vld [vmem:[%s3] sm:$0x1]
  %v365 = vlaneseq
  %v366 = vshrl.u32 %v365, 7
  %v367 = vsub.s32 0, %v366
  %v368 = vrot.slane %v363, %v367
  %v370 = vadd.f32 %v347, %v368
  %v371 = vadd.f32 %v348, %v368
  %v372 = vadd.f32 %v349, %v368
  %v373 = vadd.f32 %v350, %v368
  %v374 = vadd.f32 %v351, %v368
  %v375 = vadd.f32 %v352, %v368
  %v376 = vadd.f32 %v353, %v368
  %v377 = vadd.f32 %v354, %v368
  %v378 = vadd.f32 %v355, %v368
  %v379 = vadd.f32 %v356, %v368
  %v380 = vadd.f32 %v357, %v368
  %v381 = vadd.f32 %v358, %v368
  %v382 = vadd.f32 %v359, %v368
  %v383 = vadd.f32 %v360, %v368
  %v384 = vadd.f32 %v361, %v368
  %v385 = vadd.f32 %v362, %v368
  %v386 = vmax.f32 %v370, 0.0
  %v387 = vmax.f32 %v371, 0.0
  %v388 = vmax.f32 %v372, 0.0
  %v389 = vmax.f32 %v373, 0.0
  %v390 = vmax.f32 %v374, 0.0
  %v391 = vmax.f32 %v375, 0.0
  %v392 = vmax.f32 %v376, 0.0
  %v393 = vmax.f32 %v377, 0.0
  %v394 = vmax.f32 %v378, 0.0
  %v395 = vmax.f32 %v379, 0.0
  %v396 = vmax.f32 %v380, 0.0
  %v397 = vmax.f32 %v381, 0.0
  %v398 = vmax.f32 %v382, 0.0
  %v399 = vmax.f32 %v383, 0.0
  %v400 = vmax.f32 %v384, 0.0
  %v401 = vmax.f32 %v385, 0.0
  %v402 = vpack.c.bf16 %v387, %v386
  %v403 = vpack.c.bf16 %v389, %v388
  %v404 = vpack.c.bf16 %v391, %v390
  %v405 = vpack.c.bf16 %v393, %v392
  %v406 = vpack.c.bf16 %v395, %v394
  %v407 = vpack.c.bf16 %v397, %v396
  %v408 = vpack.c.bf16 %v399, %v398
  %v409 = vpack.c.bf16 %v401, %v400
  %v418 = vunpack.c.l.b16 %v402
  %v419 = vunpack.c.h.b16 %v402
  %v420 = vunpack.c.l.b16 %v403
  %v421 = vunpack.c.h.b16 %v403
  %v422 = vunpack.c.l.b16 %v404
  %v423 = vunpack.c.h.b16 %v404
  %v424 = vunpack.c.l.b16 %v405
  %v425 = vunpack.c.h.b16 %v405
  %v426 = vunpack.c.l.b16 %v406
  %v427 = vunpack.c.h.b16 %v406
  %v428 = vunpack.c.l.b16 %v407
  %v429 = vunpack.c.h.b16 %v407
  %v430 = vunpack.c.l.b16 %v408
  %v431 = vunpack.c.h.b16 %v408
  %v432 = vunpack.c.l.b16 %v409
  %v433 = vunpack.c.h.b16 %v409
  %v434 = vpack.c.b16 %v418, %v418
  %v435 = vpack.c.b16 %v419, %v419
  %v436 = vpack.c.b16 %v420, %v420
  %v437 = vpack.c.b16 %v421, %v421
  %v438 = vpack.c.b16 %v422, %v422
  %v439 = vpack.c.b16 %v423, %v423
  %v440 = vpack.c.b16 %v424, %v424
  %v441 = vpack.c.b16 %v425, %v425
  %v442 = vpack.c.b16 %v426, %v426
  %v443 = vpack.c.b16 %v427, %v427
  %v444 = vpack.c.b16 %v428, %v428
  %v445 = vpack.c.b16 %v429, %v429
  %v446 = vpack.c.b16 %v430, %v430
  %v447 = vpack.c.b16 %v431, %v431
  %v448 = vpack.c.b16 %v432, %v432
  %v449 = vpack.c.b16 %v433, %v433
  %vm466 = vcmask 125952
  %467 = vst.msk [vmem:[%s4] sm:$0xf] %vm466, %v434
  %468 = vst.msk [vmem:[%s4 + $0x4] sm:$0xf] %vm466, %v435
  %469 = vst.msk [vmem:[%s4 + $0x8] sm:$0xf] %vm466, %v436
  %470 = vst.msk [vmem:[%s4 + $0xc] sm:$0xf] %vm466, %v437
  %471 = vst.msk [vmem:[%s4 + $0x10] sm:$0xf] %vm466, %v438
  %472 = vst.msk [vmem:[%s4 + $0x14] sm:$0xf] %vm466, %v439
  %473 = vst.msk [vmem:[%s4 + $0x18] sm:$0xf] %vm466, %v440
  %474 = vst.msk [vmem:[%s4 + $0x1c] sm:$0xf] %vm466, %v441
  %475 = vst.msk [vmem:[%s4 + $0x20] sm:$0xf] %vm466, %v442
  %476 = vst.msk [vmem:[%s4 + $0x24] sm:$0xf] %vm466, %v443
  %477 = vst.msk [vmem:[%s4 + $0x28] sm:$0xf] %vm466, %v444
  %478 = vst.msk [vmem:[%s4 + $0x2c] sm:$0xf] %vm466, %v445
  %479 = vst.msk [vmem:[%s4 + $0x30] sm:$0xf] %vm466, %v446
  %480 = vst.msk [vmem:[%s4 + $0x34] sm:$0xf] %vm466, %v447
  %481 = vst.msk [vmem:[%s4 + $0x38] sm:$0xf] %vm466, %v448
  %482 = vst.msk [vmem:[%s4 + $0x3c] sm:$0xf] %vm466, %v449
  // Predicated region
  $region18: #{deeplab_forward.28} parent=0 // pred_check
    _
  $region19: #{deeplab_forward.28} parent=0 // pred_check_branch
    %484 = sbr.rel (0) target = $region21
  $region20: #{deeplab_forward.28} parent=0 // pred_region
    _
  $region21: #{deeplab_forward.28} parent=0 // pred_fallthru
    _
  // Predicated region
  $region22: #{deeplab_forward.28} parent=0 // pred_check
    _
  $region23: #{deeplab_forward.28} parent=0 // pred_check_branch
    %486 = sbr.rel (0) target = $region25
  $region24: #{deeplab_forward.28} parent=0 // pred_region
    _
  $region25: #{deeplab_forward.28} parent=0 // pred_fallthru
    _

// kernel: deeplab_forward.29
$region0: #{deeplab_forward.29}
  #allocation0 [shape = 'u32[]', space=smem, size = 0x4, offset = 0x4, fixed_abs, tag = 'smem constant byte address 0x4 - core index']
  #allocation1 [shape = 'u32[144,128]{1,0:T(1,128)}', space=vmem, size = 0x12000, scoped, tag = 'internal scratch']
  %s0 = inlined_call_operand.vmem [shape: bf16[128,144], index: 0, kind: input, shape index: {}]
  %s1 = inlined_call_operand.vmem [shape: bf16[144,16], index: 1, kind: input, shape index: {}]
  %s2 = inlined_call_operand.vmem [shape: f32[1,16], index: 2, kind: input, shape index: {}]
  %s3 = inlined_call_operand.vmem [shape: f32[1,16], index: 3, kind: input, shape index: {}]
  %s4 = inlined_call_operand.vmem [shape: bf16[128,16], index: 4, kind: output, shape index: {}]
  %s5 = sld [smem:[#allocation0]]
  $region26: #{deeplab_forward.29} parent=0
    _
  %s7 = ssub.s32 1, %s5
  %s8 = scalar_select 0, %s7, %s5
  // Predicated region
  $region2: #{deeplab_forward.29} parent=0 // pred_check
    _
  $region3: #{deeplab_forward.29} parent=0 // pred_check_branch
    %10 = sbr.rel (0) target = $region5
  $region4: #{deeplab_forward.29} parent=0 // pred_region
    _
  $region5: #{deeplab_forward.29} parent=0 // pred_fallthru
    _
  // Predicated region
  $region6: #{deeplab_forward.29} parent=0 // pred_check
    _
  $region7: #{deeplab_forward.29} parent=0 // pred_check_branch
    %12 = sbr.rel (0) target = $region9
  $region8: #{deeplab_forward.29} parent=0 // pred_region
    _
  $region9: #{deeplab_forward.29} parent=0 // pred_fallthru
    _
  // Predicated region
  $region10: #{deeplab_forward.29} parent=0 // pred_check
    _
  $region11: #{deeplab_forward.29} parent=0 // pred_check_branch
    %14 = sbr.rel (0) target = $region13
  $region12: #{deeplab_forward.29} parent=0 // pred_region
    _
  $region13: #{deeplab_forward.29} parent=0 // pred_fallthru
    _
  // Predicated region
  $region14: #{deeplab_forward.29} parent=0 // pred_check
    _
  $region15: #{deeplab_forward.29} parent=0 // pred_check_branch
    %16 = sbr.rel (0) target = $region17
  $region16: #{deeplab_forward.29} parent=0 // pred_region
    _
  $region17: #{deeplab_forward.29} parent=0 // pred_fallthru
    _
  %v18 = vld [vmem:[%s0] sm:$0xff]
  %v19 = vld [vmem:[%s0 + $0x8] sm:$0xff]
  %v20 = vld [vmem:[%s0 + $0x10] sm:$0xff]
  %v21 = vld [vmem:[%s0 + $0x18] sm:$0xff]
  %v22 = vld [vmem:[%s0 + $0x20] sm:$0xff]
  %v23 = vld [vmem:[%s0 + $0x28] sm:$0xff]
  %v24 = vld [vmem:[%s0 + $0x30] sm:$0xff]
  %v25 = vld [vmem:[%s0 + $0x38] sm:$0xff]
  %v26 = vld [vmem:[%s0 + $0x40] sm:$0xff]
  %v27 = vld [vmem:[%s0 + $0x48] sm:$0xff]
  %v28 = vld [vmem:[%s0 + $0x50] sm:$0xff]
  %v29 = vld [vmem:[%s0 + $0x58] sm:$0xff]
  %v30 = vld [vmem:[%s0 + $0x60] sm:$0xff]
  %v31 = vld [vmem:[%s0 + $0x68] sm:$0xff]
  %v32 = vld [vmem:[%s0 + $0x70] sm:$0xff]
  %v33 = vld [vmem:[%s0 + $0x78] sm:$0xff]
  %v34 = vld [vmem:[%s1] sm:$0xf]
  %v35 = vld [vmem:[%s1 + $0x4] sm:$0xf]
  %v36 = vld [vmem:[%s1 + $0x8] sm:$0xf]
  %v37 = vld [vmem:[%s1 + $0xc] sm:$0xf]
  %v38 = vld [vmem:[%s1 + $0x10] sm:$0xf]
  %v39 = vld [vmem:[%s1 + $0x14] sm:$0xf]
  %v40 = vld [vmem:[%s1 + $0x18] sm:$0xf]
  %v41 = vld [vmem:[%s1 + $0x1c] sm:$0xf]
  %v42 = vld [vmem:[%s1 + $0x20] sm:$0xf]
  %v43 = vld [vmem:[%s1 + $0x24] sm:$0xf]
  %v44 = vld [vmem:[%s1 + $0x28] sm:$0xf]
  %v45 = vld [vmem:[%s1 + $0x2c] sm:$0xf]
  %v46 = vld [vmem:[%s1 + $0x30] sm:$0xf]
  %v47 = vld [vmem:[%s1 + $0x34] sm:$0xf]
  %v48 = vld [vmem:[%s1 + $0x38] sm:$0xf]
  %v49 = vld [vmem:[%s1 + $0x3c] sm:$0xf]
  %v50 = vld [vmem:[%s1 + $0x40] sm:$0xf]
  %v51 = vld [vmem:[%s1 + $0x44] sm:$0xf]
  %v68 = vunpack.c.l.b16 %v18
  %v69 = vunpack.c.h.b16 %v18
  %v70 = vunpack.c.l.b16 %v19
  %v71 = vunpack.c.h.b16 %v19
  %v72 = vunpack.c.l.b16 %v20
  %v73 = vunpack.c.h.b16 %v20
  %v74 = vunpack.c.l.b16 %v21
  %v75 = vunpack.c.h.b16 %v21
  %v76 = vunpack.c.l.b16 %v22
  %v77 = vunpack.c.h.b16 %v22
  %v78 = vunpack.c.l.b16 %v23
  %v79 = vunpack.c.h.b16 %v23
  %v80 = vunpack.c.l.b16 %v24
  %v81 = vunpack.c.h.b16 %v24
  %v82 = vunpack.c.l.b16 %v25
  %v83 = vunpack.c.h.b16 %v25
  %v84 = vunpack.c.l.b16 %v26
  %v85 = vunpack.c.h.b16 %v26
  %v86 = vunpack.c.l.b16 %v27
  %v87 = vunpack.c.h.b16 %v27
  %v88 = vunpack.c.l.b16 %v28
  %v89 = vunpack.c.h.b16 %v28
  %v90 = vunpack.c.l.b16 %v29
  %v91 = vunpack.c.h.b16 %v29
  %v92 = vunpack.c.l.b16 %v30
  %v93 = vunpack.c.h.b16 %v30
  %v94 = vunpack.c.l.b16 %v31
  %v95 = vunpack.c.h.b16 %v31
  %v96 = vunpack.c.l.b16 %v32
  %v97 = vunpack.c.h.b16 %v32
  %v98 = vunpack.c.l.b16 %v33
  %v99 = vunpack.c.h.b16 %v33
  %v100 = vpack.c.b16 %v70, %v68
  %v101 = vpack.c.b16 %v71, %v69
  %v102 = vpack.c.b16 %v74, %v72
  %v103 = vpack.c.b16 %v75, %v73
  %v104 = vpack.c.b16 %v78, %v76
  %v105 = vpack.c.b16 %v79, %v77
  %v106 = vpack.c.b16 %v82, %v80
  %v107 = vpack.c.b16 %v83, %v81
  %v108 = vpack.c.b16 %v86, %v84
  %v109 = vpack.c.b16 %v87, %v85
  %v110 = vpack.c.b16 %v90, %v88
  %v111 = vpack.c.b16 %v91, %v89
  %v112 = vpack.c.b16 %v94, %v92
  %v113 = vpack.c.b16 %v95, %v93
  %v114 = vpack.c.b16 %v98, %v96
  %v115 = vpack.c.b16 %v99, %v97
  %v142 = vunpack.c.l.b16 %v34
  %v143 = vunpack.c.l.b16 %v35
  %v144 = vunpack.c.l.b16 %v36
  %v145 = vunpack.c.l.b16 %v37
  %v146 = vunpack.c.l.b16 %v38
  %v147 = vunpack.c.l.b16 %v39
  %v148 = vunpack.c.l.b16 %v40
  %v149 = vunpack.c.l.b16 %v41
  %v150 = vunpack.c.l.b16 %v42
  %v151 = vunpack.c.l.b16 %v43
  %v152 = vunpack.c.l.b16 %v44
  %v153 = vunpack.c.l.b16 %v45
  %v154 = vunpack.c.l.b16 %v46
  %v155 = vunpack.c.l.b16 %v47
  %v156 = vunpack.c.l.b16 %v48
  %v157 = vunpack.c.l.b16 %v49
  %v158 = vunpack.c.l.b16 %v50
  %v159 = vunpack.c.l.b16 %v51
  %v160 = vpack.c.b16 %v143, %v142
  %v161 = vpack.c.b16 %v145, %v144
  %v162 = vpack.c.b16 %v147, %v146
  %v163 = vpack.c.b16 %v149, %v148
  %v164 = vpack.c.b16 %v151, %v150
  %v165 = vpack.c.b16 %v153, %v152
  %v166 = vpack.c.b16 %v155, %v154
  %v167 = vpack.c.b16 %v157, %v156
  %v168 = vpack.c.b16 %v159, %v158
  %vm178 = vcmask 130048
  %v180 = vsel %vm178, %v101, 0
  %v183 = vsel %vm178, %v103, 0
  %v186 = vsel %vm178, %v105, 0
  %v189 = vsel %vm178, %v107, 0
  %v192 = vsel %vm178, %v109, 0
  %v195 = vsel %vm178, %v111, 0
  %v198 = vsel %vm178, %v113, 0
  %v201 = vsel %vm178, %v115, 0
  %203 = vmatprep.subr.bf16.mxu0 0
  %204 = vmatpush1.bf16.msra.mxu0 %v160
  %205 = vmatprep.subr.bf16.mxu0 0
  %206 = vmatpush1.bf16.msra.mxu0 %v161
  %207 = vmatprep.subr.bf16.mxu0 0
  %208 = vmatpush1.bf16.msra.mxu0 %v162
  %209 = vmatprep.subr.bf16.mxu0 0
  %210 = vmatpush1.bf16.msra.mxu0 %v163
  %211 = vmatprep.subr.bf16.mxu0 0
  %212 = vmatpush1.bf16.msra.mxu0 %v164
  %213 = vmatprep.subr.bf16.mxu0 0
  %214 = vmatpush1.bf16.msra.mxu0 %v165
  %215 = vmatprep.subr.bf16.mxu0 0
  %216 = vmatpush1.bf16.msra.mxu0 %v166
  %217 = vmatprep.subr.bf16.mxu0 0
  %218 = vmatpush1.bf16.msra.mxu0 %v167
  %219 = vmatprep.subr.bf16.mxu0 0
  %220 = vmatpush1.bf16.msra.mxu0 %v168
  %221 = vmatprep.subr.bf16.mxu0 0
  %222 = vmatpush1.bf16.msra.mxu0 0
  %223 = vmatprep.subr.bf16.mxu0 0
  %224 = vmatpush1.bf16.msra.mxu0 0
  %225 = vmatprep.subr.bf16.mxu0 0
  %226 = vmatpush1.bf16.msra.mxu0 0
  %227 = vmatprep.subr.bf16.mxu0 0
  %228 = vmatpush1.bf16.msra.mxu0 0
  %229 = vmatprep.subr.bf16.mxu0 0
  %230 = vmatpush1.bf16.msra.mxu0 0
  %231 = vmatprep.subr.bf16.mxu0 0
  %232 = vmatpush1.bf16.msra.mxu0 0
  %233 = vmatprep.subr.bf16.mxu0 0
  %234 = vmatpush1.bf16.msra.mxu0 0
  %235 = vmatprep.mubr.bf16.mxu0 %v180
  %236 = vmatmul.mubr.bf16.gmra.mrb[0].mxu0 %v100
  %v237 = vpop.f32.mrb[0].mxu0
  %v238 = vadd.f32 0.0, %v237
  %v239 = vpop.f32.mrb[0].mxu0
  %v240 = vpop.f32.mrb[0].mxu0
  %v241 = vadd.f32 0.0, %v240
  %v242 = vpop.f32.mrb[0].mxu0
  %243 = vmatprep.mubr.bf16.mxu0 %v183
  %244 = vmatmul.mubr.bf16.gmra.mrb[0].mxu0 %v102
  %v245 = vpop.f32.mrb[0].mxu0
  %v246 = vadd.f32 0.0, %v245
  %v247 = vpop.f32.mrb[0].mxu0
  %v248 = vpop.f32.mrb[0].mxu0
  %v249 = vadd.f32 0.0, %v248
  %v250 = vpop.f32.mrb[0].mxu0
  %251 = vmatprep.mubr.bf16.mxu0 %v186
  %252 = vmatmul.mubr.bf16.gmra.mrb[0].mxu0 %v104
  %v253 = vpop.f32.mrb[0].mxu0
  %v254 = vadd.f32 0.0, %v253
  %v255 = vpop.f32.mrb[0].mxu0
  %v256 = vpop.f32.mrb[0].mxu0
  %v257 = vadd.f32 0.0, %v256
  %v258 = vpop.f32.mrb[0].mxu0
  %259 = vmatprep.mubr.bf16.mxu0 %v189
  %260 = vmatmul.mubr.bf16.gmra.mrb[0].mxu0 %v106
  %v261 = vpop.f32.mrb[0].mxu0
  %v262 = vadd.f32 0.0, %v261
  %v263 = vpop.f32.mrb[0].mxu0
  %v264 = vpop.f32.mrb[0].mxu0
  %v265 = vadd.f32 0.0, %v264
  %v266 = vpop.f32.mrb[0].mxu0
  %267 = vmatprep.mubr.bf16.mxu0 %v192
  %268 = vmatmul.mubr.bf16.gmra.mrb[0].mxu0 %v108
  %v269 = vpop.f32.mrb[0].mxu0
  %v270 = vadd.f32 0.0, %v269
  %v271 = vpop.f32.mrb[0].mxu0
  %v272 = vpop.f32.mrb[0].mxu0
  %v273 = vadd.f32 0.0, %v272
  %v274 = vpop.f32.mrb[0].mxu0
  %275 = vmatprep.mubr.bf16.mxu0 %v195
  %276 = vmatmul.mubr.bf16.gmra.mrb[0].mxu0 %v110
  %v277 = vpop.f32.mrb[0].mxu0
  %v278 = vadd.f32 0.0, %v277
  %v279 = vpop.f32.mrb[0].mxu0
  %v280 = vpop.f32.mrb[0].mxu0
  %v281 = vadd.f32 0.0, %v280
  %v282 = vpop.f32.mrb[0].mxu0
  %283 = vmatprep.mubr.bf16.mxu0 %v198
  %284 = vmatmul.mubr.bf16.gmra.mrb[0].mxu0 %v112
  %v285 = vpop.f32.mrb[0].mxu0
  %v286 = vadd.f32 0.0, %v285
  %v287 = vpop.f32.mrb[0].mxu0
  %v288 = vpop.f32.mrb[0].mxu0
  %v289 = vadd.f32 0.0, %v288
  %v290 = vpop.f32.mrb[0].mxu0
  %291 = vmatprep.mubr.bf16.mxu0 %v201
  %292 = vmatmul.mubr.bf16.gmra.mrb[0].mxu0 %v114
  %v293 = vpop.f32.mrb[0].mxu0
  %v294 = vadd.f32 0.0, %v293
  %v295 = vpop.f32.mrb[0].mxu0
  %v296 = vpop.f32.mrb[0].mxu0
  %v297 = vadd.f32 0.0, %v296
  %v298 = vpop.f32.mrb[0].mxu0
  %299 = vdwg.mxu0
  %v300 = vld [vmem:[%s2] sm:$0x1]
  %v302 = vlaneseq
  %v303 = vshrl.u32 %v302, 7
  %v304 = vsub.s32 0, %v303
  %v305 = vrot.slane %v300, %v304
  %v307 = vmul.f32 %v238, %v305
  %v308 = vmul.f32 %v241, %v305
  %v309 = vmul.f32 %v246, %v305
  %v310 = vmul.f32 %v249, %v305
  %v311 = vmul.f32 %v254, %v305
  %v312 = vmul.f32 %v257, %v305
  %v313 = vmul.f32 %v262, %v305
  %v314 = vmul.f32 %v265, %v305
  %v315 = vmul.f32 %v270, %v305
  %v316 = vmul.f32 %v273, %v305
  %v317 = vmul.f32 %v278, %v305
  %v318 = vmul.f32 %v281, %v305
  %v319 = vmul.f32 %v286, %v305
  %v320 = vmul.f32 %v289, %v305
  %v321 = vmul.f32 %v294, %v305
  %v322 = vmul.f32 %v297, %v305
  %v323 = vld [vmem:[%s3] sm:$0x1]
  %v325 = vlaneseq
  %v326 = vshrl.u32 %v325, 7
  %v327 = vsub.s32 0, %v326
  %v328 = vrot.slane %v323, %v327
  %v330 = vadd.f32 %v307, %v328
  %v331 = vadd.f32 %v308, %v328
  %v332 = vadd.f32 %v309, %v328
  %v333 = vadd.f32 %v310, %v328
  %v334 = vadd.f32 %v311, %v328
  %v335 = vadd.f32 %v312, %v328
  %v336 = vadd.f32 %v313, %v328
  %v337 = vadd.f32 %v314, %v328
  %v338 = vadd.f32 %v315, %v328
  %v339 = vadd.f32 %v316, %v328
  %v340 = vadd.f32 %v317, %v328
  %v341 = vadd.f32 %v318, %v328
  %v342 = vadd.f32 %v319, %v328
  %v343 = vadd.f32 %v320, %v328
  %v344 = vadd.f32 %v321, %v328
  %v345 = vadd.f32 %v322, %v328
  %v346 = vmax.f32 %v330, 0.0
  %v347 = vmax.f32 %v331, 0.0
  %v348 = vmax.f32 %v332, 0.0
  %v349 = vmax.f32 %v333, 0.0
  %v350 = vmax.f32 %v334, 0.0
  %v351 = vmax.f32 %v335, 0.0
  %v352 = vmax.f32 %v336, 0.0
  %v353 = vmax.f32 %v337, 0.0
  %v354 = vmax.f32 %v338, 0.0
  %v355 = vmax.f32 %v339, 0.0
  %v356 = vmax.f32 %v340, 0.0
  %v357 = vmax.f32 %v341, 0.0
  %v358 = vmax.f32 %v342, 0.0
  %v359 = vmax.f32 %v343, 0.0
  %v360 = vmax.f32 %v344, 0.0
  %v361 = vmax.f32 %v345, 0.0
  %v362 = vpack.c.bf16 %v347, %v346
  %v363 = vpack.c.bf16 %v349, %v348
  %v364 = vpack.c.bf16 %v351, %v350
  %v365 = vpack.c.bf16 %v353, %v352
  %v366 = vpack.c.bf16 %v355, %v354
  %v367 = vpack.c.bf16 %v357, %v356
  %v368 = vpack.c.bf16 %v359, %v358
  %v369 = vpack.c.bf16 %v361, %v360
  %v378 = vunpack.c.l.b16 %v362
  %v379 = vunpack.c.h.b16 %v362
  %v380 = vunpack.c.l.b16 %v363
  %v381 = vunpack.c.h.b16 %v363
  %v382 = vunpack.c.l.b16 %v364
  %v383 = vunpack.c.h.b16 %v364
  %v384 = vunpack.c.l.b16 %v365
  %v385 = vunpack.c.h.b16 %v365
  %v386 = vunpack.c.l.b16 %v366
  %v387 = vunpack.c.h.b16 %v366
  %v388 = vunpack.c.l.b16 %v367
  %v389 = vunpack.c.h.b16 %v367
  %v390 = vunpack.c.l.b16 %v368
  %v391 = vunpack.c.h.b16 %v368
  %v392 = vunpack.c.l.b16 %v369
  %v393 = vunpack.c.h.b16 %v369
  %v394 = vpack.c.b16 %v378, %v378
  %v395 = vpack.c.b16 %v379, %v379
  %v396 = vpack.c.b16 %v380, %v380
  %v397 = vpack.c.b16 %v381, %v381
  %v398 = vpack.c.b16 %v382, %v382
  %v399 = vpack.c.b16 %v383, %v383
  %v400 = vpack.c.b16 %v384, %v384
  %v401 = vpack.c.b16 %v385, %v385
  %v402 = vpack.c.b16 %v386, %v386
  %v403 = vpack.c.b16 %v387, %v387
  %v404 = vpack.c.b16 %v388, %v388
  %v405 = vpack.c.b16 %v389, %v389
  %v406 = vpack.c.b16 %v390, %v390
  %v407 = vpack.c.b16 %v391, %v391
  %v408 = vpack.c.b16 %v392, %v392
  %v409 = vpack.c.b16 %v393, %v393
  %vm426 = vcmask 125952
  %427 = vst.msk [vmem:[%s4] sm:$0xf] %vm426, %v394
  %428 = vst.msk [vmem:[%s4 + $0x4] sm:$0xf] %vm426, %v395
  %429 = vst.msk [vmem:[%s4 + $0x8] sm:$0xf] %vm426, %v396
  %430 = vst.msk [vmem:[%s4 + $0xc] sm:$0xf] %vm426, %v397
  %431 = vst.msk [vmem:[%s4 + $0x10] sm:$0xf] %vm426, %v398
  %432 = vst.msk [vmem:[%s4 + $0x14] sm:$0xf] %vm426, %v399
  %433 = vst.msk [vmem:[%s4 + $0x18] sm:$0xf] %vm426, %v400
  %434 = vst.msk [vmem:[%s4 + $0x1c] sm:$0xf] %vm426, %v401
  %435 = vst.msk [vmem:[%s4 + $0x20] sm:$0xf] %vm426, %v402
  %436 = vst.msk [vmem:[%s4 + $0x24] sm:$0xf] %vm426, %v403
  %437 = vst.msk [vmem:[%s4 + $0x28] sm:$0xf] %vm426, %v404
  %438 = vst.msk [vmem:[%s4 + $0x2c] sm:$0xf] %vm426, %v405
  %439 = vst.msk [vmem:[%s4 + $0x30] sm:$0xf] %vm426, %v406
  %440 = vst.msk [vmem:[%s4 + $0x34] sm:$0xf] %vm426, %v407
  %441 = vst.msk [vmem:[%s4 + $0x38] sm:$0xf] %vm426, %v408
  %442 = vst.msk [vmem:[%s4 + $0x3c] sm:$0xf] %vm426, %v409
  // Predicated region
  $region18: #{deeplab_forward.29} parent=0 // pred_check
    _
  $region19: #{deeplab_forward.29} parent=0 // pred_check_branch
    %444 = sbr.rel (0) target = $region21
  $region20: #{deeplab_forward.29} parent=0 // pred_region
    _
  $region21: #{deeplab_forward.29} parent=0 // pred_fallthru
    _
  // Predicated region
  $region22: #{deeplab_forward.29} parent=0 // pred_check
    _
  $region23: #{deeplab_forward.29} parent=0 // pred_check_branch
    %446 = sbr.rel (0) target = $region25
  $region24: #{deeplab_forward.29} parent=0 // pred_region
    _
  $region25: #{deeplab_forward.29} parent=0 // pred_fallthru
    _

// kernel: deeplab_forward.30
$region0: #{deeplab_forward.30}
  #allocation0 [shape = 'u32[]', space=smem, size = 0x4, offset = 0x4, fixed_abs, tag = 'smem constant byte address 0x4 - core index']
  #allocation1 [shape = 'u32[144,128]{1,0:T(1,128)}', space=vmem, size = 0x12000, scoped, tag = 'internal scratch']
  %s0 = inlined_call_operand.vmem [shape: bf16[128,16], index: 0, kind: input, shape index: {}]
  %s1 = inlined_call_operand.vmem [shape: bf16[16,21], index: 1, kind: input, shape index: {}]
  %s2 = inlined_call_operand.vmem [shape: f32[1,21], index: 2, kind: input, shape index: {}]
  %s3 = inlined_call_operand.vmem [shape: f32[1,21], index: 3, kind: input, shape index: {}]
  %s4 = inlined_call_operand.vmem [shape: f32[128,21], index: 4, kind: output, shape index: {}]
  %s5 = sld [smem:[#allocation0]]
  $region26: #{deeplab_forward.30} parent=0
    _
  %s7 = ssub.s32 1, %s5
  %s8 = scalar_select 0, %s7, %s5
  // Predicated region
  $region2: #{deeplab_forward.30} parent=0 // pred_check
    _
  $region3: #{deeplab_forward.30} parent=0 // pred_check_branch
    %10 = sbr.rel (0) target = $region5
  $region4: #{deeplab_forward.30} parent=0 // pred_region
    _
  $region5: #{deeplab_forward.30} parent=0 // pred_fallthru
    _
  // Predicated region
  $region6: #{deeplab_forward.30} parent=0 // pred_check
    _
  $region7: #{deeplab_forward.30} parent=0 // pred_check_branch
    %12 = sbr.rel (0) target = $region9
  $region8: #{deeplab_forward.30} parent=0 // pred_region
    _
  $region9: #{deeplab_forward.30} parent=0 // pred_fallthru
    _
  // Predicated region
  $region10: #{deeplab_forward.30} parent=0 // pred_check
    _
  $region11: #{deeplab_forward.30} parent=0 // pred_check_branch
    %14 = sbr.rel (0) target = $region13
  $region12: #{deeplab_forward.30} parent=0 // pred_region
    _
  $region13: #{deeplab_forward.30} parent=0 // pred_fallthru
    _
  // Predicated region
  $region14: #{deeplab_forward.30} parent=0 // pred_check
    _
  $region15: #{deeplab_forward.30} parent=0 // pred_check_branch
    %16 = sbr.rel (0) target = $region17
  $region16: #{deeplab_forward.30} parent=0 // pred_region
    _
  $region17: #{deeplab_forward.30} parent=0 // pred_fallthru
    _
  %v18 = vld [vmem:[%s0] sm:$0xf]
  %v19 = vld [vmem:[%s0 + $0x4] sm:$0xf]
  %v20 = vld [vmem:[%s0 + $0x8] sm:$0xf]
  %v21 = vld [vmem:[%s0 + $0xc] sm:$0xf]
  %v22 = vld [vmem:[%s0 + $0x10] sm:$0xf]
  %v23 = vld [vmem:[%s0 + $0x14] sm:$0xf]
  %v24 = vld [vmem:[%s0 + $0x18] sm:$0xf]
  %v25 = vld [vmem:[%s0 + $0x1c] sm:$0xf]
  %v26 = vld [vmem:[%s0 + $0x20] sm:$0xf]
  %v27 = vld [vmem:[%s0 + $0x24] sm:$0xf]
  %v28 = vld [vmem:[%s0 + $0x28] sm:$0xf]
  %v29 = vld [vmem:[%s0 + $0x2c] sm:$0xf]
  %v30 = vld [vmem:[%s0 + $0x30] sm:$0xf]
  %v31 = vld [vmem:[%s0 + $0x34] sm:$0xf]
  %v32 = vld [vmem:[%s0 + $0x38] sm:$0xf]
  %v33 = vld [vmem:[%s0 + $0x3c] sm:$0xf]
  %v34 = vld [vmem:[%s1] sm:$0xf]
  %v35 = vld [vmem:[%s1 + $0x4] sm:$0xf]
  %v52 = vunpack.c.l.b16 %v18
  %v53 = vunpack.c.l.b16 %v19
  %v54 = vunpack.c.l.b16 %v20
  %v55 = vunpack.c.l.b16 %v21
  %v56 = vunpack.c.l.b16 %v22
  %v57 = vunpack.c.l.b16 %v23
  %v58 = vunpack.c.l.b16 %v24
  %v59 = vunpack.c.l.b16 %v25
  %v60 = vunpack.c.l.b16 %v26
  %v61 = vunpack.c.l.b16 %v27
  %v62 = vunpack.c.l.b16 %v28
  %v63 = vunpack.c.l.b16 %v29
  %v64 = vunpack.c.l.b16 %v30
  %v65 = vunpack.c.l.b16 %v31
  %v66 = vunpack.c.l.b16 %v32
  %v67 = vunpack.c.l.b16 %v33
  %v68 = vpack.c.b16 %v53, %v52
  %v69 = vpack.c.b16 %v55, %v54
  %v70 = vpack.c.b16 %v57, %v56
  %v71 = vpack.c.b16 %v59, %v58
  %v72 = vpack.c.b16 %v61, %v60
  %v73 = vpack.c.b16 %v63, %v62
  %v74 = vpack.c.b16 %v65, %v64
  %v75 = vpack.c.b16 %v67, %v66
  %v78 = vunpack.c.l.b16 %v34
  %v79 = vunpack.c.l.b16 %v35
  %v80 = vpack.c.b16 %v79, %v78
  %vm82 = vcmask 130048
  %v84 = vsel %vm82, %v68, 0
  %v87 = vsel %vm82, %v69, 0
  %v90 = vsel %vm82, %v70, 0
  %v93 = vsel %vm82, %v71, 0
  %v96 = vsel %vm82, %v72, 0
  %v99 = vsel %vm82, %v73, 0
  %v102 = vsel %vm82, %v74, 0
  %v105 = vsel %vm82, %v75, 0
  %107 = vmatprep.subr.bf16.mxu0 0
  %108 = vmatpush1.bf16.msra.mxu0 %v80
  %109 = vmatprep.subr.bf16.mxu0 0
  %110 = vmatpush1.bf16.msra.mxu0 0
  %111 = vmatprep.subr.bf16.mxu0 0
  %112 = vmatpush1.bf16.msra.mxu0 0
  %113 = vmatprep.subr.bf16.mxu0 0
  %114 = vmatpush1.bf16.msra.mxu0 0
  %115 = vmatprep.subr.bf16.mxu0 0
  %116 = vmatpush1.bf16.msra.mxu0 0
  %117 = vmatprep.subr.bf16.mxu0 0
  %118 = vmatpush1.bf16.msra.mxu0 0
  %119 = vmatprep.subr.bf16.mxu0 0
  %120 = vmatpush1.bf16.msra.mxu0 0
  %121 = vmatprep.subr.bf16.mxu0 0
  %122 = vmatpush1.bf16.msra.mxu0 0
  %123 = vmatprep.subr.bf16.mxu0 0
  %124 = vmatpush1.bf16.msra.mxu0 0
  %125 = vmatprep.subr.bf16.mxu0 0
  %126 = vmatpush1.bf16.msra.mxu0 0
  %127 = vmatprep.subr.bf16.mxu0 0
  %128 = vmatpush1.bf16.msra.mxu0 0
  %129 = vmatprep.subr.bf16.mxu0 0
  %130 = vmatpush1.bf16.msra.mxu0 0
  %131 = vmatprep.subr.bf16.mxu0 0
  %132 = vmatpush1.bf16.msra.mxu0 0
  %133 = vmatprep.subr.bf16.mxu0 0
  %134 = vmatpush1.bf16.msra.mxu0 0
  %135 = vmatprep.subr.bf16.mxu0 0
  %136 = vmatpush1.bf16.msra.mxu0 0
  %137 = vmatprep.subr.bf16.mxu0 0
  %138 = vmatpush1.bf16.msra.mxu0 0
  %139 = vmatprep.mubr.bf16.mxu0 0
  %140 = vmatmul.mubr.bf16.gmra.mrb[0].mxu0 %v84
  %v141 = vpop.f32.mrb[0].mxu0
  %v142 = vadd.f32 0.0, %v141
  %v143 = vpop.f32.mrb[0].mxu0
  %v144 = vpop.f32.mrb[0].mxu0
  %v145 = vadd.f32 0.0, %v144
  %v146 = vpop.f32.mrb[0].mxu0
  %147 = vmatprep.mubr.bf16.mxu0 0
  %148 = vmatmul.mubr.bf16.gmra.mrb[0].mxu0 %v87
  %v149 = vpop.f32.mrb[0].mxu0
  %v150 = vadd.f32 0.0, %v149
  %v151 = vpop.f32.mrb[0].mxu0
  %v152 = vpop.f32.mrb[0].mxu0
  %v153 = vadd.f32 0.0, %v152
  %v154 = vpop.f32.mrb[0].mxu0
  %155 = vmatprep.mubr.bf16.mxu0 0
  %156 = vmatmul.mubr.bf16.gmra.mrb[0].mxu0 %v90
  %v157 = vpop.f32.mrb[0].mxu0
  %v158 = vadd.f32 0.0, %v157
  %v159 = vpop.f32.mrb[0].mxu0
  %v160 = vpop.f32.mrb[0].mxu0
  %v161 = vadd.f32 0.0, %v160
  %v162 = vpop.f32.mrb[0].mxu0
  %163 = vmatprep.mubr.bf16.mxu0 0
  %164 = vmatmul.mubr.bf16.gmra.mrb[0].mxu0 %v93
  %v165 = vpop.f32.mrb[0].mxu0
  %v166 = vadd.f32 0.0, %v165
  %v167 = vpop.f32.mrb[0].mxu0
  %v168 = vpop.f32.mrb[0].mxu0
  %v169 = vadd.f32 0.0, %v168
  %v170 = vpop.f32.mrb[0].mxu0
  %171 = vmatprep.mubr.bf16.mxu0 0
  %172 = vmatmul.mubr.bf16.gmra.mrb[0].mxu0 %v96
  %v173 = vpop.f32.mrb[0].mxu0
  %v174 = vadd.f32 0.0, %v173
  %v175 = vpop.f32.mrb[0].mxu0
  %v176 = vpop.f32.mrb[0].mxu0
  %v177 = vadd.f32 0.0, %v176
  %v178 = vpop.f32.mrb[0].mxu0
  %179 = vmatprep.mubr.bf16.mxu0 0
  %180 = vmatmul.mubr.bf16.gmra.mrb[0].mxu0 %v99
  %v181 = vpop.f32.mrb[0].mxu0
  %v182 = vadd.f32 0.0, %v181
  %v183 = vpop.f32.mrb[0].mxu0
  %v184 = vpop.f32.mrb[0].mxu0
  %v185 = vadd.f32 0.0, %v184
  %v186 = vpop.f32.mrb[0].mxu0
  %187 = vmatprep.mubr.bf16.mxu0 0
  %188 = vmatmul.mubr.bf16.gmra.mrb[0].mxu0 %v102
  %v189 = vpop.f32.mrb[0].mxu0
  %v190 = vadd.f32 0.0, %v189
  %v191 = vpop.f32.mrb[0].mxu0
  %v192 = vpop.f32.mrb[0].mxu0
  %v193 = vadd.f32 0.0, %v192
  %v194 = vpop.f32.mrb[0].mxu0
  %195 = vmatprep.mubr.bf16.mxu0 0
  %196 = vmatmul.mubr.bf16.gmra.mrb[0].mxu0 %v105
  %v197 = vpop.f32.mrb[0].mxu0
  %v198 = vadd.f32 0.0, %v197
  %v199 = vpop.f32.mrb[0].mxu0
  %v200 = vpop.f32.mrb[0].mxu0
  %v201 = vadd.f32 0.0, %v200
  %v202 = vpop.f32.mrb[0].mxu0
  %203 = vdwg.mxu0
  %v204 = vld [vmem:[%s2] sm:$0x1]
  %v206 = vlaneseq
  %v207 = vshrl.u32 %v206, 7
  %v208 = vsub.s32 0, %v207
  %v209 = vrot.slane %v204, %v208
  %v211 = vmul.f32 %v142, %v209
  %v212 = vmul.f32 %v145, %v209
  %v213 = vmul.f32 %v150, %v209
  %v214 = vmul.f32 %v153, %v209
  %v215 = vmul.f32 %v158, %v209
  %v216 = vmul.f32 %v161, %v209
  %v217 = vmul.f32 %v166, %v209
  %v218 = vmul.f32 %v169, %v209
  %v219 = vmul.f32 %v174, %v209
  %v220 = vmul.f32 %v177, %v209
  %v221 = vmul.f32 %v182, %v209
  %v222 = vmul.f32 %v185, %v209
  %v223 = vmul.f32 %v190, %v209
  %v224 = vmul.f32 %v193, %v209
  %v225 = vmul.f32 %v198, %v209
  %v226 = vmul.f32 %v201, %v209
  %v227 = vld [vmem:[%s3] sm:$0x1]
  %v229 = vlaneseq
  %v230 = vshrl.u32 %v229, 7
  %v231 = vsub.s32 0, %v230
  %v232 = vrot.slane %v227, %v231
  %v234 = vadd.f32 %v211, %v232
  %v235 = vadd.f32 %v212, %v232
  %v236 = vadd.f32 %v213, %v232
  %v237 = vadd.f32 %v214, %v232
  %v238 = vadd.f32 %v215, %v232
  %v239 = vadd.f32 %v216, %v232
  %v240 = vadd.f32 %v217, %v232
  %v241 = vadd.f32 %v218, %v232
  %v242 = vadd.f32 %v219, %v232
  %v243 = vadd.f32 %v220, %v232
  %v244 = vadd.f32 %v221, %v232
  %v245 = vadd.f32 %v222, %v232
  %v246 = vadd.f32 %v223, %v232
  %v247 = vadd.f32 %v224, %v232
  %v248 = vadd.f32 %v225, %v232
  %v249 = vadd.f32 %v226, %v232
  %vm250 = vcmask 171008
  %251 = vst.msk [vmem:[%s4] sm:$0xff] %vm250, %v234
  %252 = vst.msk [vmem:[%s4 + $0x8] sm:$0xff] %vm250, %v235
  %253 = vst.msk [vmem:[%s4 + $0x10] sm:$0xff] %vm250, %v236
  %254 = vst.msk [vmem:[%s4 + $0x18] sm:$0xff] %vm250, %v237
  %255 = vst.msk [vmem:[%s4 + $0x20] sm:$0xff] %vm250, %v238
  %256 = vst.msk [vmem:[%s4 + $0x28] sm:$0xff] %vm250, %v239
  %257 = vst.msk [vmem:[%s4 + $0x30] sm:$0xff] %vm250, %v240
  %258 = vst.msk [vmem:[%s4 + $0x38] sm:$0xff] %vm250, %v241
  %259 = vst.msk [vmem:[%s4 + $0x40] sm:$0xff] %vm250, %v242
  %260 = vst.msk [vmem:[%s4 + $0x48] sm:$0xff] %vm250, %v243
  %261 = vst.msk [vmem:[%s4 + $0x50] sm:$0xff] %vm250, %v244
  %262 = vst.msk [vmem:[%s4 + $0x58] sm:$0xff] %vm250, %v245
  %263 = vst.msk [vmem:[%s4 + $0x60] sm:$0xff] %vm250, %v246
  %264 = vst.msk [vmem:[%s4 + $0x68] sm:$0xff] %vm250, %v247
  %265 = vst.msk [vmem:[%s4 + $0x70] sm:$0xff] %vm250, %v248
  %266 = vst.msk [vmem:[%s4 + $0x78] sm:$0xff] %vm250, %v249
  // Predicated region
  $region18: #{deeplab_forward.30} parent=0 // pred_check
    _
  $region19: #{deeplab_forward.30} parent=0 // pred_check_branch
    %268 = sbr.rel (0) target = $region21
  $region20: #{deeplab_forward.30} parent=0 // pred_region
    _
  $region21: #{deeplab_forward.30} parent=0 // pred_fallthru
    _
  // Predicated region
  $region22: #{deeplab_forward.30} parent=0 // pred_check
    _
  $region23: #{deeplab_forward.30} parent=0 // pred_check_branch
    %270 = sbr.rel (0) target = $region25
  $region24: #{deeplab_forward.30} parent=0 // pred_region
    _
  $region25: #{deeplab_forward.30} parent=0 // pred_fallthru
    _

// kernel: deeplab_forward.31
$region0: #{deeplab_forward.31}
  #allocation0 [shape = 'u32[]', space=smem, size = 0x4, offset = 0x4, fixed_abs, tag = 'smem constant byte address 0x4 - core index']
  #allocation1 [shape = 'u32[144,128]{1,0:T(1,128)}', space=vmem, size = 0x12000, scoped, tag = 'internal scratch']
  %s0 = inlined_call_operand.vmem [shape: f32[48,64], index: 0, kind: input, shape index: {}]
  %s1 = inlined_call_operand.vmem [shape: f32[64,1024], index: 1, kind: input, shape index: {}]
  %s2 = inlined_call_operand.vmem [shape: f32[48,1024], index: 2, kind: output, shape index: {}]
  %s3 = sld [smem:[#allocation0]]
  $region18: #{deeplab_forward.31} parent=0
    _
  %s5 = ssub.s32 1, %s3
  %s6 = scalar_select 0, %s5, %s3
  // Predicated region
  $region2: #{deeplab_forward.31} parent=0 // pred_check
    _
  $region3: #{deeplab_forward.31} parent=0 // pred_check_branch
    %8 = sbr.rel (0) target = $region5
  $region4: #{deeplab_forward.31} parent=0 // pred_region
    _
  $region5: #{deeplab_forward.31} parent=0 // pred_fallthru
    _
  // Predicated region
  $region6: #{deeplab_forward.31} parent=0 // pred_check
    _
  $region7: #{deeplab_forward.31} parent=0 // pred_check_branch
    %10 = sbr.rel (0) target = $region9
  $region8: #{deeplab_forward.31} parent=0 // pred_region
    _
  $region9: #{deeplab_forward.31} parent=0 // pred_fallthru
    _
  %v11 = vld [vmem:[%s0] sm:$0xff]
  %v12 = vld [vmem:[%s0 + $0x8] sm:$0xff]
  %v13 = vld [vmem:[%s0 + $0x10] sm:$0xff]
  %v14 = vld [vmem:[%s0 + $0x18] sm:$0xff]
  %v15 = vld [vmem:[%s0 + $0x20] sm:$0xff]
  %v16 = vld [vmem:[%s0 + $0x28] sm:$0xff]
  %v17 = vld [vmem:[%s1] sm:$0xff]
  %v18 = vld [vmem:[%s1 + $0x8] sm:$0xff]
  %v19 = vld [vmem:[%s1 + $0x10] sm:$0xff]
  %v20 = vld [vmem:[%s1 + $0x18] sm:$0xff]
  %v21 = vld [vmem:[%s1 + $0x20] sm:$0xff]
  %v22 = vld [vmem:[%s1 + $0x28] sm:$0xff]
  %v23 = vld [vmem:[%s1 + $0x30] sm:$0xff]
  %v24 = vld [vmem:[%s1 + $0x38] sm:$0xff]
  %v25 = vld [vmem:[%s1 + $0x40] sm:$0xff]
  %v26 = vld [vmem:[%s1 + $0x48] sm:$0xff]
  %v27 = vld [vmem:[%s1 + $0x50] sm:$0xff]
  %v28 = vld [vmem:[%s1 + $0x58] sm:$0xff]
  %v29 = vld [vmem:[%s1 + $0x60] sm:$0xff]
  %v30 = vld [vmem:[%s1 + $0x68] sm:$0xff]
  %v31 = vld [vmem:[%s1 + $0x70] sm:$0xff]
  %v32 = vld [vmem:[%s1 + $0x78] sm:$0xff]
  %v33 = vld [vmem:[%s1 + $0x80] sm:$0xff]
  %v34 = vld [vmem:[%s1 + $0x88] sm:$0xff]
  %v35 = vld [vmem:[%s1 + $0x90] sm:$0xff]
  %v36 = vld [vmem:[%s1 + $0x98] sm:$0xff]
  %v37 = vld [vmem:[%s1 + $0xa0] sm:$0xff]
  %v38 = vld [vmem:[%s1 + $0xa8] sm:$0xff]
  %v39 = vld [vmem:[%s1 + $0xb0] sm:$0xff]
  %v40 = vld [vmem:[%s1 + $0xb8] sm:$0xff]
  %v41 = vld [vmem:[%s1 + $0xc0] sm:$0xff]
  %v42 = vld [vmem:[%s1 + $0xc8] sm:$0xff]
  %v43 = vld [vmem:[%s1 + $0xd0] sm:$0xff]
  %v44 = vld [vmem:[%s1 + $0xd8] sm:$0xff]
  %v45 = vld [vmem:[%s1 + $0xe0] sm:$0xff]
  %v46 = vld [vmem:[%s1 + $0xe8] sm:$0xff]
  %v47 = vld [vmem:[%s1 + $0xf0] sm:$0xff]
  %v48 = vld [vmem:[%s1 + $0xf8] sm:$0xff]
  %v49 = vld [vmem:[%s1 + $0x100] sm:$0xff]
  %v50 = vld [vmem:[%s1 + $0x108] sm:$0xff]
  %v51 = vld [vmem:[%s1 + $0x110] sm:$0xff]
  %v52 = vld [vmem:[%s1 + $0x118] sm:$0xff]
  %v53 = vld [vmem:[%s1 + $0x120] sm:$0xff]
  %v54 = vld [vmem:[%s1 + $0x128] sm:$0xff]
  %v55 = vld [vmem:[%s1 + $0x130] sm:$0xff]
  %v56 = vld [vmem:[%s1 + $0x138] sm:$0xff]
  %v57 = vld [vmem:[%s1 + $0x140] sm:$0xff]
  %v58 = vld [vmem:[%s1 + $0x148] sm:$0xff]
  %v59 = vld [vmem:[%s1 + $0x150] sm:$0xff]
  %v60 = vld [vmem:[%s1 + $0x158] sm:$0xff]
  %v61 = vld [vmem:[%s1 + $0x160] sm:$0xff]
  %v62 = vld [vmem:[%s1 + $0x168] sm:$0xff]
  %v63 = vld [vmem:[%s1 + $0x170] sm:$0xff]
  %v64 = vld [vmem:[%s1 + $0x178] sm:$0xff]
  %v65 = vld [vmem:[%s1 + $0x180] sm:$0xff]
  %v66 = vld [vmem:[%s1 + $0x188] sm:$0xff]
  %v67 = vld [vmem:[%s1 + $0x190] sm:$0xff]
  %v68 = vld [vmem:[%s1 + $0x198] sm:$0xff]
  %v69 = vld [vmem:[%s1 + $0x1a0] sm:$0xff]
  %v70 = vld [vmem:[%s1 + $0x1a8] sm:$0xff]
  %v71 = vld [vmem:[%s1 + $0x1b0] sm:$0xff]
  %v72 = vld [vmem:[%s1 + $0x1b8] sm:$0xff]
  %v73 = vld [vmem:[%s1 + $0x1c0] sm:$0xff]
  %v74 = vld [vmem:[%s1 + $0x1c8] sm:$0xff]
  %v75 = vld [vmem:[%s1 + $0x1d0] sm:$0xff]
  %v76 = vld [vmem:[%s1 + $0x1d8] sm:$0xff]
  %v77 = vld [vmem:[%s1 + $0x1e0] sm:$0xff]
  %v78 = vld [vmem:[%s1 + $0x1e8] sm:$0xff]
  %v79 = vld [vmem:[%s1 + $0x1f0] sm:$0xff]
  %v80 = vld [vmem:[%s1 + $0x1f8] sm:$0xff]
  %vm81 = vcmask 523264
  %v83 = vsel %vm81, %v11, 0
  %v86 = vsel %vm81, %v12, 0
  %v89 = vsel %vm81, %v13, 0
  %v92 = vsel %vm81, %v14, 0
  %v95 = vsel %vm81, %v15, 0
  %v98 = vsel %vm81, %v16, 0
  %100 = vmatprep.subr.mxu0 %v18
  %101 = vmatpush1.msra.mxu0 %v17
  %102 = vmatprep.subr.mxu0 %v26
  %103 = vmatpush1.msra.mxu0 %v25
  %104 = vmatprep.subr.mxu0 %v34
  %105 = vmatpush1.msra.mxu0 %v33
  %106 = vmatprep.subr.mxu0 %v42
  %107 = vmatpush1.msra.mxu0 %v41
  %108 = vmatprep.subr.mxu0 %v50
  %109 = vmatpush1.msra.mxu0 %v49
  %110 = vmatprep.subr.mxu0 %v58
  %111 = vmatpush1.msra.mxu0 %v57
  %112 = vmatprep.subr.mxu0 %v66
  %113 = vmatpush1.msra.mxu0 %v65
  %114 = vmatprep.subr.mxu0 %v74
  %115 = vmatpush1.msra.mxu0 %v73
  %116 = vmatprep.subr.mxu0 0.0
  %117 = vmatpush1.msra.mxu0 0.0
  %118 = vmatprep.subr.mxu0 0.0
  %119 = vmatpush1.msra.mxu0 0.0
  %120 = vmatprep.subr.mxu0 0.0
  %121 = vmatpush1.msra.mxu0 0.0
  %122 = vmatprep.subr.mxu0 0.0
  %123 = vmatpush1.msra.mxu0 0.0
  %124 = vmatprep.subr.mxu0 0.0
  %125 = vmatpush1.msra.mxu0 0.0
  %126 = vmatprep.subr.mxu0 0.0
  %127 = vmatpush1.msra.mxu0 0.0
  %128 = vmatprep.subr.mxu0 0.0
  %129 = vmatpush1.msra.mxu0 0.0
  %130 = vmatprep.subr.mxu0 0.0
  %131 = vmatpush1.msra.mxu0 0.0
  %132 = vmatprep.subr.mxu0 0.0
  %133 = vmatpush1.msra.mxu0 0.0
  %134 = vmatprep.subr.mxu0 0.0
  %135 = vmatpush1.msra.mxu0 0.0
  %136 = vmatprep.subr.mxu0 0.0
  %137 = vmatpush1.msra.mxu0 0.0
  %138 = vmatprep.subr.mxu0 0.0
  %139 = vmatpush1.msra.mxu0 0.0
  %140 = vmatprep.subr.mxu0 0.0
  %141 = vmatpush1.msra.mxu0 0.0
  %142 = vmatprep.subr.mxu0 0.0
  %143 = vmatpush1.msra.mxu0 0.0
  %144 = vmatprep.subr.mxu0 0.0
  %145 = vmatpush1.msra.mxu0 0.0
  %146 = vmatprep.subr.mxu0 0.0
  %147 = vmatpush1.msra.mxu0 0.0
  %148 = vmatprep.subr.mxu0 0.0
  %149 = vmatpush1.msra.mxu0 0.0
  %150 = vmatprep.subr.mxu0 0.0
  %151 = vmatpush1.msra.mxu0 0.0
  %152 = vmatprep.subr.mxu0 0.0
  %153 = vmatpush1.msra.mxu0 0.0
  %154 = vmatprep.subr.mxu0 0.0
  %155 = vmatpush1.msra.mxu0 0.0
  %156 = vmatprep.subr.mxu0 0.0
  %157 = vmatpush1.msra.mxu0 0.0
  %158 = vmatprep.subr.mxu0 0.0
  %159 = vmatpush1.msra.mxu0 0.0
  %160 = vmatprep.subr.mxu0 0.0
  %161 = vmatpush1.msra.mxu0 0.0
  %162 = vmatprep.subr.mxu0 0.0
  %163 = vmatpush1.msra.mxu0 0.0
  %164 = vmatprep.mubr.f32.mxu0 0.0
  %165 = vmatmul.mubr.f32.gmra.mrb[0].mxu0 %v83
  %v166 = vpop.f32.mrb[0].mxu0
  %v167 = vadd.f32 0.0, %v166
  %v168 = vpop.f32.mrb[0].mxu0
  %v169 = vadd.f32 0.0, %v168
  %170 = vmatprep.mubr.f32.mxu0 0.0
  %171 = vmatmul.mubr.f32.gmra.mrb[0].mxu0 %v86
  %v172 = vpop.f32.mrb[0].mxu0
  %v173 = vadd.f32 0.0, %v172
  %v174 = vpop.f32.mrb[0].mxu0
  %v175 = vadd.f32 0.0, %v174
  %176 = vmatprep.mubr.f32.mxu0 0.0
  %177 = vmatmul.mubr.f32.gmra.mrb[0].mxu0 %v89
  %v178 = vpop.f32.mrb[0].mxu0
  %v179 = vadd.f32 0.0, %v178
  %v180 = vpop.f32.mrb[0].mxu0
  %v181 = vadd.f32 0.0, %v180
  %182 = vmatprep.mubr.f32.mxu0 0.0
  %183 = vmatmul.mubr.f32.gmra.mrb[0].mxu0 %v92
  %v184 = vpop.f32.mrb[0].mxu0
  %v185 = vadd.f32 0.0, %v184
  %v186 = vpop.f32.mrb[0].mxu0
  %v187 = vadd.f32 0.0, %v186
  %188 = vmatprep.mubr.f32.mxu0 0.0
  %189 = vmatmul.mubr.f32.gmra.mrb[0].mxu0 %v95
  %v190 = vpop.f32.mrb[0].mxu0
  %v191 = vadd.f32 0.0, %v190
  %v192 = vpop.f32.mrb[0].mxu0
  %v193 = vadd.f32 0.0, %v192
  %194 = vmatprep.mubr.f32.mxu0 0.0
  %195 = vmatmul.mubr.f32.gmra.mrb[0].mxu0 %v98
  %v196 = vpop.f32.mrb[0].mxu0
  %v197 = vadd.f32 0.0, %v196
  %v198 = vpop.f32.mrb[0].mxu0
  %v199 = vadd.f32 0.0, %v198
  %200 = vdwg.mxu0
  %201 = vmatprep.subr.mxu0 %v20
  %202 = vmatpush1.msra.mxu0 %v19
  %203 = vmatprep.subr.mxu0 %v28
  %204 = vmatpush1.msra.mxu0 %v27
  %205 = vmatprep.subr.mxu0 %v36
  %206 = vmatpush1.msra.mxu0 %v35
  %207 = vmatprep.subr.mxu0 %v44
  %208 = vmatpush1.msra.mxu0 %v43
  %209 = vmatprep.subr.mxu0 %v52
  %210 = vmatpush1.msra.mxu0 %v51
  %211 = vmatprep.subr.mxu0 %v60
  %212 = vmatpush1.msra.mxu0 %v59
  %213 = vmatprep.subr.mxu0 %v68
  %214 = vmatpush1.msra.mxu0 %v67
  %215 = vmatprep.subr.mxu0 %v76
  %216 = vmatpush1.msra.mxu0 %v75
  %217 = vmatprep.subr.mxu0 0.0
  %218 = vmatpush1.msra.mxu0 0.0
  %219 = vmatprep.subr.mxu0 0.0
  %220 = vmatpush1.msra.mxu0 0.0
  %221 = vmatprep.subr.mxu0 0.0
  %222 = vmatpush1.msra.mxu0 0.0
  %223 = vmatprep.subr.mxu0 0.0
  %224 = vmatpush1.msra.mxu0 0.0
  %225 = vmatprep.subr.mxu0 0.0
  %226 = vmatpush1.msra.mxu0 0.0
  %227 = vmatprep.subr.mxu0 0.0
  %228 = vmatpush1.msra.mxu0 0.0
  %229 = vmatprep.subr.mxu0 0.0
  %230 = vmatpush1.msra.mxu0 0.0
  %231 = vmatprep.subr.mxu0 0.0
  %232 = vmatpush1.msra.mxu0 0.0
  %233 = vmatprep.subr.mxu0 0.0
  %234 = vmatpush1.msra.mxu0 0.0
  %235 = vmatprep.subr.mxu0 0.0
  %236 = vmatpush1.msra.mxu0 0.0
  %237 = vmatprep.subr.mxu0 0.0
  %238 = vmatpush1.msra.mxu0 0.0
  %239 = vmatprep.subr.mxu0 0.0
  %240 = vmatpush1.msra.mxu0 0.0
  %241 = vmatprep.subr.mxu0 0.0
  %242 = vmatpush1.msra.mxu0 0.0
  %243 = vmatprep.subr.mxu0 0.0
  %244 = vmatpush1.msra.mxu0 0.0
  %245 = vmatprep.subr.mxu0 0.0
  %246 = vmatpush1.msra.mxu0 0.0
  %247 = vmatprep.subr.mxu0 0.0
  %248 = vmatpush1.msra.mxu0 0.0
  %249 = vmatprep.subr.mxu0 0.0
  %250 = vmatpush1.msra.mxu0 0.0
  %251 = vmatprep.subr.mxu0 0.0
  %252 = vmatpush1.msra.mxu0 0.0
  %253 = vmatprep.subr.mxu0 0.0
  %254 = vmatpush1.msra.mxu0 0.0
  %255 = vmatprep.subr.mxu0 0.0
  %256 = vmatpush1.msra.mxu0 0.0
  %257 = vmatprep.subr.mxu0 0.0
  %258 = vmatpush1.msra.mxu0 0.0
  %259 = vmatprep.subr.mxu0 0.0
  %260 = vmatpush1.msra.mxu0 0.0
  %261 = vmatprep.subr.mxu0 0.0
  %262 = vmatpush1.msra.mxu0 0.0
  %263 = vmatprep.subr.mxu0 0.0
  %264 = vmatpush1.msra.mxu0 0.0
  %265 = vmatprep.mubr.f32.mxu0 0.0
  %266 = vmatmul.mubr.f32.gmra.mrb[0].mxu0 %v83
  %v267 = vpop.f32.mrb[0].mxu0
  %v268 = vadd.f32 0.0, %v267
  %v269 = vpop.f32.mrb[0].mxu0
  %v270 = vadd.f32 0.0, %v269
  %271 = vmatprep.mubr.f32.mxu0 0.0
  %272 = vmatmul.mubr.f32.gmra.mrb[0].mxu0 %v86
  %v273 = vpop.f32.mrb[0].mxu0
  %v274 = vadd.f32 0.0, %v273
  %v275 = vpop.f32.mrb[0].mxu0
  %v276 = vadd.f32 0.0, %v275
  %277 = vmatprep.mubr.f32.mxu0 0.0
  %278 = vmatmul.mubr.f32.gmra.mrb[0].mxu0 %v89
  %v279 = vpop.f32.mrb[0].mxu0
  %v280 = vadd.f32 0.0, %v279
  %v281 = vpop.f32.mrb[0].mxu0
  %v282 = vadd.f32 0.0, %v281
  %283 = vmatprep.mubr.f32.mxu0 0.0
  %284 = vmatmul.mubr.f32.gmra.mrb[0].mxu0 %v92
  %v285 = vpop.f32.mrb[0].mxu0
  %v286 = vadd.f32 0.0, %v285
  %v287 = vpop.f32.mrb[0].mxu0
  %v288 = vadd.f32 0.0, %v287
  %289 = vmatprep.mubr.f32.mxu0 0.0
  %290 = vmatmul.mubr.f32.gmra.mrb[0].mxu0 %v95
  %v291 = vpop.f32.mrb[0].mxu0
  %v292 = vadd.f32 0.0, %v291
  %v293 = vpop.f32.mrb[0].mxu0
  %v294 = vadd.f32 0.0, %v293
  %295 = vmatprep.mubr.f32.mxu0 0.0
  %296 = vmatmul.mubr.f32.gmra.mrb[0].mxu0 %v98
  %v297 = vpop.f32.mrb[0].mxu0
  %v298 = vadd.f32 0.0, %v297
  %v299 = vpop.f32.mrb[0].mxu0
  %v300 = vadd.f32 0.0, %v299
  %301 = vdwg.mxu0
  %302 = vmatprep.subr.mxu0 %v22
  %303 = vmatpush1.msra.mxu0 %v21
  %304 = vmatprep.subr.mxu0 %v30
  %305 = vmatpush1.msra.mxu0 %v29
  %306 = vmatprep.subr.mxu0 %v38
  %307 = vmatpush1.msra.mxu0 %v37
  %308 = vmatprep.subr.mxu0 %v46
  %309 = vmatpush1.msra.mxu0 %v45
  %310 = vmatprep.subr.mxu0 %v54
  %311 = vmatpush1.msra.mxu0 %v53
  %312 = vmatprep.subr.mxu0 %v62
  %313 = vmatpush1.msra.mxu0 %v61
  %314 = vmatprep.subr.mxu0 %v70
  %315 = vmatpush1.msra.mxu0 %v69
  %316 = vmatprep.subr.mxu0 %v78
  %317 = vmatpush1.msra.mxu0 %v77
  %318 = vmatprep.subr.mxu0 0.0
  %319 = vmatpush1.msra.mxu0 0.0
  %320 = vmatprep.subr.mxu0 0.0
  %321 = vmatpush1.msra.mxu0 0.0
  %322 = vmatprep.subr.mxu0 0.0
  %323 = vmatpush1.msra.mxu0 0.0
  %324 = vmatprep.subr.mxu0 0.0
  %325 = vmatpush1.msra.mxu0 0.0
  %326 = vmatprep.subr.mxu0 0.0
  %327 = vmatpush1.msra.mxu0 0.0
  %328 = vmatprep.subr.mxu0 0.0
  %329 = vmatpush1.msra.mxu0 0.0
  %330 = vmatprep.subr.mxu0 0.0
  %331 = vmatpush1.msra.mxu0 0.0
  %332 = vmatprep.subr.mxu0 0.0
  %333 = vmatpush1.msra.mxu0 0.0
  %334 = vmatprep.subr.mxu0 0.0
  %335 = vmatpush1.msra.mxu0 0.0
  %336 = vmatprep.subr.mxu0 0.0
  %337 = vmatpush1.msra.mxu0 0.0
  %338 = vmatprep.subr.mxu0 0.0
  %339 = vmatpush1.msra.mxu0 0.0
  %340 = vmatprep.subr.mxu0 0.0
  %341 = vmatpush1.msra.mxu0 0.0
  %342 = vmatprep.subr.mxu0 0.0
  %343 = vmatpush1.msra.mxu0 0.0
  %344 = vmatprep.subr.mxu0 0.0
  %345 = vmatpush1.msra.mxu0 0.0
  %346 = vmatprep.subr.mxu0 0.0
  %347 = vmatpush1.msra.mxu0 0.0
  %348 = vmatprep.subr.mxu0 0.0
  %349 = vmatpush1.msra.mxu0 0.0
  %350 = vmatprep.subr.mxu0 0.0
  %351 = vmatpush1.msra.mxu0 0.0
  %352 = vmatprep.subr.mxu0 0.0
  %353 = vmatpush1.msra.mxu0 0.0
  %354 = vmatprep.subr.mxu0 0.0
  %355 = vmatpush1.msra.mxu0 0.0
  %356 = vmatprep.subr.mxu0 0.0
  %357 = vmatpush1.msra.mxu0 0.0
  %358 = vmatprep.subr.mxu0 0.0
  %359 = vmatpush1.msra.mxu0 0.0
  %360 = vmatprep.subr.mxu0 0.0
  %361 = vmatpush1.msra.mxu0 0.0
  %362 = vmatprep.subr.mxu0 0.0
  %363 = vmatpush1.msra.mxu0 0.0
  %364 = vmatprep.subr.mxu0 0.0
  %365 = vmatpush1.msra.mxu0 0.0
  %366 = vmatprep.mubr.f32.mxu0 0.0
  %367 = vmatmul.mubr.f32.gmra.mrb[0].mxu0 %v83
  %v368 = vpop.f32.mrb[0].mxu0
  %v369 = vadd.f32 0.0, %v368
  %v370 = vpop.f32.mrb[0].mxu0
  %v371 = vadd.f32 0.0, %v370
  %372 = vmatprep.mubr.f32.mxu0 0.0
  %373 = vmatmul.mubr.f32.gmra.mrb[0].mxu0 %v86
  %v374 = vpop.f32.mrb[0].mxu0
  %v375 = vadd.f32 0.0, %v374
  %v376 = vpop.f32.mrb[0].mxu0
  %v377 = vadd.f32 0.0, %v376
  %378 = vmatprep.mubr.f32.mxu0 0.0
  %379 = vmatmul.mubr.f32.gmra.mrb[0].mxu0 %v89
  %v380 = vpop.f32.mrb[0].mxu0
  %v381 = vadd.f32 0.0, %v380
  %v382 = vpop.f32.mrb[0].mxu0
  %v383 = vadd.f32 0.0, %v382
  %384 = vmatprep.mubr.f32.mxu0 0.0
  %385 = vmatmul.mubr.f32.gmra.mrb[0].mxu0 %v92
  %v386 = vpop.f32.mrb[0].mxu0
  %v387 = vadd.f32 0.0, %v386
  %v388 = vpop.f32.mrb[0].mxu0
  %v389 = vadd.f32 0.0, %v388
  %390 = vmatprep.mubr.f32.mxu0 0.0
  %391 = vmatmul.mubr.f32.gmra.mrb[0].mxu0 %v95
  %v392 = vpop.f32.mrb[0].mxu0
  %v393 = vadd.f32 0.0, %v392
  %v394 = vpop.f32.mrb[0].mxu0
  %v395 = vadd.f32 0.0, %v394
  %396 = vmatprep.mubr.f32.mxu0 0.0
  %397 = vmatmul.mubr.f32.gmra.mrb[0].mxu0 %v98
  %v398 = vpop.f32.mrb[0].mxu0
  %v399 = vadd.f32 0.0, %v398
  %v400 = vpop.f32.mrb[0].mxu0
  %v401 = vadd.f32 0.0, %v400
  %402 = vdwg.mxu0
  %403 = vmatprep.subr.mxu0 %v24
  %404 = vmatpush1.msra.mxu0 %v23
  %405 = vmatprep.subr.mxu0 %v32
  %406 = vmatpush1.msra.mxu0 %v31
  %407 = vmatprep.subr.mxu0 %v40
  %408 = vmatpush1.msra.mxu0 %v39
  %409 = vmatprep.subr.mxu0 %v48
  %410 = vmatpush1.msra.mxu0 %v47
  %411 = vmatprep.subr.mxu0 %v56
  %412 = vmatpush1.msra.mxu0 %v55
  %413 = vmatprep.subr.mxu0 %v64
  %414 = vmatpush1.msra.mxu0 %v63
  %415 = vmatprep.subr.mxu0 %v72
  %416 = vmatpush1.msra.mxu0 %v71
  %417 = vmatprep.subr.mxu0 %v80
  %418 = vmatpush1.msra.mxu0 %v79
  %419 = vmatprep.subr.mxu0 0.0
  %420 = vmatpush1.msra.mxu0 0.0
  %421 = vmatprep.subr.mxu0 0.0
  %422 = vmatpush1.msra.mxu0 0.0
  %423 = vmatprep.subr.mxu0 0.0
  %424 = vmatpush1.msra.mxu0 0.0
  %425 = vmatprep.subr.mxu0 0.0
  %426 = vmatpush1.msra.mxu0 0.0
  %427 = vmatprep.subr.mxu0 0.0
  %428 = vmatpush1.msra.mxu0 0.0
  %429 = vmatprep.subr.mxu0 0.0
  %430 = vmatpush1.msra.mxu0 0.0
  %431 = vmatprep.subr.mxu0 0.0
  %432 = vmatpush1.msra.mxu0 0.0
  %433 = vmatprep.subr.mxu0 0.0
  %434 = vmatpush1.msra.mxu0 0.0
  %435 = vmatprep.subr.mxu0 0.0
  %436 = vmatpush1.msra.mxu0 0.0
  %437 = vmatprep.subr.mxu0 0.0
  %438 = vmatpush1.msra.mxu0 0.0
  %439 = vmatprep.subr.mxu0 0.0
  %440 = vmatpush1.msra.mxu0 0.0
  %441 = vmatprep.subr.mxu0 0.0
  %442 = vmatpush1.msra.mxu0 0.0
  %443 = vmatprep.subr.mxu0 0.0
  %444 = vmatpush1.msra.mxu0 0.0
  %445 = vmatprep.subr.mxu0 0.0
  %446 = vmatpush1.msra.mxu0 0.0
  %447 = vmatprep.subr.mxu0 0.0
  %448 = vmatpush1.msra.mxu0 0.0
  %449 = vmatprep.subr.mxu0 0.0
  %450 = vmatpush1.msra.mxu0 0.0
  %451 = vmatprep.subr.mxu0 0.0
  %452 = vmatpush1.msra.mxu0 0.0
  %453 = vmatprep.subr.mxu0 0.0
  %454 = vmatpush1.msra.mxu0 0.0
  %455 = vmatprep.subr.mxu0 0.0
  %456 = vmatpush1.msra.mxu0 0.0
  %457 = vmatprep.subr.mxu0 0.0
  %458 = vmatpush1.msra.mxu0 0.0
  %459 = vmatprep.subr.mxu0 0.0
  %460 = vmatpush1.msra.mxu0 0.0
  %461 = vmatprep.subr.mxu0 0.0
  %462 = vmatpush1.msra.mxu0 0.0
  %463 = vmatprep.subr.mxu0 0.0
  %464 = vmatpush1.msra.mxu0 0.0
  %465 = vmatprep.subr.mxu0 0.0
  %466 = vmatpush1.msra.mxu0 0.0
  %467 = vmatprep.mubr.f32.mxu0 0.0
  %468 = vmatmul.mubr.f32.gmra.mrb[0].mxu0 %v83
  %v469 = vpop.f32.mrb[0].mxu0
  %v470 = vadd.f32 0.0, %v469
  %v471 = vpop.f32.mrb[0].mxu0
  %v472 = vadd.f32 0.0, %v471
  %473 = vmatprep.mubr.f32.mxu0 0.0
  %474 = vmatmul.mubr.f32.gmra.mrb[0].mxu0 %v86
  %v475 = vpop.f32.mrb[0].mxu0
  %v476 = vadd.f32 0.0, %v475
  %v477 = vpop.f32.mrb[0].mxu0
  %v478 = vadd.f32 0.0, %v477
  %479 = vmatprep.mubr.f32.mxu0 0.0
  %480 = vmatmul.mubr.f32.gmra.mrb[0].mxu0 %v89
  %v481 = vpop.f32.mrb[0].mxu0
  %v482 = vadd.f32 0.0, %v481
  %v483 = vpop.f32.mrb[0].mxu0
  %v484 = vadd.f32 0.0, %v483
  %485 = vmatprep.mubr.f32.mxu0 0.0
  %486 = vmatmul.mubr.f32.gmra.mrb[0].mxu0 %v92
  %v487 = vpop.f32.mrb[0].mxu0
  %v488 = vadd.f32 0.0, %v487
  %v489 = vpop.f32.mrb[0].mxu0
  %v490 = vadd.f32 0.0, %v489
  %491 = vmatprep.mubr.f32.mxu0 0.0
  %492 = vmatmul.mubr.f32.gmra.mrb[0].mxu0 %v95
  %v493 = vpop.f32.mrb[0].mxu0
  %v494 = vadd.f32 0.0, %v493
  %v495 = vpop.f32.mrb[0].mxu0
  %v496 = vadd.f32 0.0, %v495
  %497 = vmatprep.mubr.f32.mxu0 0.0
  %498 = vmatmul.mubr.f32.gmra.mrb[0].mxu0 %v98
  %v499 = vpop.f32.mrb[0].mxu0
  %v500 = vadd.f32 0.0, %v499
  %v501 = vpop.f32.mrb[0].mxu0
  %v502 = vadd.f32 0.0, %v501
  %503 = vdwg.mxu0
  %504 = vst [vmem:[%s2] sm:$0xff] %v167
  %505 = vst [vmem:[%s2 + $0x8] sm:$0xff] %v169
  %506 = vst [vmem:[%s2 + $0x10] sm:$0xff] %v268
  %507 = vst [vmem:[%s2 + $0x18] sm:$0xff] %v270
  %508 = vst [vmem:[%s2 + $0x20] sm:$0xff] %v369
  %509 = vst [vmem:[%s2 + $0x28] sm:$0xff] %v371
  %510 = vst [vmem:[%s2 + $0x30] sm:$0xff] %v470
  %511 = vst [vmem:[%s2 + $0x38] sm:$0xff] %v472
  %512 = vst [vmem:[%s2 + $0x40] sm:$0xff] %v173
  %513 = vst [vmem:[%s2 + $0x48] sm:$0xff] %v175
  %514 = vst [vmem:[%s2 + $0x50] sm:$0xff] %v274
  %515 = vst [vmem:[%s2 + $0x58] sm:$0xff] %v276
  %516 = vst [vmem:[%s2 + $0x60] sm:$0xff] %v375
  %517 = vst [vmem:[%s2 + $0x68] sm:$0xff] %v377
  %518 = vst [vmem:[%s2 + $0x70] sm:$0xff] %v476
  %519 = vst [vmem:[%s2 + $0x78] sm:$0xff] %v478
  %520 = vst [vmem:[%s2 + $0x80] sm:$0xff] %v179
  %521 = vst [vmem:[%s2 + $0x88] sm:$0xff] %v181
  %522 = vst [vmem:[%s2 + $0x90] sm:$0xff] %v280
  %523 = vst [vmem:[%s2 + $0x98] sm:$0xff] %v282
  %524 = vst [vmem:[%s2 + $0xa0] sm:$0xff] %v381
  %525 = vst [vmem:[%s2 + $0xa8] sm:$0xff] %v383
  %526 = vst [vmem:[%s2 + $0xb0] sm:$0xff] %v482
  %527 = vst [vmem:[%s2 + $0xb8] sm:$0xff] %v484
  %528 = vst [vmem:[%s2 + $0xc0] sm:$0xff] %v185
  %529 = vst [vmem:[%s2 + $0xc8] sm:$0xff] %v187
  %530 = vst [vmem:[%s2 + $0xd0] sm:$0xff] %v286
  %531 = vst [vmem:[%s2 + $0xd8] sm:$0xff] %v288
  %532 = vst [vmem:[%s2 + $0xe0] sm:$0xff] %v387
  %533 = vst [vmem:[%s2 + $0xe8] sm:$0xff] %v389
  %534 = vst [vmem:[%s2 + $0xf0] sm:$0xff] %v488
  %535 = vst [vmem:[%s2 + $0xf8] sm:$0xff] %v490
  %536 = vst [vmem:[%s2 + $0x100] sm:$0xff] %v191
  %537 = vst [vmem:[%s2 + $0x108] sm:$0xff] %v193
  %538 = vst [vmem:[%s2 + $0x110] sm:$0xff] %v292
  %539 = vst [vmem:[%s2 + $0x118] sm:$0xff] %v294
  %540 = vst [vmem:[%s2 + $0x120] sm:$0xff] %v393
  %541 = vst [vmem:[%s2 + $0x128] sm:$0xff] %v395
  %542 = vst [vmem:[%s2 + $0x130] sm:$0xff] %v494
  %543 = vst [vmem:[%s2 + $0x138] sm:$0xff] %v496
  %544 = vst [vmem:[%s2 + $0x140] sm:$0xff] %v197
  %545 = vst [vmem:[%s2 + $0x148] sm:$0xff] %v199
  %546 = vst [vmem:[%s2 + $0x150] sm:$0xff] %v298
  %547 = vst [vmem:[%s2 + $0x158] sm:$0xff] %v300
  %548 = vst [vmem:[%s2 + $0x160] sm:$0xff] %v399
  %549 = vst [vmem:[%s2 + $0x168] sm:$0xff] %v401
  %550 = vst [vmem:[%s2 + $0x170] sm:$0xff] %v500
  %551 = vst [vmem:[%s2 + $0x178] sm:$0xff] %v502
  // Predicated region
  $region10: #{deeplab_forward.31} parent=0 // pred_check
    _
  $region11: #{deeplab_forward.31} parent=0 // pred_check_branch
    %553 = sbr.rel (0) target = $region13
  $region12: #{deeplab_forward.31} parent=0 // pred_region
    _
  $region13: #{deeplab_forward.31} parent=0 // pred_fallthru
    _
  // Predicated region
  $region14: #{deeplab_forward.31} parent=0 // pred_check
    _
  $region15: #{deeplab_forward.31} parent=0 // pred_check_branch
    %555 = sbr.rel (0) target = $region17
  $region16: #{deeplab_forward.31} parent=0 // pred_region
    _
  $region17: #{deeplab_forward.31} parent=0 // pred_fallthru
    _

</llo_original>
